<compile_context>
chip_gen: v5e
topology: v5e:2x2
jax: 0.10.0
libtpu: 0.0.40
codegen_flags: <defaults>
</compile_context>

<pallas_src>
import functools

import jax
import jax.numpy as jnp
import numpy as np
from jax.experimental import pallas as pl
from jax.experimental.pallas import tpu as pltpu


# ----------------------------------------------------------------------------
# shared helpers
# ----------------------------------------------------------------------------

# Lane tile along the face axis. 512 keeps per-step overhead negligible while the
# per-block VMEM footprint stays tiny (<1 MiB double-buffered), so no
# vmem_limit_bytes override is needed even on v7x (64 MiB VMEM).
_MAX_TILE_N = 512


def _pick_tile_n(n):
    return n if n <= _MAX_TILE_N else _MAX_TILE_N


def _round_up(x, m):
    return (x + m - 1) // m * m


def _bn_relu(x, eps=1e-5):
    """BatchNorm1d (training-mode batch stats, gamma=1, beta=0) + ReLU on (B, C, N)."""
    mean = jnp.mean(x, axis=(0, 2), keepdims=True)
    var = jnp.mean((x - mean) ** 2, axis=(0, 2), keepdims=True)   # biased variance
    return jnp.maximum((x - mean) * jax.lax.rsqrt(var + eps), 0.0)


# ----------------------------------------------------------------------------
# FaceKernelCorrelation hot path (Pallas)
# ----------------------------------------------------------------------------

def _fkc_kernel(fea_ref, wp_ref, out_ref, *, num_kernel, sigma):
    """fea_ref: (1, 4, 3, tn); wp_ref: (4K, 4) = [W/s^2 | -||w||^2/(2 s^2)];
    out_ref: (1, K, tn) — K on sublanes, n lane-dense."""
    K = num_kernel
    tn = out_ref.shape[2]
    neg_half_inv_s2 = -0.5 / (sigma * sigma)

    # Weight columns (lane-broadcast against n). Constants — computed once per step.
    w0 = wp_ref[:, 0:1]          # (4K, 1)
    w1 = wp_ref[:, 1:2]
    w2 = wp_ref[:, 2:3]
    wb = wp_ref[:, 3:4]          # -||w||^2 / (2 sigma^2), precomputed in glue

    acc = jnp.zeros((K, tn), jnp.float32)
    # 4 face vectors (center + 3 neighbors): short static loop, fully unrolled.
    for p in range(4):
        f = fea_ref[0, p]                                    # (3, tn)
        f0 = f[0:1, :]
        f1 = f[1:2, :]
        f2 = f[2:3, :]
        fn = (f0 * f0 + f1 * f1 + f2 * f2) * neg_half_inv_s2       # (1, tn)
        # exp(-(||f||^2 + ||w||^2 - 2 f.w) / (2 s^2)); contraction dim is 3, so
        # broadcast FMAs on the VPU beat a 3-deep MXU matmul.
        # TODO(synk): on v6e/v7x cast the exponent to bf16 before exp (~2x EUP
        # throughput); kept f32 here for cross-generation (v5e) accuracy.
        e = jnp.exp(w0 * f0 + w1 * f1 + w2 * f2 + wb + fn)         # (4K, tn)
        # Fold the 4 kernel-position slabs (rows q*K .. q*K+K) immediately so the
        # live accumulator stays at (K, tn).
        acc = acc + (e[0:K] + e[K:2 * K] + e[2 * K:3 * K] + e[3 * K:4 * K])
    out_ref[0] = acc * (1.0 / 16.0)


def face_kernel_correlation_raw(normals, neighbor_index, weight_alpha, weight_beta,
                                *, sigma=0.2):
    """Pre-BatchNorm correlation feature, shape (B, K, N), N lane-dense."""
    b, _, n = normals.shape
    K = weight_alpha.shape[1]
    tn = _pick_tile_n(n)

    # ---- glue: kernel-point unit vectors with constants folded in -----------
    sa, ca = jnp.sin(weight_alpha[0]), jnp.cos(weight_alpha[0])   # (K, 4)
    sb, cb = jnp.sin(weight_beta[0]), jnp.cos(weight_beta[0])
    w = jnp.stack([sa * cb, sa * sb, ca], axis=-1)                # (K, 4, 3): w[k, q, c]
    wT = jnp.transpose(w, (1, 0, 2)).reshape(4 * K, 3)            # row = q*K + k
    inv_s2 = 1.0 / (sigma * sigma)
    wprime = wT * inv_s2                                          # the f.w / s^2 term
    wbias = -0.5 * inv_s2 * jnp.sum(wT * wT, axis=1, keepdims=True)
    wparams = jnp.concatenate([wprime, wbias], axis=1).astype(jnp.float32)   # (4K, 4)

    # ---- glue: gather face vectors into lane-dense (B, 4, 3, N) --------------
    # TODO(synk): the neighbor gather could move inside the kernel (scalar-prefetch
    # neighbor_index) to drop this XLA gather and the extra HBM array.
    def per_batch(nm, idx):                                   # nm (3, N), idx (N, 3)
        nbr = jnp.transpose(nm[:, idx], (2, 0, 1))            # (3nbr, 3xyz, N)
        return jnp.concatenate([nm[None], nbr], axis=0)       # (4, 3, N)
    fea = jax.vmap(per_batch)(normals, neighbor_index).astype(jnp.float32)   # (B,4,3,N)

    kernel = functools.partial(_fkc_kernel, num_kernel=K, sigma=float(sigma))
    return pl.pallas_call(
        kernel,
        out_shape=jax.ShapeDtypeStruct((b, K, n), jnp.float32),
        grid_spec=pltpu.PrefetchScalarGridSpec(
            num_scalar_prefetch=0,
            grid=(b, pl.cdiv(n, tn)),
            in_specs=[
                pl.BlockSpec((1, 4, 3, tn), lambda i, t: (i, 0, 0, t)),
                pl.BlockSpec((4 * K, 4), lambda i, t: (0, 0)),
            ],
            out_specs=pl.BlockSpec((1, K, tn), lambda i, t: (i, 0, t)),
        ),
        compiler_params=pltpu.CompilerParams(
            dimension_semantics=("parallel", "parallel")),
    )(fea, wparams)


def face_kernel_correlation(normals, neighbor_index, weight_alpha, weight_beta,
                            *, sigma=0.2):
    fkc = face_kernel_correlation_raw(normals, neighbor_index,
                                      weight_alpha, weight_beta, sigma=sigma)
    return _bn_relu(fkc)                                      # (B, K, N)


# ----------------------------------------------------------------------------
# Pointwise (kernel_size=1) Conv1d as a Pallas matmul over channels
# ----------------------------------------------------------------------------

def _pwconv_kernel(x_ref, w_ref, b_ref, o_ref):
    """x_ref (1, Cin, tn); w_ref (Cout, Cin); b_ref (Cout, 1); o_ref (1, Cout, tn)."""
    o_ref[0] = jnp.dot(w_ref[...], x_ref[0],
                       preferred_element_type=jnp.float32) + b_ref[...]


def pointwise_conv(x, w, b):
    """Conv1d(k=1): (B, Cin, N) @ (Cout, Cin) + (Cout,) -> (B, Cout, N)."""
    B, Cin, N = x.shape
    Cout = w.shape[0]
    # Pad channel dims to multiples of 8 for clean sublane layouts.
    cin_p, cout_p = _round_up(Cin, 8), _round_up(Cout, 8)
    x = x.astype(jnp.float32)
    w = w.astype(jnp.float32)
    b = b.astype(jnp.float32)
    if cin_p != Cin:
        x = jnp.pad(x, ((0, 0), (0, cin_p - Cin), (0, 0)))
        w = jnp.pad(w, ((0, 0), (0, cin_p - Cin)))
    if cout_p != Cout:
        w = jnp.pad(w, ((0, cout_p - Cout), (0, 0)))
        b = jnp.pad(b, ((0, cout_p - Cout),))
    b2 = b.reshape(cout_p, 1)

    tn = _pick_tile_n(N)
    y = pl.pallas_call(
        _pwconv_kernel,
        out_shape=jax.ShapeDtypeStruct((B, cout_p, N), jnp.float32),
        grid_spec=pltpu.PrefetchScalarGridSpec(
            num_scalar_prefetch=0,
            grid=(B, pl.cdiv(N, tn)),
            in_specs=[
                pl.BlockSpec((1, cin_p, tn), lambda i, t: (i, 0, t)),
                pl.BlockSpec((cout_p, cin_p), lambda i, t: (0, 0)),
                pl.BlockSpec((cout_p, 1), lambda i, t: (0, 0)),
            ],
            out_specs=pl.BlockSpec((1, cout_p, tn), lambda i, t: (i, 0, t)),
        ),
        compiler_params=pltpu.CompilerParams(
            dimension_semantics=("parallel", "parallel")),
    )(x, w, b2)
    return y[:, :Cout] if cout_p != Cout else y


# ----------------------------------------------------------------------------
# Full StructuralDescriptor forward
# ----------------------------------------------------------------------------

def face_rotate_convolution(corners, p):
    def rotate_mlp(x):
        h = _bn_relu(pointwise_conv(x, p["r_w1"], p["r_b1"]))
        return _bn_relu(pointwise_conv(h, p["r_w2"], p["r_b2"]))

    fea = (rotate_mlp(corners[:, 0:6]) +
           rotate_mlp(corners[:, 3:9]) +
           rotate_mlp(jnp.concatenate([corners[:, 6:9], corners[:, 0:3]], axis=1))) / 3.0
    h = _bn_relu(pointwise_conv(fea, p["f_w1"], p["f_b1"]))
    return _bn_relu(pointwise_conv(h, p["f_w2"], p["f_b2"]))          # (B, 64, N)


@functools.partial(jax.jit, static_argnames=("sigma",))
def structural_descriptor(corners, normals, neighbor_index, params, *, sigma=0.2):
    fea1 = face_rotate_convolution(corners.astype(jnp.float32), params)       # (B, 64, N)
    fea2 = face_kernel_correlation(normals, neighbor_index,
                                   params["alpha"], params["beta"], sigma=sigma)  # (B, K, N)
    x = jnp.concatenate([fea1, fea2, normals.astype(jnp.float32)], axis=1)
    h = _bn_relu(pointwise_conv(x, params["s_w1"], params["s_b1"]))
    return _bn_relu(pointwise_conv(h, params["s_w2"], params["s_b2"]))        # (B, 131, N)


# ----------------------------------------------------------------------------
# Pure-JAX references (for correctness checks)
# ----------------------------------------------------------------------------

def _ref_conv(x, w, b):
    return jnp.einsum("oc,bcn->bon", w, x) + b[None, :, None]


def _ref_fkc_raw(normals, neighbor_index, alpha, beta, sigma):
    sa, ca = jnp.sin(alpha[0]), jnp.cos(alpha[0])
    sb, cb = jnp.sin(beta[0]), jnp.cos(beta[0])
    w = jnp.stack([sa * cb, sa * sb, ca], axis=-1)                        # (K, 4, 3)
    normals_t = jnp.transpose(normals, (0, 2, 1))                         # (B, N, 3)
    nbr = jax.vmap(lambda nt, idx: nt[idx])(normals_t, neighbor_index)    # (B, N, 3, 3)
    fea = jnp.concatenate([normals_t[:, :, None, :], nbr], axis=2)        # (B, N, 4, 3)
    diff = fea[:, :, :, None, None, :] - w[None, None, None, :, :, :]     # (B,N,4,K,4,3)
    dist = jnp.sum(diff ** 2, axis=-1)
    corr = jnp.sum(jnp.exp(-dist / (2.0 * sigma ** 2)), axis=(2, 4)) / 16.0   # (B, N, K)
    return jnp.transpose(corr, (0, 2, 1))                                 # (B, K, N)


def _ref_forward(corners, normals, neighbor_index, p, sigma):
    def rotate(x):
        return _bn_relu(_ref_conv(_bn_relu(_ref_conv(x, p["r_w1"], p["r_b1"])),
                                  p["r_w2"], p["r_b2"]))
    fea = (rotate(corners[:, 0:6]) + rotate(corners[:, 3:9]) +
           rotate(jnp.concatenate([corners[:, 6:9], corners[:, 0:3]], axis=1))) / 3.0
    fea1 = _bn_relu(_ref_conv(_bn_relu(_ref_conv(fea, p["f_w1"], p["f_b1"])),
                              p["f_w2"], p["f_b2"]))
    fea2 = _bn_relu(_ref_fkc_raw(normals, neighbor_index, p["alpha"], p["beta"], sigma))
    x = jnp.concatenate([fea1, fea2, normals], axis=1)
    h = _bn_relu(_ref_conv(x, p["s_w1"], p["s_b1"]))
    return _bn_relu(_ref_conv(h, p["s_w2"], p["s_b2"]))


# ----------------------------------------------------------------------------
# main
# ----------------------------------------------------------------------------

if __name__ == "__main__":
    B, N, K = 2, 16, 64
    sigma = 0.2
    C_struct = 64 + 3 + K   # 131

    keys = jax.random.split(jax.random.PRNGKey(0), 17)

    corners = jax.random.normal(keys[0], (B, 9, N), dtype=jnp.float32)
    normals = jax.random.normal(keys[1], (B, 3, N), dtype=jnp.float32)
    neighbor_index = jax.random.randint(keys[2], (B, N, 3), 0, N, dtype=jnp.int32)

    def uinit(k, shape, fan_in):
        s = 1.0 / np.sqrt(fan_in)
        return jax.random.uniform(k, shape, jnp.float32, -s, s)

    params = {
        "alpha": jax.random.uniform(keys[3], (1, K, 4), jnp.float32) * np.pi,
        "beta": jax.random.uniform(keys[4], (1, K, 4), jnp.float32) * 2.0 * np.pi,
        "r_w1": uinit(keys[5], (32, 6), 6),    "r_b1": uinit(keys[6], (32,), 6),
        "r_w2": uinit(keys[7], (32, 32), 32),  "r_b2": uinit(keys[8], (32,), 32),
        "f_w1": uinit(keys[9], (64, 32), 32),  "f_b1": uinit(keys[10], (64,), 32),
        "f_w2": uinit(keys[11], (64, 64), 64), "f_b2": uinit(keys[12], (64,), 64),
        "s_w1": uinit(keys[13], (131, C_struct), C_struct),
        "s_b1": uinit(keys[14], (131,), C_struct),
        "s_w2": uinit(keys[15], (131, 131), 131),
        "s_b2": uinit(keys[16], (131,), 131),
    }

    out = structural_descriptor(corners, normals, neighbor_index, params, sigma=sigma)
    out = jax.block_until_ready(out)
    assert out.shape == (B, 131, N) and out.dtype == jnp.float32

    # strict check of the Pallas FKC hot path (pre-BN) vs the direct (f-w)^2 formula
    fkc_pallas = face_kernel_correlation_raw(normals, neighbor_index,
                                             params["alpha"], params["beta"], sigma=sigma)
    fkc_ref = _ref_fkc_raw(normals, neighbor_index, params["alpha"], params["beta"], sigma)
    fkc_err = float(jnp.max(jnp.abs(fkc_pallas - fkc_ref)))
    assert fkc_err < 1e-3, f"FKC mismatch vs reference: {fkc_err}"

    # end-to-end check (looser: XLA vs Mosaic matmul precision may differ slightly)
    ref_out = _ref_forward(corners, normals, neighbor_index, params, sigma)
    e2e_err = float(jnp.max(jnp.abs(out - ref_out)))
    assert e2e_err < 5e-2, f"forward mismatch vs reference: {e2e_err}"

    print("KERNEL_OK")
</pallas_src>

<mosaic_0001>
module attributes {stable_mosaic.version = 11 : i64} {
  func.func @_pwconv_kernel(%arg0: i32, %arg1: i32, %arg2: memref<1x8x16xf32, #tpu.memory_space<vmem>>, %arg3: memref<32x8xf32, #tpu.memory_space<vmem>>, %arg4: memref<32x1xf32, #tpu.memory_space<vmem>>, %arg5: memref<1x32x16xf32, #tpu.memory_space<vmem>>) attributes {dimension_semantics = [#tpu.dimension_semantics<parallel>, #tpu.dimension_semantics<parallel>], iteration_bounds = array<i64: 2, 1>, scalar_prefetch = 0 : i64, scratch_operands = 0 : i64, tpu.core_type = #tpu.core_type<tc>, window_params = [{transform_indices = @transform_0, window_bounds = array<i64: 1, 8, 16>}, {pipeline_mode = #tpu.pipeline_mode<synchronous>, transform_indices = @transform_1, window_bounds = array<i64: 32, 8>}, {pipeline_mode = #tpu.pipeline_mode<synchronous>, transform_indices = @transform_2, window_bounds = array<i64: 32, 1>}, {transform_indices = @transform_3, window_bounds = array<i64: 1, 32, 16>}]} {
    %c0 = arith.constant 0 : index
    %c0_0 = arith.constant 0 : index
    %0 = vector.load %arg3[%c0, %c0_0] : memref<32x8xf32, #tpu.memory_space<vmem>>, vector<32x8xf32>
    %c0_1 = arith.constant 0 : index
    %c0_2 = arith.constant 0 : index
    %c0_3 = arith.constant 0 : index
    %1 = vector.load %arg2[%c0_1, %c0_2, %c0_3] : memref<1x8x16xf32, #tpu.memory_space<vmem>>, vector<1x8x16xf32>
    %2 = vector.shape_cast %1 : vector<1x8x16xf32> to vector<8x16xf32>
    %cst = arith.constant dense<0.000000e+00> : vector<32x16xf32>
    %3 = tpu.matmul %0, %2, %cst {dimension_numbers = #tpu.dot_dimension_numbers<[1], [0], [0], [1], [0, 0, 1, 1], [], []>} : vector<32x8xf32>, vector<8x16xf32>, vector<32x16xf32> -> vector<32x16xf32>
    %c0_4 = arith.constant 0 : index
    %c0_5 = arith.constant 0 : index
    %4 = vector.load %arg4[%c0_4, %c0_5] : memref<32x1xf32, #tpu.memory_space<vmem>>, vector<32x1xf32>
    %5 = vector.broadcast %4 : vector<32x1xf32> to vector<32x16xf32>
    %6 = arith.addf %3, %5 : vector<32x16xf32>
    %c0_6 = arith.constant 0 : index
    %c0_7 = arith.constant 0 : index
    %c0_8 = arith.constant 0 : index
    %7 = vector.load %arg5[%c0_6, %c0_7, %c0_8] : memref<1x32x16xf32, #tpu.memory_space<vmem>>, vector<1x32x16xf32>
    %8 = vector.shape_cast %7 : vector<1x32x16xf32> to vector<32x16xf32>
    %9 = vector.shape_cast %6 : vector<32x16xf32> to vector<1x32x16xf32>
    tpu.vector_store %arg5[%c0_6, %c0_7, %c0_8], %9 {strides = array<i32>} : memref<1x32x16xf32, #tpu.memory_space<vmem>>, vector<1x32x16xf32>,
    return
  }
  func.func @transform_0(%arg0: i32, %arg1: i32) -> (i32, i32, i32) {
    %c0_i32 = arith.constant 0 : i32
    %c0_i32_0 = arith.constant 0 : i32
    return %arg0, %c0_i32, %arg1 : i32, i32, i32
  }
  func.func @transform_1(%arg0: i32, %arg1: i32) -> (i32, i32) {
    %c0_i32 = arith.constant 0 : i32
    %c0_i32_0 = arith.constant 0 : i32
    %c0_i32_1 = arith.constant 0 : i32
    return %c0_i32, %c0_i32_0 : i32, i32
  }
  func.func @transform_2(%arg0: i32, %arg1: i32) -> (i32, i32) {
    %c0_i32 = arith.constant 0 : i32
    %c0_i32_0 = arith.constant 0 : i32
    %c0_i32_1 = arith.constant 0 : i32
    return %c0_i32, %c0_i32_0 : i32, i32
  }
  func.func @transform_3(%arg0: i32, %arg1: i32) -> (i32, i32, i32) {
    %c0_i32 = arith.constant 0 : i32
    %c0_i32_0 = arith.constant 0 : i32
    return %arg0, %c0_i32, %arg1 : i32, i32, i32
  }
}

module attributes {stable_mosaic.version = 11 : i64} {
  func.func @_pwconv_kernel(%arg0: i32, %arg1: i32, %arg2: memref<1x32x16xf32, #tpu.memory_space<vmem>>, %arg3: memref<32x32xf32, #tpu.memory_space<vmem>>, %arg4: memref<32x1xf32, #tpu.memory_space<vmem>>, %arg5: memref<1x32x16xf32, #tpu.memory_space<vmem>>) attributes {dimension_semantics = [#tpu.dimension_semantics<parallel>, #tpu.dimension_semantics<parallel>], iteration_bounds = array<i64: 2, 1>, scalar_prefetch = 0 : i64, scratch_operands = 0 : i64, tpu.core_type = #tpu.core_type<tc>, window_params = [{transform_indices = @transform_0, window_bounds = array<i64: 1, 32, 16>}, {pipeline_mode = #tpu.pipeline_mode<synchronous>, transform_indices = @transform_1, window_bounds = array<i64: 32, 32>}, {pipeline_mode = #tpu.pipeline_mode<synchronous>, transform_indices = @transform_2, window_bounds = array<i64: 32, 1>}, {transform_indices = @transform_3, window_bounds = array<i64: 1, 32, 16>}]} {
    %c0 = arith.constant 0 : index
    %c0_0 = arith.constant 0 : index
    %0 = vector.load %arg3[%c0, %c0_0] : memref<32x32xf32, #tpu.memory_space<vmem>>, vector<32x32xf32>
    %c0_1 = arith.constant 0 : index
    %c0_2 = arith.constant 0 : index
    %c0_3 = arith.constant 0 : index
    %1 = vector.load %arg2[%c0_1, %c0_2, %c0_3] : memref<1x32x16xf32, #tpu.memory_space<vmem>>, vector<1x32x16xf32>
    %2 = vector.shape_cast %1 : vector<1x32x16xf32> to vector<32x16xf32>
    %cst = arith.constant dense<0.000000e+00> : vector<32x16xf32>
    %3 = tpu.matmul %0, %2, %cst {dimension_numbers = #tpu.dot_dimension_numbers<[1], [0], [0], [1], [0, 0, 1, 1], [], []>} : vector<32x32xf32>, vector<32x16xf32>, vector<32x16xf32> -> vector<32x16xf32>
    %c0_4 = arith.constant 0 : index
    %c0_5 = arith.constant 0 : index
    %4 = vector.load %arg4[%c0_4, %c0_5] : memref<32x1xf32, #tpu.memory_space<vmem>>, vector<32x1xf32>
    %5 = vector.broadcast %4 : vector<32x1xf32> to vector<32x16xf32>
    %6 = arith.addf %3, %5 : vector<32x16xf32>
    %c0_6 = arith.constant 0 : index
    %c0_7 = arith.constant 0 : index
    %c0_8 = arith.constant 0 : index
    %7 = vector.load %arg5[%c0_6, %c0_7, %c0_8] : memref<1x32x16xf32, #tpu.memory_space<vmem>>, vector<1x32x16xf32>
    %8 = vector.shape_cast %7 : vector<1x32x16xf32> to vector<32x16xf32>
    %9 = vector.shape_cast %6 : vector<32x16xf32> to vector<1x32x16xf32>
    tpu.vector_store %arg5[%c0_6, %c0_7, %c0_8], %9 {strides = array<i32>} : memref<1x32x16xf32, #tpu.memory_space<vmem>>, vector<1x32x16xf32>,
    return
  }
  func.func @transform_0(%arg0: i32, %arg1: i32) -> (i32, i32, i32) {
    %c0_i32 = arith.constant 0 : i32
    %c0_i32_0 = arith.constant 0 : i32
    return %arg0, %c0_i32, %arg1 : i32, i32, i32
  }
  func.func @transform_1(%arg0: i32, %arg1: i32) -> (i32, i32) {
    %c0_i32 = arith.constant 0 : i32
    %c0_i32_0 = arith.constant 0 : i32
    %c0_i32_1 = arith.constant 0 : i32
    return %c0_i32, %c0_i32_0 : i32, i32
  }
  func.func @transform_2(%arg0: i32, %arg1: i32) -> (i32, i32) {
    %c0_i32 = arith.constant 0 : i32
    %c0_i32_0 = arith.constant 0 : i32
    %c0_i32_1 = arith.constant 0 : i32
    return %c0_i32, %c0_i32_0 : i32, i32
  }
  func.func @transform_3(%arg0: i32, %arg1: i32) -> (i32, i32, i32) {
    %c0_i32 = arith.constant 0 : i32
    %c0_i32_0 = arith.constant 0 : i32
    return %arg0, %c0_i32, %arg1 : i32, i32, i32
  }
}

module attributes {stable_mosaic.version = 11 : i64} {
  func.func @_pwconv_kernel(%arg0: i32, %arg1: i32, %arg2: memref<1x32x16xf32, #tpu.memory_space<vmem>>, %arg3: memref<64x32xf32, #tpu.memory_space<vmem>>, %arg4: memref<64x1xf32, #tpu.memory_space<vmem>>, %arg5: memref<1x64x16xf32, #tpu.memory_space<vmem>>) attributes {dimension_semantics = [#tpu.dimension_semantics<parallel>, #tpu.dimension_semantics<parallel>], iteration_bounds = array<i64: 2, 1>, scalar_prefetch = 0 : i64, scratch_operands = 0 : i64, tpu.core_type = #tpu.core_type<tc>, window_params = [{transform_indices = @transform_0, window_bounds = array<i64: 1, 32, 16>}, {pipeline_mode = #tpu.pipeline_mode<synchronous>, transform_indices = @transform_1, window_bounds = array<i64: 64, 32>}, {pipeline_mode = #tpu.pipeline_mode<synchronous>, transform_indices = @transform_2, window_bounds = array<i64: 64, 1>}, {transform_indices = @transform_3, window_bounds = array<i64: 1, 64, 16>}]} {
    %c0 = arith.constant 0 : index
    %c0_0 = arith.constant 0 : index
    %0 = vector.load %arg3[%c0, %c0_0] : memref<64x32xf32, #tpu.memory_space<vmem>>, vector<64x32xf32>
    %c0_1 = arith.constant 0 : index
    %c0_2 = arith.constant 0 : index
    %c0_3 = arith.constant 0 : index
    %1 = vector.load %arg2[%c0_1, %c0_2, %c0_3] : memref<1x32x16xf32, #tpu.memory_space<vmem>>, vector<1x32x16xf32>
    %2 = vector.shape_cast %1 : vector<1x32x16xf32> to vector<32x16xf32>
    %cst = arith.constant dense<0.000000e+00> : vector<64x16xf32>
    %3 = tpu.matmul %0, %2, %cst {dimension_numbers = #tpu.dot_dimension_numbers<[1], [0], [0], [1], [0, 0, 1, 1], [], []>} : vector<64x32xf32>, vector<32x16xf32>, vector<64x16xf32> -> vector<64x16xf32>
    %c0_4 = arith.constant 0 : index
    %c0_5 = arith.constant 0 : index
    %4 = vector.load %arg4[%c0_4, %c0_5] : memref<64x1xf32, #tpu.memory_space<vmem>>, vector<64x1xf32>
    %5 = vector.broadcast %4 : vector<64x1xf32> to vector<64x16xf32>
    %6 = arith.addf %3, %5 : vector<64x16xf32>
    %c0_6 = arith.constant 0 : index
    %c0_7 = arith.constant 0 : index
    %c0_8 = arith.constant 0 : index
    %7 = vector.load %arg5[%c0_6, %c0_7, %c0_8] : memref<1x64x16xf32, #tpu.memory_space<vmem>>, vector<1x64x16xf32>
    %8 = vector.shape_cast %7 : vector<1x64x16xf32> to vector<64x16xf32>
    %9 = vector.shape_cast %6 : vector<64x16xf32> to vector<1x64x16xf32>
    tpu.vector_store %arg5[%c0_6, %c0_7, %c0_8], %9 {strides = array<i32>} : memref<1x64x16xf32, #tpu.memory_space<vmem>>, vector<1x64x16xf32>,
    return
  }
  func.func @transform_0(%arg0: i32, %arg1: i32) -> (i32, i32, i32) {
    %c0_i32 = arith.constant 0 : i32
    %c0_i32_0 = arith.constant 0 : i32
    return %arg0, %c0_i32, %arg1 : i32, i32, i32
  }
  func.func @transform_1(%arg0: i32, %arg1: i32) -> (i32, i32) {
    %c0_i32 = arith.constant 0 : i32
    %c0_i32_0 = arith.constant 0 : i32
    %c0_i32_1 = arith.constant 0 : i32
    return %c0_i32, %c0_i32_0 : i32, i32
  }
  func.func @transform_2(%arg0: i32, %arg1: i32) -> (i32, i32) {
    %c0_i32 = arith.constant 0 : i32
    %c0_i32_0 = arith.constant 0 : i32
    %c0_i32_1 = arith.constant 0 : i32
    return %c0_i32, %c0_i32_0 : i32, i32
  }
  func.func @transform_3(%arg0: i32, %arg1: i32) -> (i32, i32, i32) {
    %c0_i32 = arith.constant 0 : i32
    %c0_i32_0 = arith.constant 0 : i32
    return %arg0, %c0_i32, %arg1 : i32, i32, i32
  }
}

module attributes {stable_mosaic.version = 11 : i64} {
  func.func @_pwconv_kernel(%arg0: i32, %arg1: i32, %arg2: memref<1x64x16xf32, #tpu.memory_space<vmem>>, %arg3: memref<64x64xf32, #tpu.memory_space<vmem>>, %arg4: memref<64x1xf32, #tpu.memory_space<vmem>>, %arg5: memref<1x64x16xf32, #tpu.memory_space<vmem>>) attributes {dimension_semantics = [#tpu.dimension_semantics<parallel>, #tpu.dimension_semantics<parallel>], iteration_bounds = array<i64: 2, 1>, scalar_prefetch = 0 : i64, scratch_operands = 0 : i64, tpu.core_type = #tpu.core_type<tc>, window_params = [{transform_indices = @transform_0, window_bounds = array<i64: 1, 64, 16>}, {pipeline_mode = #tpu.pipeline_mode<synchronous>, transform_indices = @transform_1, window_bounds = array<i64: 64, 64>}, {pipeline_mode = #tpu.pipeline_mode<synchronous>, transform_indices = @transform_2, window_bounds = array<i64: 64, 1>}, {transform_indices = @transform_3, window_bounds = array<i64: 1, 64, 16>}]} {
    %c0 = arith.constant 0 : index
    %c0_0 = arith.constant 0 : index
    %0 = vector.load %arg3[%c0, %c0_0] : memref<64x64xf32, #tpu.memory_space<vmem>>, vector<64x64xf32>
    %c0_1 = arith.constant 0 : index
    %c0_2 = arith.constant 0 : index
    %c0_3 = arith.constant 0 : index
    %1 = vector.load %arg2[%c0_1, %c0_2, %c0_3] : memref<1x64x16xf32, #tpu.memory_space<vmem>>, vector<1x64x16xf32>
    %2 = vector.shape_cast %1 : vector<1x64x16xf32> to vector<64x16xf32>
    %cst = arith.constant dense<0.000000e+00> : vector<64x16xf32>
    %3 = tpu.matmul %0, %2, %cst {dimension_numbers = #tpu.dot_dimension_numbers<[1], [0], [0], [1], [0, 0, 1, 1], [], []>} : vector<64x64xf32>, vector<64x16xf32>, vector<64x16xf32> -> vector<64x16xf32>
    %c0_4 = arith.constant 0 : index
    %c0_5 = arith.constant 0 : index
    %4 = vector.load %arg4[%c0_4, %c0_5] : memref<64x1xf32, #tpu.memory_space<vmem>>, vector<64x1xf32>
    %5 = vector.broadcast %4 : vector<64x1xf32> to vector<64x16xf32>
    %6 = arith.addf %3, %5 : vector<64x16xf32>
    %c0_6 = arith.constant 0 : index
    %c0_7 = arith.constant 0 : index
    %c0_8 = arith.constant 0 : index
    %7 = vector.load %arg5[%c0_6, %c0_7, %c0_8] : memref<1x64x16xf32, #tpu.memory_space<vmem>>, vector<1x64x16xf32>
    %8 = vector.shape_cast %7 : vector<1x64x16xf32> to vector<64x16xf32>
    %9 = vector.shape_cast %6 : vector<64x16xf32> to vector<1x64x16xf32>
    tpu.vector_store %arg5[%c0_6, %c0_7, %c0_8], %9 {strides = array<i32>} : memref<1x64x16xf32, #tpu.memory_space<vmem>>, vector<1x64x16xf32>,
    return
  }
  func.func @transform_0(%arg0: i32, %arg1: i32) -> (i32, i32, i32) {
    %c0_i32 = arith.constant 0 : i32
    %c0_i32_0 = arith.constant 0 : i32
    return %arg0, %c0_i32, %arg1 : i32, i32, i32
  }
  func.func @transform_1(%arg0: i32, %arg1: i32) -> (i32, i32) {
    %c0_i32 = arith.constant 0 : i32
    %c0_i32_0 = arith.constant 0 : i32
    %c0_i32_1 = arith.constant 0 : i32
    return %c0_i32, %c0_i32_0 : i32, i32
  }
  func.func @transform_2(%arg0: i32, %arg1: i32) -> (i32, i32) {
    %c0_i32 = arith.constant 0 : i32
    %c0_i32_0 = arith.constant 0 : i32
    %c0_i32_1 = arith.constant 0 : i32
    return %c0_i32, %c0_i32_0 : i32, i32
  }
  func.func @transform_3(%arg0: i32, %arg1: i32) -> (i32, i32, i32) {
    %c0_i32 = arith.constant 0 : i32
    %c0_i32_0 = arith.constant 0 : i32
    return %arg0, %c0_i32, %arg1 : i32, i32, i32
  }
}

module attributes {stable_mosaic.version = 11 : i64} {
  func.func @_fkc_kernel(%arg0: i32, %arg1: i32, %arg2: memref<1x4x3x16xf32, #tpu.memory_space<vmem>>, %arg3: memref<256x4xf32, #tpu.memory_space<vmem>>, %arg4: memref<1x64x16xf32, #tpu.memory_space<vmem>>) attributes {dimension_semantics = [#tpu.dimension_semantics<parallel>, #tpu.dimension_semantics<parallel>], iteration_bounds = array<i64: 2, 1>, scalar_prefetch = 0 : i64, scratch_operands = 0 : i64, tpu.core_type = #tpu.core_type<tc>, window_params = [{transform_indices = @transform_0, window_bounds = array<i64: 1, 4, 3, 16>}, {pipeline_mode = #tpu.pipeline_mode<synchronous>, transform_indices = @transform_1, window_bounds = array<i64: 256, 4>}, {transform_indices = @transform_2, window_bounds = array<i64: 1, 64, 16>}]} {
    %c0 = arith.constant 0 : index
    %c0_0 = arith.constant 0 : index
    %0 = vector.load %arg3[%c0, %c0_0] : memref<256x4xf32, #tpu.memory_space<vmem>>, vector<256x1xf32>
    %c0_1 = arith.constant 0 : index
    %c1 = arith.constant 1 : index
    %1 = vector.load %arg3[%c0_1, %c1] : memref<256x4xf32, #tpu.memory_space<vmem>>, vector<256x1xf32>
    %c0_2 = arith.constant 0 : index
    %c2 = arith.constant 2 : index
    %2 = vector.load %arg3[%c0_2, %c2] : memref<256x4xf32, #tpu.memory_space<vmem>>, vector<256x1xf32>
    %c0_3 = arith.constant 0 : index
    %c3 = arith.constant 3 : index
    %3 = vector.load %arg3[%c0_3, %c3] : memref<256x4xf32, #tpu.memory_space<vmem>>, vector<256x1xf32>
    %cst = arith.constant 0.000000e+00 : f32
    %4 = vector.broadcast %cst : f32 to vector<64x16xf32>
    %c0_4 = arith.constant 0 : index
    %c0_5 = arith.constant 0 : index
    %c0_6 = arith.constant 0 : index
    %c0_7 = arith.constant 0 : index
    %5 = vector.load %arg2[%c0_4, %c0_5, %c0_6, %c0_7] : memref<1x4x3x16xf32, #tpu.memory_space<vmem>>, vector<1x1x3x16xf32>
    %6 = vector.shape_cast %5 : vector<1x1x3x16xf32> to vector<3x16xf32>
    %7 = vector.extract_strided_slice %6 {offsets = [0, 0], sizes = [1, 16], strides = [1, 1]} : vector<3x16xf32> to vector<1x16xf32>
    %8 = vector.extract_strided_slice %6 {offsets = [1, 0], sizes = [1, 16], strides = [1, 1]} : vector<3x16xf32> to vector<1x16xf32>
    %9 = vector.extract_strided_slice %6 {offsets = [2, 0], sizes = [1, 16], strides = [1, 1]} : vector<3x16xf32> to vector<1x16xf32>
    %10 = arith.mulf %7, %7 : vector<1x16xf32>
    %11 = arith.mulf %8, %8 : vector<1x16xf32>
    %12 = arith.addf %10, %11 : vector<1x16xf32>
    %13 = arith.mulf %9, %9 : vector<1x16xf32>
    %14 = arith.addf %12, %13 : vector<1x16xf32>
    %cst_8 = arith.constant -1.250000e+01 : f32
    %15 = vector.broadcast %cst_8 : f32 to vector<1x16xf32>
    %16 = arith.mulf %14, %15 : vector<1x16xf32>
    %17 = vector.broadcast %0 : vector<256x1xf32> to vector<256x16xf32>
    %18 = vector.broadcast %7 : vector<1x16xf32> to vector<256x16xf32>
    %19 = arith.mulf %17, %18 : vector<256x16xf32>
    %20 = vector.broadcast %1 : vector<256x1xf32> to vector<256x16xf32>
    %21 = vector.broadcast %8 : vector<1x16xf32> to vector<256x16xf32>
    %22 = arith.mulf %20, %21 : vector<256x16xf32>
    %23 = arith.addf %19, %22 : vector<256x16xf32>
    %24 = vector.broadcast %2 : vector<256x1xf32> to vector<256x16xf32>
    %25 = vector.broadcast %9 : vector<1x16xf32> to vector<256x16xf32>
    %26 = arith.mulf %24, %25 : vector<256x16xf32>
    %27 = arith.addf %23, %26 : vector<256x16xf32>
    %28 = vector.broadcast %3 : vector<256x1xf32> to vector<256x16xf32>
    %29 = arith.addf %27, %28 : vector<256x16xf32>
    %30 = vector.broadcast %16 : vector<1x16xf32> to vector<256x16xf32>
    %31 = arith.addf %29, %30 : vector<256x16xf32>
    %32 = math.exp %31 : vector<256x16xf32>
    %33 = vector.extract_strided_slice %32 {offsets = [0, 0], sizes = [64, 16], strides = [1, 1]} : vector<256x16xf32> to vector<64x16xf32>
    %34 = vector.extract_strided_slice %32 {offsets = [64, 0], sizes = [64, 16], strides = [1, 1]} : vector<256x16xf32> to vector<64x16xf32>
    %35 = arith.addf %33, %34 : vector<64x16xf32>
    %36 = vector.extract_strided_slice %32 {offsets = [128, 0], sizes = [64, 16], strides = [1, 1]} : vector<256x16xf32> to vector<64x16xf32>
    %37 = arith.addf %35, %36 : vector<64x16xf32>
    %38 = vector.extract_strided_slice %32 {offsets = [192, 0], sizes = [64, 16], strides = [1, 1]} : vector<256x16xf32> to vector<64x16xf32>
    %39 = arith.addf %37, %38 : vector<64x16xf32>
    %40 = arith.addf %4, %39 : vector<64x16xf32>
    %c0_9 = arith.constant 0 : index
    %c1_10 = arith.constant 1 : index
    %c0_11 = arith.constant 0 : index
    %c0_12 = arith.constant 0 : index
    %41 = vector.load %arg2[%c0_9, %c1_10, %c0_11, %c0_12] : memref<1x4x3x16xf32, #tpu.memory_space<vmem>>, vector<1x1x3x16xf32>
    %42 = vector.shape_cast %41 : vector<1x1x3x16xf32> to vector<3x16xf32>
    %43 = vector.extract_strided_slice %42 {offsets = [0, 0], sizes = [1, 16], strides = [1, 1]} : vector<3x16xf32> to vector<1x16xf32>
    %44 = vector.extract_strided_slice %42 {offsets = [1, 0], sizes = [1, 16], strides = [1, 1]} : vector<3x16xf32> to vector<1x16xf32>
    %45 = vector.extract_strided_slice %42 {offsets = [2, 0], sizes = [1, 16], strides = [1, 1]} : vector<3x16xf32> to vector<1x16xf32>
    %46 = arith.mulf %43, %43 : vector<1x16xf32>
    %47 = arith.mulf %44, %44 : vector<1x16xf32>
    %48 = arith.addf %46, %47 : vector<1x16xf32>
    %49 = arith.mulf %45, %45 : vector<1x16xf32>
    %50 = arith.addf %48, %49 : vector<1x16xf32>
    %cst_13 = arith.constant -1.250000e+01 : f32
    %51 = vector.broadcast %cst_13 : f32 to vector<1x16xf32>
    %52 = arith.mulf %50, %51 : vector<1x16xf32>
    %53 = vector.broadcast %0 : vector<256x1xf32> to vector<256x16xf32>
    %54 = vector.broadcast %43 : vector<1x16xf32> to vector<256x16xf32>
    %55 = arith.mulf %53, %54 : vector<256x16xf32>
    %56 = vector.broadcast %1 : vector<256x1xf32> to vector<256x16xf32>
    %57 = vector.broadcast %44 : vector<1x16xf32> to vector<256x16xf32>
    %58 = arith.mulf %56, %57 : vector<256x16xf32>
    %59 = arith.addf %55, %58 : vector<256x16xf32>
    %60 = vector.broadcast %2 : vector<256x1xf32> to vector<256x16xf32>
    %61 = vector.broadcast %45 : vector<1x16xf32> to vector<256x16xf32>
    %62 = arith.mulf %60, %61 : vector<256x16xf32>
    %63 = arith.addf %59, %62 : vector<256x16xf32>
    %64 = vector.broadcast %3 : vector<256x1xf32> to vector<256x16xf32>
    %65 = arith.addf %63, %64 : vector<256x16xf32>
    %66 = vector.broadcast %52 : vector<1x16xf32> to vector<256x16xf32>
    %67 = arith.addf %65, %66 : vector<256x16xf32>
    %68 = math.exp %67 : vector<256x16xf32>
    %69 = vector.extract_strided_slice %68 {offsets = [0, 0], sizes = [64, 16], strides = [1, 1]} : vector<256x16xf32> to vector<64x16xf32>
    %70 = vector.extract_strided_slice %68 {offsets = [64, 0], sizes = [64, 16], strides = [1, 1]} : vector<256x16xf32> to vector<64x16xf32>
    %71 = arith.addf %69, %70 : vector<64x16xf32>
    %72 = vector.extract_strided_slice %68 {offsets = [128, 0], sizes = [64, 16], strides = [1, 1]} : vector<256x16xf32> to vector<64x16xf32>
    %73 = arith.addf %71, %72 : vector<64x16xf32>
    %74 = vector.extract_strided_slice %68 {offsets = [192, 0], sizes = [64, 16], strides = [1, 1]} : vector<256x16xf32> to vector<64x16xf32>
    %75 = arith.addf %73, %74 : vector<64x16xf32>
    %76 = arith.addf %40, %75 : vector<64x16xf32>
    %c0_14 = arith.constant 0 : index
    %c2_15 = arith.constant 2 : index
    %c0_16 = arith.constant 0 : index
    %c0_17 = arith.constant 0 : index
    %77 = vector.load %arg2[%c0_14, %c2_15, %c0_16, %c0_17] : memref<1x4x3x16xf32, #tpu.memory_space<vmem>>, vector<1x1x3x16xf32>
    %78 = vector.shape_cast %77 : vector<1x1x3x16xf32> to vector<3x16xf32>
    %79 = vector.extract_strided_slice %78 {offsets = [0, 0], sizes = [1, 16], strides = [1, 1]} : vector<3x16xf32> to vector<1x16xf32>
    %80 = vector.extract_strided_slice %78 {offsets = [1, 0], sizes = [1, 16], strides = [1, 1]} : vector<3x16xf32> to vector<1x16xf32>
    %81 = vector.extract_strided_slice %78 {offsets = [2, 0], sizes = [1, 16], strides = [1, 1]} : vector<3x16xf32> to vector<1x16xf32>
    %82 = arith.mulf %79, %79 : vector<1x16xf32>
    %83 = arith.mulf %80, %80 : vector<1x16xf32>
    %84 = arith.addf %82, %83 : vector<1x16xf32>
    %85 = arith.mulf %81, %81 : vector<1x16xf32>
    %86 = arith.addf %84, %85 : vector<1x16xf32>
    %cst_18 = arith.constant -1.250000e+01 : f32
    %87 = vector.broadcast %cst_18 : f32 to vector<1x16xf32>
    %88 = arith.mulf %86, %87 : vector<1x16xf32>
    %89 = vector.broadcast %0 : vector<256x1xf32> to vector<256x16xf32>
    %90 = vector.broadcast %79 : vector<1x16xf32> to vector<256x16xf32>
    %91 = arith.mulf %89, %90 : vector<256x16xf32>
    %92 = vector.broadcast %1 : vector<256x1xf32> to vector<256x16xf32>
    %93 = vector.broadcast %80 : vector<1x16xf32> to vector<256x16xf32>
    %94 = arith.mulf %92, %93 : vector<256x16xf32>
    %95 = arith.addf %91, %94 : vector<256x16xf32>
    %96 = vector.broadcast %2 : vector<256x1xf32> to vector<256x16xf32>
    %97 = vector.broadcast %81 : vector<1x16xf32> to vector<256x16xf32>
    %98 = arith.mulf %96, %97 : vector<256x16xf32>
    %99 = arith.addf %95, %98 : vector<256x16xf32>
    %100 = vector.broadcast %3 : vector<256x1xf32> to vector<256x16xf32>
    %101 = arith.addf %99, %100 : vector<256x16xf32>
    %102 = vector.broadcast %88 : vector<1x16xf32> to vector<256x16xf32>
    %103 = arith.addf %101, %102 : vector<256x16xf32>
    %104 = math.exp %103 : vector<256x16xf32>
    %105 = vector.extract_strided_slice %104 {offsets = [0, 0], sizes = [64, 16], strides = [1, 1]} : vector<256x16xf32> to vector<64x16xf32>
    %106 = vector.extract_strided_slice %104 {offsets = [64, 0], sizes = [64, 16], strides = [1, 1]} : vector<256x16xf32> to vector<64x16xf32>
    %107 = arith.addf %105, %106 : vector<64x16xf32>
    %108 = vector.extract_strided_slice %104 {offsets = [128, 0], sizes = [64, 16], strides = [1, 1]} : vector<256x16xf32> to vector<64x16xf32>
    %109 = arith.addf %107, %108 : vector<64x16xf32>
    %110 = vector.extract_strided_slice %104 {offsets = [192, 0], sizes = [64, 16], strides = [1, 1]} : vector<256x16xf32> to vector<64x16xf32>
    %111 = arith.addf %109, %110 : vector<64x16xf32>
    %112 = arith.addf %76, %111 : vector<64x16xf32>
    %c0_19 = arith.constant 0 : index
    %c3_20 = arith.constant 3 : index
    %c0_21 = arith.constant 0 : index
    %c0_22 = arith.constant 0 : index
    %113 = vector.load %arg2[%c0_19, %c3_20, %c0_21, %c0_22] : memref<1x4x3x16xf32, #tpu.memory_space<vmem>>, vector<1x1x3x16xf32>
    %114 = vector.shape_cast %113 : vector<1x1x3x16xf32> to vector<3x16xf32>
    %115 = vector.extract_strided_slice %114 {offsets = [0, 0], sizes = [1, 16], strides = [1, 1]} : vector<3x16xf32> to vector<1x16xf32>
    %116 = vector.extract_strided_slice %114 {offsets = [1, 0], sizes = [1, 16], strides = [1, 1]} : vector<3x16xf32> to vector<1x16xf32>
    %117 = vector.extract_strided_slice %114 {offsets = [2, 0], sizes = [1, 16], strides = [1, 1]} : vector<3x16xf32> to vector<1x16xf32>
    %118 = arith.mulf %115, %115 : vector<1x16xf32>
    %119 = arith.mulf %116, %116 : vector<1x16xf32>
    %120 = arith.addf %118, %119 : vector<1x16xf32>
    %121 = arith.mulf %117, %117 : vector<1x16xf32>
    %122 = arith.addf %120, %121 : vector<1x16xf32>
    %cst_23 = arith.constant -1.250000e+01 : f32
    %123 = vector.broadcast %cst_23 : f32 to vector<1x16xf32>
    %124 = arith.mulf %122, %123 : vector<1x16xf32>
    %125 = vector.broadcast %0 : vector<256x1xf32> to vector<256x16xf32>
    %126 = vector.broadcast %115 : vector<1x16xf32> to vector<256x16xf32>
    %127 = arith.mulf %125, %126 : vector<256x16xf32>
    %128 = vector.broadcast %1 : vector<256x1xf32> to vector<256x16xf32>
    %129 = vector.broadcast %116 : vector<1x16xf32> to vector<256x16xf32>
    %130 = arith.mulf %128, %129 : vector<256x16xf32>
    %131 = arith.addf %127, %130 : vector<256x16xf32>
    %132 = vector.broadcast %2 : vector<256x1xf32> to vector<256x16xf32>
    %133 = vector.broadcast %117 : vector<1x16xf32> to vector<256x16xf32>
    %134 = arith.mulf %132, %133 : vector<256x16xf32>
    %135 = arith.addf %131, %134 : vector<256x16xf32>
    %136 = vector.broadcast %3 : vector<256x1xf32> to vector<256x16xf32>
    %137 = arith.addf %135, %136 : vector<256x16xf32>
    %138 = vector.broadcast %124 : vector<1x16xf32> to vector<256x16xf32>
    %139 = arith.addf %137, %138 : vector<256x16xf32>
    %140 = math.exp %139 : vector<256x16xf32>
    %141 = vector.extract_strided_slice %140 {offsets = [0, 0], sizes = [64, 16], strides = [1, 1]} : vector<256x16xf32> to vector<64x16xf32>
    %142 = vector.extract_strided_slice %140 {offsets = [64, 0], sizes = [64, 16], strides = [1, 1]} : vector<256x16xf32> to vector<64x16xf32>
    %143 = arith.addf %141, %142 : vector<64x16xf32>
    %144 = vector.extract_strided_slice %140 {offsets = [128, 0], sizes = [64, 16], strides = [1, 1]} : vector<256x16xf32> to vector<64x16xf32>
    %145 = arith.addf %143, %144 : vector<64x16xf32>
    %146 = vector.extract_strided_slice %140 {offsets = [192, 0], sizes = [64, 16], strides = [1, 1]} : vector<256x16xf32> to vector<64x16xf32>
    %147 = arith.addf %145, %146 : vector<64x16xf32>
    %148 = arith.addf %112, %147 : vector<64x16xf32>
    %cst_24 = arith.constant 6.250000e-02 : f32
    %149 = vector.broadcast %cst_24 : f32 to vector<64x16xf32>
    %150 = arith.mulf %148, %149 : vector<64x16xf32>
    %c0_25 = arith.constant 0 : index
    %c0_26 = arith.constant 0 : index
    %c0_27 = arith.constant 0 : index
    %151 = vector.load %arg4[%c0_25, %c0_26, %c0_27] : memref<1x64x16xf32, #tpu.memory_space<vmem>>, vector<1x64x16xf32>
    %152 = vector.shape_cast %151 : vector<1x64x16xf32> to vector<64x16xf32>
    %153 = vector.shape_cast %150 : vector<64x16xf32> to vector<1x64x16xf32>
    tpu.vector_store %arg4[%c0_25, %c0_26, %c0_27], %153 {strides = array<i32>} : memref<1x64x16xf32, #tpu.memory_space<vmem>>, vector<1x64x16xf32>,
    return
  }
  func.func @transform_0(%arg0: i32, %arg1: i32) -> (i32, i32, i32, i32) {
    %c0_i32 = arith.constant 0 : i32
    %c0_i32_0 = arith.constant 0 : i32
    %c0_i32_1 = arith.constant 0 : i32
    return %arg0, %c0_i32, %c0_i32_0, %arg1 : i32, i32, i32, i32
  }
  func.func @transform_1(%arg0: i32, %arg1: i32) -> (i32, i32) {
    %c0_i32 = arith.constant 0 : i32
    %c0_i32_0 = arith.constant 0 : i32
    %c0_i32_1 = arith.constant 0 : i32
    return %c0_i32, %c0_i32_0 : i32, i32
  }
  func.func @transform_2(%arg0: i32, %arg1: i32) -> (i32, i32, i32) {
    %c0_i32 = arith.constant 0 : i32
    %c0_i32_0 = arith.constant 0 : i32
    return %arg0, %c0_i32, %arg1 : i32, i32, i32
  }
}

module attributes {stable_mosaic.version = 11 : i64} {
  func.func @_pwconv_kernel(%arg0: i32, %arg1: i32, %arg2: memref<1x136x16xf32, #tpu.memory_space<vmem>>, %arg3: memref<136x136xf32, #tpu.memory_space<vmem>>, %arg4: memref<136x1xf32, #tpu.memory_space<vmem>>, %arg5: memref<1x136x16xf32, #tpu.memory_space<vmem>>) attributes {dimension_semantics = [#tpu.dimension_semantics<parallel>, #tpu.dimension_semantics<parallel>], iteration_bounds = array<i64: 2, 1>, scalar_prefetch = 0 : i64, scratch_operands = 0 : i64, tpu.core_type = #tpu.core_type<tc>, window_params = [{transform_indices = @transform_0, window_bounds = array<i64: 1, 136, 16>}, {pipeline_mode = #tpu.pipeline_mode<synchronous>, transform_indices = @transform_1, window_bounds = array<i64: 136, 136>}, {pipeline_mode = #tpu.pipeline_mode<synchronous>, transform_indices = @transform_2, window_bounds = array<i64: 136, 1>}, {transform_indices = @transform_3, window_bounds = array<i64: 1, 136, 16>}]} {
    %c0 = arith.constant 0 : index
    %c0_0 = arith.constant 0 : index
    %0 = vector.load %arg3[%c0, %c0_0] : memref<136x136xf32, #tpu.memory_space<vmem>>, vector<136x136xf32>
    %c0_1 = arith.constant 0 : index
    %c0_2 = arith.constant 0 : index
    %c0_3 = arith.constant 0 : index
    %1 = vector.load %arg2[%c0_1, %c0_2, %c0_3] : memref<1x136x16xf32, #tpu.memory_space<vmem>>, vector<1x136x16xf32>
    %2 = vector.shape_cast %1 : vector<1x136x16xf32> to vector<136x16xf32>
    %cst = arith.constant dense<0.000000e+00> : vector<136x16xf32>
    %3 = tpu.matmul %0, %2, %cst {dimension_numbers = #tpu.dot_dimension_numbers<[1], [0], [0], [1], [0, 0, 1, 1], [], []>} : vector<136x136xf32>, vector<136x16xf32>, vector<136x16xf32> -> vector<136x16xf32>
    %c0_4 = arith.constant 0 : index
    %c0_5 = arith.constant 0 : index
    %4 = vector.load %arg4[%c0_4, %c0_5] : memref<136x1xf32, #tpu.memory_space<vmem>>, vector<136x1xf32>
    %5 = vector.broadcast %4 : vector<136x1xf32> to vector<136x16xf32>
    %6 = arith.addf %3, %5 : vector<136x16xf32>
    %c0_6 = arith.constant 0 : index
    %c0_7 = arith.constant 0 : index
    %c0_8 = arith.constant 0 : index
    %7 = vector.load %arg5[%c0_6, %c0_7, %c0_8] : memref<1x136x16xf32, #tpu.memory_space<vmem>>, vector<1x136x16xf32>
    %8 = vector.shape_cast %7 : vector<1x136x16xf32> to vector<136x16xf32>
    %9 = vector.shape_cast %6 : vector<136x16xf32> to vector<1x136x16xf32>
    tpu.vector_store %arg5[%c0_6, %c0_7, %c0_8], %9 {strides = array<i32>} : memref<1x136x16xf32, #tpu.memory_space<vmem>>, vector<1x136x16xf32>,
    return
  }
  func.func @transform_0(%arg0: i32, %arg1: i32) -> (i32, i32, i32) {
    %c0_i32 = arith.constant 0 : i32
    %c0_i32_0 = arith.constant 0 : i32
    return %arg0, %c0_i32, %arg1 : i32, i32, i32
  }
  func.func @transform_1(%arg0: i32, %arg1: i32) -> (i32, i32) {
    %c0_i32 = arith.constant 0 : i32
    %c0_i32_0 = arith.constant 0 : i32
    %c0_i32_1 = arith.constant 0 : i32
    return %c0_i32, %c0_i32_0 : i32, i32
  }
  func.func @transform_2(%arg0: i32, %arg1: i32) -> (i32, i32) {
    %c0_i32 = arith.constant 0 : i32
    %c0_i32_0 = arith.constant 0 : i32
    %c0_i32_1 = arith.constant 0 : i32
    return %c0_i32, %c0_i32_0 : i32, i32
  }
  func.func @transform_3(%arg0: i32, %arg1: i32) -> (i32, i32, i32) {
    %c0_i32 = arith.constant 0 : i32
    %c0_i32_0 = arith.constant 0 : i32
    return %arg0, %c0_i32, %arg1 : i32, i32, i32
  }
}

</mosaic_0001>

<llo_original>
// kernel: structural_descriptor.16
$region0: #{structural_descriptor.16}
  #allocation0 [shape = 'u32[]', space=smem, size = 0x4, offset = 0x4, fixed_abs, tag = 'smem constant byte address 0x4 - core index']
  #allocation1 [shape = 'u32[72,128]{1,0:T(1,128)}', space=vmem, size = 0x9000, scoped, tag = 'internal scratch']
  %s0 = inlined_call_operand.vmem [shape: f32[2,32,16], index: 0, kind: input, shape index: {}]
  %s1 = inlined_call_operand.vmem [shape: f32[32,32], index: 1, kind: input, shape index: {}]
  %s2 = inlined_call_operand.vmem [shape: f32[32,1], index: 2, kind: input, shape index: {}]
  %s3 = inlined_call_operand.vmem [shape: f32[2,32,16], index: 3, kind: output, shape index: {}]
  %s4 = sld [smem:[#allocation0]]
  $region45: #{structural_descriptor.16} parent=0
    _
  %s6 = ssub.s32 1, %s4
  %s7 = scalar_select 0, %s6, %s4
  loop: start=0, step=1, limit=4
  $region2: #{structural_descriptor.16} parent=0 // loop_pre_header
    _
  $region3: #{structural_descriptor.16} parent=0 // loop_header
    %s9 = sphi 0, %s13
    %p10 = scmp.ge.s32.totalorder %s9, 4
    %s16 = sphi 0, %s28
    %s17 = sphi 0, %s24
    %s18 = sphi 0, %s16
    %s19 = sphi 0, %s17
    %s20 = sphi 0, %s18
    %s21 = sphi 0, %s19
    %s33 = sphi 0, %s35
    %s36 = sphi 0, %s33
    %s37 = sphi 0, %s36
    %s53 = sphi 0, %s37
    %s57 = sphi 0, %s57
    %s59 = sphi 0, %s57
    %s60 = sphi 0, %s59
    %s74 = sphi 0, %s60
    %s78 = sphi 0, %s78
    %s80 = sphi 0, %s78
    %s81 = sphi 0, %s80
    %s95 = sphi 0, %s81
    %s103 = sphi 0, %s105
    %s106 = sphi 0, %s103
    %s107 = sphi 0, %s106
    %s123 = sphi 0, %s107
  $region4: #{structural_descriptor.16} parent=0 // loop_header_branch
    %12 = sbr.rel (%p10) target = $region8
  $region5: #{structural_descriptor.16} parent=0 // loop_body
    %s14 = ssub.s32 %s9, 1
    %s15 = ssub.s32 %s9, 2
    %s22 = sadd.s32 1, %s17
    %p23 = scmp.ge.s32.totalorder %s22, 1
    %s24 = scalar_select %p23, 0, %s22
    %s25 = sadd.s32 1, %s16
    %s26 = scalar_select %p23, %s25, %s16
    %p27 = scmp.ge.s32.totalorder %s26, 2
    %s28 = scalar_select %p27, 0, %s26
    %s29 = ssub.s32 %s16, %s28
    %s30 = ssub.s32 %s17, %s24
    %s31 = sor.u32 %s29, %s30
    %p32 = scmp.eq.s32.totalorder %s31, 0
    %s34 = sadd.s32 %s33, 1
    %s35 = scalar_select %p32, %s33, %s34
    %p38 = pneg %p32
    %p39 = scmp.eq.s32.totalorder %s9, 1
    %p40 = por %p38, %p39
    %p41 = scmp.ne.s32.totalorder %s33, %s36
    %p42 = scmp.eq.s32.totalorder %s9, 0
    %p43 = por %p41, %p42
    %p44 = scmp.ne.s32.totalorder %s33, %s36
    %p45 = scmp.eq.s32.totalorder %s14, 1
    %p46 = por %p44, %p45
    %p47 = scmp.ne.s32.totalorder %s36, %s37
    %p48 = scmp.eq.s32.totalorder %s14, 0
    %p49 = por %p47, %p48
    %p50 = scmp.ne.s32.totalorder %s36, %s37
    %p51 = scmp.eq.s32.totalorder %s15, 1
    %p52 = por %p50, %p51
    %p54 = scmp.ne.s32.totalorder %s37, %s53
    %p55 = scmp.eq.s32.totalorder %s15, 0
    %p56 = por %p54, %p55
    %s58 = sadd.s32 %s57, 1
    %p61 = scmp.eq.s32.totalorder %s9, 1
    %p62 = scmp.ne.s32.totalorder %s57, %s59
    %p63 = scmp.eq.s32.totalorder %s9, 0
    %p64 = por %p62, %p63
    %p65 = scmp.ne.s32.totalorder %s57, %s59
    %p66 = scmp.eq.s32.totalorder %s14, 1
    %p67 = por %p65, %p66
    %p68 = scmp.ne.s32.totalorder %s59, %s60
    %p69 = scmp.eq.s32.totalorder %s14, 0
    %p70 = por %p68, %p69
    %p71 = scmp.ne.s32.totalorder %s59, %s60
    %p72 = scmp.eq.s32.totalorder %s15, 1
    %p73 = por %p71, %p72
    %p75 = scmp.ne.s32.totalorder %s60, %s74
    %p76 = scmp.eq.s32.totalorder %s15, 0
    %p77 = por %p75, %p76
    %s79 = sadd.s32 %s78, 1
    %p82 = scmp.eq.s32.totalorder %s9, 1
    %p83 = scmp.ne.s32.totalorder %s78, %s80
    %p84 = scmp.eq.s32.totalorder %s9, 0
    %p85 = por %p83, %p84
    %p86 = scmp.ne.s32.totalorder %s78, %s80
    %p87 = scmp.eq.s32.totalorder %s14, 1
    %p88 = por %p86, %p87
    %p89 = scmp.ne.s32.totalorder %s80, %s81
    %p90 = scmp.eq.s32.totalorder %s14, 0
    %p91 = por %p89, %p90
    %p92 = scmp.ne.s32.totalorder %s80, %s81
    %p93 = scmp.eq.s32.totalorder %s15, 1
    %p94 = por %p92, %p93
    %p96 = scmp.ne.s32.totalorder %s81, %s95
    %p97 = scmp.eq.s32.totalorder %s15, 0
    %p98 = por %p96, %p97
    %s99 = ssub.s32 %s16, %s28
    %s100 = ssub.s32 %s17, %s24
    %s101 = sor.u32 %s99, %s100
    %p102 = scmp.eq.s32.totalorder %s101, 0
    %s104 = sadd.s32 %s103, 1
    %s105 = scalar_select %p102, %s103, %s104
    %p108 = pneg %p102
    %p109 = scmp.eq.s32.totalorder %s9, 1
    %p110 = por %p108, %p109
    %p111 = scmp.ne.s32.totalorder %s103, %s106
    %p112 = scmp.eq.s32.totalorder %s9, 0
    %p113 = por %p111, %p112
    %p114 = scmp.ne.s32.totalorder %s103, %s106
    %p115 = scmp.eq.s32.totalorder %s14, 1
    %p116 = por %p114, %p115
    %p117 = scmp.ne.s32.totalorder %s106, %s107
    %p118 = scmp.eq.s32.totalorder %s14, 0
    %p119 = por %p117, %p118
    %p120 = scmp.ne.s32.totalorder %s106, %s107
    %p121 = scmp.eq.s32.totalorder %s15, 1
    %p122 = por %p120, %p121
    %p124 = scmp.ne.s32.totalorder %s107, %s123
    %p125 = scmp.eq.s32.totalorder %s15, 0
    %p126 = por %p124, %p125
    %p127 = scmp.le.s32.totalorder 1, %s9
    %p128 = scmp.lt.s32.totalorder %s9, 3
    %p129 = pnand %p127, %p128
    %p130 = pneg %p129
    // Predicated region
    $region9: #{structural_descriptor.16} parent=5 // pred_check
      _
    $region10: #{structural_descriptor.16} parent=5 // pred_check_branch
      %132 = sbr.rel (%p129) target = $region12
    $region11: #{structural_descriptor.16} parent=5 // pred_region
      %s133 = ssub.s32 %s9, 1
      // Predicated region
      $region13: #{structural_descriptor.16} parent=11 // pred_check
        %p134 = pneg %p70
      $region14: #{structural_descriptor.16} parent=11 // pred_check_branch
        %136 = sbr.rel (%p134) target = $region16
      $region15: #{structural_descriptor.16} parent=11 // pred_region
        _
      $region16: #{structural_descriptor.16} parent=11 // pred_fallthru
        _
      // Predicated region
      $region17: #{structural_descriptor.16} parent=11 // pred_check
        %p137 = pneg %p91
      $region18: #{structural_descriptor.16} parent=11 // pred_check_branch
        %139 = sbr.rel (%p137) target = $region20
      $region19: #{structural_descriptor.16} parent=11 // pred_region
        _
      $region20: #{structural_descriptor.16} parent=11 // pred_fallthru
        _
    $region12: #{structural_descriptor.16} parent=5 // pred_fallthru
      _
    %p140 = scmp.lt.s32.totalorder %s9, 2
    // Predicated region
    $region21: #{structural_descriptor.16} parent=5 // pred_check
      %p141 = pneg %p140
    $region22: #{structural_descriptor.16} parent=5 // pred_check_branch
      %143 = sbr.rel (%p141) target = $region24
    $region23: #{structural_descriptor.16} parent=5 // pred_region
      // Predicated region
      $region25: #{structural_descriptor.16} parent=23 // pred_check
        %p144 = pneg %p43
      $region26: #{structural_descriptor.16} parent=23 // pred_check_branch
        %146 = sbr.rel (%p144) target = $region28
      $region27: #{structural_descriptor.16} parent=23 // pred_region
        %p147 = scmp.lt.s32.totalorder %s16, 1
        %s148 = scalar_select %p147, %s16, 1
        %p149 = scmp.lt.s32.totalorder %s17, 0
        %s150 = scalar_select %p149, %s17, 0
        %s151 = smul.addr %s148, 4
        %s152 = sadd.s32 %s150, %s151
        %s153 = smul.addr %s152, 8
        %s154 = scalar_lea.vmem %s0, %s153
      $region28: #{structural_descriptor.16} parent=23 // pred_fallthru
        _
    $region24: #{structural_descriptor.16} parent=5 // pred_fallthru
      _
    %p155 = scmp.le.s32.totalorder 1, %s9
    %p156 = scmp.lt.s32.totalorder %s9, 3
    %p157 = pnand %p155, %p156
    %p158 = pneg %p157
    // Predicated region
    $region29: #{structural_descriptor.16} parent=5 // pred_check
      _
    $region30: #{structural_descriptor.16} parent=5 // pred_check_branch
      %160 = sbr.rel (%p157) target = $region32
    $region31: #{structural_descriptor.16} parent=5 // pred_region
      %s161 = ssub.s32 %s9, 1
      %p162 = scmp.lt.s32.totalorder %s18, 1
      %s163 = scalar_select %p162, %s18, 1
      %p164 = scmp.lt.s32.totalorder %s19, 0
      %s165 = scalar_select %p164, %s19, 0
      %s166 = smul.addr %s163, 4
      %s167 = sadd.s32 %s165, %s166
      %s168 = smul.addr %s167, 8
      %s169 = scalar_lea.vmem %s0, %s168
      %p170 = pneg %p49
      %p171 = pneg %p46
      %p172 = pneg %p70
      %p173 = pneg %p67
      %p174 = pneg %p91
      %p175 = pneg %p88
      %p176 = pneg %p119
      %p177 = pneg %p116
      %p178 = scmp.lt.s32.totalorder %s18, 1
      %s179 = scalar_select %p178, %s18, 1
      %p180 = scmp.lt.s32.totalorder %s19, 0
      %s181 = scalar_select %p180, %s19, 0
      %s182 = smul.addr %s179, 4
      %s183 = sadd.s32 %s181, %s182
      %s184 = smul.addr %s183, 8
      %s185 = scalar_lea.vmem %s3, %s184
      %p186 = scmp.lt.s32.totalorder %s18, 1
      %s187 = scalar_select %p186, %s18, 1
      %p188 = scmp.lt.s32.totalorder %s19, 0
      %s189 = scalar_select %p188, %s19, 0
      %s190 = smul.addr %s187, 4
      %s191 = sadd.s32 %s189, %s190
      %s192 = smul.addr %s191, 8
      %s193 = scalar_lea.vmem %s0, %s192
      %p194 = scmp.lt.s32.totalorder %s18, 1
      %s195 = scalar_select %p194, %s18, 1
      %p196 = scmp.lt.s32.totalorder %s19, 0
      %s197 = scalar_select %p196, %s19, 0
      %s198 = smul.addr %s195, 4
      %s199 = sadd.s32 %s197, %s198
      %s200 = smul.addr %s199, 8
      %s201 = scalar_lea.vmem %s3, %s200
      %v202 = vld [vmem:[%s1] sm:$0xff]
      %v203 = vld [vmem:[%s1 + $0x8] sm:$0xff]
      %v204 = vld [vmem:[%s1 + $0x10] sm:$0xff]
      %v205 = vld [vmem:[%s1 + $0x18] sm:$0xff]
      %v206 = vld [vmem:[%s193] sm:$0xff]
      %v207 = vld [vmem:[%s193 + $0x8] sm:$0xff]
      %v208 = vld [vmem:[%s193 + $0x10] sm:$0xff]
      %v209 = vld [vmem:[%s193 + $0x18] sm:$0xff]
      %v210 = vld [vmem:[%s2] sm:$0xff]
      %v211 = vld [vmem:[%s2 + $0x8] sm:$0xff]
      %v212 = vld [vmem:[%s2 + $0x10] sm:$0xff]
      %v213 = vld [vmem:[%s2 + $0x18] sm:$0xff]
      %215 = vset.pattern.permute.xlu0 0
      %216 = vperm.xlu0 %215, %v210
      %v217 = vpop.permute.xlu0 %216
      %220 = vset.pattern.permute.xlu0 0
      %221 = vperm.xlu0 %220, %v211
      %v222 = vpop.permute.xlu0 %221
      %225 = vset.pattern.permute.xlu0 0
      %226 = vperm.xlu0 %225, %v212
      %v227 = vpop.permute.xlu0 %226
      %230 = vset.pattern.permute.xlu0 0
      %231 = vperm.xlu0 %230, %v213
      %v232 = vpop.permute.xlu0 %231
      %vm234 = vcmask 261120
      %v236 = vsel %vm234, %v202, 0
      %v239 = vsel %vm234, %v203, 0
      %v242 = vsel %vm234, %v204, 0
      %v245 = vsel %vm234, %v205, 0
      %247 = vmatpush.msra.mxu0 0.0
      %248 = vmatpush.msra.mxu0 0.0
      %249 = vmatpush.msra.mxu0 0.0
      %250 = vmatpush.msra.mxu0 0.0
      %251 = vmatpush.msra.mxu0 0.0
      %252 = vmatpush.msra.mxu0 0.0
      %253 = vmatpush.msra.mxu0 0.0
      %254 = vmatpush.msra.mxu0 0.0
      %255 = vmatpush.msra.mxu0 0.0
      %256 = vmatpush.msra.mxu0 0.0
      %257 = vmatpush.msra.mxu0 0.0
      %258 = vmatpush.msra.mxu0 0.0
      %259 = vmatpush.msra.mxu0 %v209
      %260 = vmatpush.msra.mxu0 %v208
      %261 = vmatpush.msra.mxu0 %v207
      %262 = vmatpush.msra.mxu0 %v206
      %263 = vmatmul.f32.gmra.mxu0 %v236
      %v264 = vpop.f32.mrf.mxu0
      %v265 = vadd.f32 %v217, %v264
      %266 = vmatmul.f32.gmra.mxu0 %v239
      %v267 = vpop.f32.mrf.mxu0
      %v268 = vadd.f32 %v222, %v267
      %269 = vmatmul.f32.gmra.mxu0 %v242
      %v270 = vpop.f32.mrf.mxu0
      %v271 = vadd.f32 %v227, %v270
      %272 = vmatmul.f32.gmra.mxu0 %v245
      %v273 = vpop.f32.mrf.mxu0
      %v274 = vadd.f32 %v232, %v273
      %275 = vdwg.mxu0
      %vm276 = vcmask 130048
      %277 = vst.msk [vmem:[%s201] sm:$0xff] %vm276, %v265
      %278 = vst.msk [vmem:[%s201 + $0x8] sm:$0xff] %vm276, %v268
      %279 = vst.msk [vmem:[%s201 + $0x10] sm:$0xff] %vm276, %v271
      %280 = vst.msk [vmem:[%s201 + $0x18] sm:$0xff] %vm276, %v274
      %p281 = scmp.lt.s32.totalorder %s18, 1
      %s282 = scalar_select %p281, %s18, 1
      %p283 = scmp.lt.s32.totalorder %s19, 0
      %s284 = scalar_select %p283, %s19, 0
      %s285 = smul.addr %s282, 4
      %s286 = sadd.s32 %s284, %s285
      %s287 = smul.addr %s286, 8
      %s288 = scalar_lea.vmem %s3, %s287
      // Predicated region
      $region33: #{structural_descriptor.16} parent=31 // pred_check
        %p289 = pneg %p116
      $region34: #{structural_descriptor.16} parent=31 // pred_check_branch
        %291 = sbr.rel (%p289) target = $region36
      $region35: #{structural_descriptor.16} parent=31 // pred_region
        _
      $region36: #{structural_descriptor.16} parent=31 // pred_fallthru
        _
    $region32: #{structural_descriptor.16} parent=5 // pred_fallthru
      _
    %p292 = scmp.le.s32.totalorder 2, %s9
    // Predicated region
    $region37: #{structural_descriptor.16} parent=5 // pred_check
      %p293 = pneg %p292
    $region38: #{structural_descriptor.16} parent=5 // pred_check_branch
      %295 = sbr.rel (%p293) target = $region40
    $region39: #{structural_descriptor.16} parent=5 // pred_region
      %s296 = ssub.s32 %s9, 2
      // Predicated region
      $region41: #{structural_descriptor.16} parent=39 // pred_check
        %p297 = pneg %p122
      $region42: #{structural_descriptor.16} parent=39 // pred_check_branch
        %299 = sbr.rel (%p297) target = $region44
      $region43: #{structural_descriptor.16} parent=39 // pred_region
        %p300 = scmp.lt.s32.totalorder %s20, 1
        %s301 = scalar_select %p300, %s20, 1
        %p302 = scmp.lt.s32.totalorder %s21, 0
        %s303 = scalar_select %p302, %s21, 0
        %s304 = smul.addr %s301, 4
        %s305 = sadd.s32 %s303, %s304
        %s306 = smul.addr %s305, 8
        %s307 = scalar_lea.vmem %s3, %s306
      $region44: #{structural_descriptor.16} parent=39 // pred_fallthru
        _
    $region40: #{structural_descriptor.16} parent=5 // pred_fallthru
      _
  $region6: #{structural_descriptor.16} parent=0 // loop_footer
    %s13 = sadd.s32 1, %s9
  $region7: #{structural_descriptor.16} parent=0 // loop_footer_branch
    %8 = sbr.rel target = $region3
  $region8: #{structural_descriptor.16} parent=0 // loop_exit
    _

// kernel: structural_descriptor.17
$region0: #{structural_descriptor.17}
  #allocation0 [shape = 'u32[]', space=smem, size = 0x4, offset = 0x4, fixed_abs, tag = 'smem constant byte address 0x4 - core index']
  #allocation1 [shape = 'u32[72,128]{1,0:T(1,128)}', space=vmem, size = 0x9000, scoped, tag = 'internal scratch']
  %s0 = inlined_call_operand.vmem [shape: f32[2,32,16], index: 0, kind: input, shape index: {}]
  %s1 = inlined_call_operand.vmem [shape: f32[64,32], index: 1, kind: input, shape index: {}]
  %s2 = inlined_call_operand.vmem [shape: f32[64,1], index: 2, kind: input, shape index: {}]
  %s3 = inlined_call_operand.vmem [shape: f32[2,64,16], index: 3, kind: output, shape index: {}]
  %s4 = sld [smem:[#allocation0]]
  $region45: #{structural_descriptor.17} parent=0
    _
  %s6 = ssub.s32 1, %s4
  %s7 = scalar_select 0, %s6, %s4
  loop: start=0, step=1, limit=4
  $region2: #{structural_descriptor.17} parent=0 // loop_pre_header
    _
  $region3: #{structural_descriptor.17} parent=0 // loop_header
    %s9 = sphi 0, %s13
    %p10 = scmp.ge.s32.totalorder %s9, 4
    %s16 = sphi 0, %s28
    %s17 = sphi 0, %s24
    %s18 = sphi 0, %s16
    %s19 = sphi 0, %s17
    %s20 = sphi 0, %s18
    %s21 = sphi 0, %s19
    %s33 = sphi 0, %s35
    %s36 = sphi 0, %s33
    %s37 = sphi 0, %s36
    %s53 = sphi 0, %s37
    %s57 = sphi 0, %s57
    %s59 = sphi 0, %s57
    %s60 = sphi 0, %s59
    %s74 = sphi 0, %s60
    %s78 = sphi 0, %s78
    %s80 = sphi 0, %s78
    %s81 = sphi 0, %s80
    %s95 = sphi 0, %s81
    %s103 = sphi 0, %s105
    %s106 = sphi 0, %s103
    %s107 = sphi 0, %s106
    %s123 = sphi 0, %s107
  $region4: #{structural_descriptor.17} parent=0 // loop_header_branch
    %12 = sbr.rel (%p10) target = $region8
  $region5: #{structural_descriptor.17} parent=0 // loop_body
    %s14 = ssub.s32 %s9, 1
    %s15 = ssub.s32 %s9, 2
    %s22 = sadd.s32 1, %s17
    %p23 = scmp.ge.s32.totalorder %s22, 1
    %s24 = scalar_select %p23, 0, %s22
    %s25 = sadd.s32 1, %s16
    %s26 = scalar_select %p23, %s25, %s16
    %p27 = scmp.ge.s32.totalorder %s26, 2
    %s28 = scalar_select %p27, 0, %s26
    %s29 = ssub.s32 %s16, %s28
    %s30 = ssub.s32 %s17, %s24
    %s31 = sor.u32 %s29, %s30
    %p32 = scmp.eq.s32.totalorder %s31, 0
    %s34 = sadd.s32 %s33, 1
    %s35 = scalar_select %p32, %s33, %s34
    %p38 = pneg %p32
    %p39 = scmp.eq.s32.totalorder %s9, 1
    %p40 = por %p38, %p39
    %p41 = scmp.ne.s32.totalorder %s33, %s36
    %p42 = scmp.eq.s32.totalorder %s9, 0
    %p43 = por %p41, %p42
    %p44 = scmp.ne.s32.totalorder %s33, %s36
    %p45 = scmp.eq.s32.totalorder %s14, 1
    %p46 = por %p44, %p45
    %p47 = scmp.ne.s32.totalorder %s36, %s37
    %p48 = scmp.eq.s32.totalorder %s14, 0
    %p49 = por %p47, %p48
    %p50 = scmp.ne.s32.totalorder %s36, %s37
    %p51 = scmp.eq.s32.totalorder %s15, 1
    %p52 = por %p50, %p51
    %p54 = scmp.ne.s32.totalorder %s37, %s53
    %p55 = scmp.eq.s32.totalorder %s15, 0
    %p56 = por %p54, %p55
    %s58 = sadd.s32 %s57, 1
    %p61 = scmp.eq.s32.totalorder %s9, 1
    %p62 = scmp.ne.s32.totalorder %s57, %s59
    %p63 = scmp.eq.s32.totalorder %s9, 0
    %p64 = por %p62, %p63
    %p65 = scmp.ne.s32.totalorder %s57, %s59
    %p66 = scmp.eq.s32.totalorder %s14, 1
    %p67 = por %p65, %p66
    %p68 = scmp.ne.s32.totalorder %s59, %s60
    %p69 = scmp.eq.s32.totalorder %s14, 0
    %p70 = por %p68, %p69
    %p71 = scmp.ne.s32.totalorder %s59, %s60
    %p72 = scmp.eq.s32.totalorder %s15, 1
    %p73 = por %p71, %p72
    %p75 = scmp.ne.s32.totalorder %s60, %s74
    %p76 = scmp.eq.s32.totalorder %s15, 0
    %p77 = por %p75, %p76
    %s79 = sadd.s32 %s78, 1
    %p82 = scmp.eq.s32.totalorder %s9, 1
    %p83 = scmp.ne.s32.totalorder %s78, %s80
    %p84 = scmp.eq.s32.totalorder %s9, 0
    %p85 = por %p83, %p84
    %p86 = scmp.ne.s32.totalorder %s78, %s80
    %p87 = scmp.eq.s32.totalorder %s14, 1
    %p88 = por %p86, %p87
    %p89 = scmp.ne.s32.totalorder %s80, %s81
    %p90 = scmp.eq.s32.totalorder %s14, 0
    %p91 = por %p89, %p90
    %p92 = scmp.ne.s32.totalorder %s80, %s81
    %p93 = scmp.eq.s32.totalorder %s15, 1
    %p94 = por %p92, %p93
    %p96 = scmp.ne.s32.totalorder %s81, %s95
    %p97 = scmp.eq.s32.totalorder %s15, 0
    %p98 = por %p96, %p97
    %s99 = ssub.s32 %s16, %s28
    %s100 = ssub.s32 %s17, %s24
    %s101 = sor.u32 %s99, %s100
    %p102 = scmp.eq.s32.totalorder %s101, 0
    %s104 = sadd.s32 %s103, 1
    %s105 = scalar_select %p102, %s103, %s104
    %p108 = pneg %p102
    %p109 = scmp.eq.s32.totalorder %s9, 1
    %p110 = por %p108, %p109
    %p111 = scmp.ne.s32.totalorder %s103, %s106
    %p112 = scmp.eq.s32.totalorder %s9, 0
    %p113 = por %p111, %p112
    %p114 = scmp.ne.s32.totalorder %s103, %s106
    %p115 = scmp.eq.s32.totalorder %s14, 1
    %p116 = por %p114, %p115
    %p117 = scmp.ne.s32.totalorder %s106, %s107
    %p118 = scmp.eq.s32.totalorder %s14, 0
    %p119 = por %p117, %p118
    %p120 = scmp.ne.s32.totalorder %s106, %s107
    %p121 = scmp.eq.s32.totalorder %s15, 1
    %p122 = por %p120, %p121
    %p124 = scmp.ne.s32.totalorder %s107, %s123
    %p125 = scmp.eq.s32.totalorder %s15, 0
    %p126 = por %p124, %p125
    %p127 = scmp.le.s32.totalorder 1, %s9
    %p128 = scmp.lt.s32.totalorder %s9, 3
    %p129 = pnand %p127, %p128
    %p130 = pneg %p129
    // Predicated region
    $region9: #{structural_descriptor.17} parent=5 // pred_check
      _
    $region10: #{structural_descriptor.17} parent=5 // pred_check_branch
      %132 = sbr.rel (%p129) target = $region12
    $region11: #{structural_descriptor.17} parent=5 // pred_region
      %s133 = ssub.s32 %s9, 1
      // Predicated region
      $region13: #{structural_descriptor.17} parent=11 // pred_check
        %p134 = pneg %p70
      $region14: #{structural_descriptor.17} parent=11 // pred_check_branch
        %136 = sbr.rel (%p134) target = $region16
      $region15: #{structural_descriptor.17} parent=11 // pred_region
        _
      $region16: #{structural_descriptor.17} parent=11 // pred_fallthru
        _
      // Predicated region
      $region17: #{structural_descriptor.17} parent=11 // pred_check
        %p137 = pneg %p91
      $region18: #{structural_descriptor.17} parent=11 // pred_check_branch
        %139 = sbr.rel (%p137) target = $region20
      $region19: #{structural_descriptor.17} parent=11 // pred_region
        _
      $region20: #{structural_descriptor.17} parent=11 // pred_fallthru
        _
    $region12: #{structural_descriptor.17} parent=5 // pred_fallthru
      _
    %p140 = scmp.lt.s32.totalorder %s9, 2
    // Predicated region
    $region21: #{structural_descriptor.17} parent=5 // pred_check
      %p141 = pneg %p140
    $region22: #{structural_descriptor.17} parent=5 // pred_check_branch
      %143 = sbr.rel (%p141) target = $region24
    $region23: #{structural_descriptor.17} parent=5 // pred_region
      // Predicated region
      $region25: #{structural_descriptor.17} parent=23 // pred_check
        %p144 = pneg %p43
      $region26: #{structural_descriptor.17} parent=23 // pred_check_branch
        %146 = sbr.rel (%p144) target = $region28
      $region27: #{structural_descriptor.17} parent=23 // pred_region
        %p147 = scmp.lt.s32.totalorder %s16, 1
        %s148 = scalar_select %p147, %s16, 1
        %p149 = scmp.lt.s32.totalorder %s17, 0
        %s150 = scalar_select %p149, %s17, 0
        %s151 = smul.addr %s148, 4
        %s152 = sadd.s32 %s150, %s151
        %s153 = smul.addr %s152, 8
        %s154 = scalar_lea.vmem %s0, %s153
      $region28: #{structural_descriptor.17} parent=23 // pred_fallthru
        _
    $region24: #{structural_descriptor.17} parent=5 // pred_fallthru
      _
    %p155 = scmp.le.s32.totalorder 1, %s9
    %p156 = scmp.lt.s32.totalorder %s9, 3
    %p157 = pnand %p155, %p156
    %p158 = pneg %p157
    // Predicated region
    $region29: #{structural_descriptor.17} parent=5 // pred_check
      _
    $region30: #{structural_descriptor.17} parent=5 // pred_check_branch
      %160 = sbr.rel (%p157) target = $region32
    $region31: #{structural_descriptor.17} parent=5 // pred_region
      %s161 = ssub.s32 %s9, 1
      %p162 = scmp.lt.s32.totalorder %s18, 1
      %s163 = scalar_select %p162, %s18, 1
      %p164 = scmp.lt.s32.totalorder %s19, 0
      %s165 = scalar_select %p164, %s19, 0
      %s166 = smul.addr %s163, 4
      %s167 = sadd.s32 %s165, %s166
      %s168 = smul.addr %s167, 8
      %s169 = scalar_lea.vmem %s0, %s168
      %p170 = pneg %p49
      %p171 = pneg %p46
      %p172 = pneg %p70
      %p173 = pneg %p67
      %p174 = pneg %p91
      %p175 = pneg %p88
      %p176 = pneg %p119
      %p177 = pneg %p116
      %p178 = scmp.lt.s32.totalorder %s18, 1
      %s179 = scalar_select %p178, %s18, 1
      %p180 = scmp.lt.s32.totalorder %s19, 0
      %s181 = scalar_select %p180, %s19, 0
      %s182 = smul.addr %s179, 8
      %s183 = sadd.s32 %s181, %s182
      %s184 = smul.addr %s183, 8
      %s185 = scalar_lea.vmem %s3, %s184
      %p186 = scmp.lt.s32.totalorder %s18, 1
      %s187 = scalar_select %p186, %s18, 1
      %p188 = scmp.lt.s32.totalorder %s19, 0
      %s189 = scalar_select %p188, %s19, 0
      %s190 = smul.addr %s187, 4
      %s191 = sadd.s32 %s189, %s190
      %s192 = smul.addr %s191, 8
      %s193 = scalar_lea.vmem %s0, %s192
      %p194 = scmp.lt.s32.totalorder %s18, 1
      %s195 = scalar_select %p194, %s18, 1
      %p196 = scmp.lt.s32.totalorder %s19, 0
      %s197 = scalar_select %p196, %s19, 0
      %s198 = smul.addr %s195, 8
      %s199 = sadd.s32 %s197, %s198
      %s200 = smul.addr %s199, 8
      %s201 = scalar_lea.vmem %s3, %s200
      %v202 = vld [vmem:[%s1] sm:$0xff]
      %v203 = vld [vmem:[%s1 + $0x8] sm:$0xff]
      %v204 = vld [vmem:[%s1 + $0x10] sm:$0xff]
      %v205 = vld [vmem:[%s1 + $0x18] sm:$0xff]
      %v206 = vld [vmem:[%s1 + $0x20] sm:$0xff]
      %v207 = vld [vmem:[%s1 + $0x28] sm:$0xff]
      %v208 = vld [vmem:[%s1 + $0x30] sm:$0xff]
      %v209 = vld [vmem:[%s1 + $0x38] sm:$0xff]
      %v210 = vld [vmem:[%s193] sm:$0xff]
      %v211 = vld [vmem:[%s193 + $0x8] sm:$0xff]
      %v212 = vld [vmem:[%s193 + $0x10] sm:$0xff]
      %v213 = vld [vmem:[%s193 + $0x18] sm:$0xff]
      %v214 = vld [vmem:[%s2] sm:$0xff]
      %v215 = vld [vmem:[%s2 + $0x8] sm:$0xff]
      %v216 = vld [vmem:[%s2 + $0x10] sm:$0xff]
      %v217 = vld [vmem:[%s2 + $0x18] sm:$0xff]
      %v218 = vld [vmem:[%s2 + $0x20] sm:$0xff]
      %v219 = vld [vmem:[%s2 + $0x28] sm:$0xff]
      %v220 = vld [vmem:[%s2 + $0x30] sm:$0xff]
      %v221 = vld [vmem:[%s2 + $0x38] sm:$0xff]
      %223 = vset.pattern.permute.xlu0 0
      %224 = vperm.xlu0 %223, %v214
      %v225 = vpop.permute.xlu0 %224
      %228 = vset.pattern.permute.xlu0 0
      %229 = vperm.xlu0 %228, %v215
      %v230 = vpop.permute.xlu0 %229
      %233 = vset.pattern.permute.xlu0 0
      %234 = vperm.xlu0 %233, %v216
      %v235 = vpop.permute.xlu0 %234
      %238 = vset.pattern.permute.xlu0 0
      %239 = vperm.xlu0 %238, %v217
      %v240 = vpop.permute.xlu0 %239
      %243 = vset.pattern.permute.xlu0 0
      %244 = vperm.xlu0 %243, %v218
      %v245 = vpop.permute.xlu0 %244
      %248 = vset.pattern.permute.xlu0 0
      %249 = vperm.xlu0 %248, %v219
      %v250 = vpop.permute.xlu0 %249
      %253 = vset.pattern.permute.xlu0 0
      %254 = vperm.xlu0 %253, %v220
      %v255 = vpop.permute.xlu0 %254
      %258 = vset.pattern.permute.xlu0 0
      %259 = vperm.xlu0 %258, %v221
      %v260 = vpop.permute.xlu0 %259
      %vm262 = vcmask 261120
      %v264 = vsel %vm262, %v202, 0
      %v267 = vsel %vm262, %v203, 0
      %v270 = vsel %vm262, %v204, 0
      %v273 = vsel %vm262, %v205, 0
      %v276 = vsel %vm262, %v206, 0
      %v279 = vsel %vm262, %v207, 0
      %v282 = vsel %vm262, %v208, 0
      %v285 = vsel %vm262, %v209, 0
      %287 = vmatpush.msra.mxu0 0.0
      %288 = vmatpush.msra.mxu0 0.0
      %289 = vmatpush.msra.mxu0 0.0
      %290 = vmatpush.msra.mxu0 0.0
      %291 = vmatpush.msra.mxu0 0.0
      %292 = vmatpush.msra.mxu0 0.0
      %293 = vmatpush.msra.mxu0 0.0
      %294 = vmatpush.msra.mxu0 0.0
      %295 = vmatpush.msra.mxu0 0.0
      %296 = vmatpush.msra.mxu0 0.0
      %297 = vmatpush.msra.mxu0 0.0
      %298 = vmatpush.msra.mxu0 0.0
      %299 = vmatpush.msra.mxu0 %v213
      %300 = vmatpush.msra.mxu0 %v212
      %301 = vmatpush.msra.mxu0 %v211
      %302 = vmatpush.msra.mxu0 %v210
      %303 = vmatmul.f32.gmra.mxu0 %v264
      %v304 = vpop.f32.mrf.mxu0
      %v305 = vadd.f32 %v225, %v304
      %306 = vmatmul.f32.gmra.mxu0 %v267
      %v307 = vpop.f32.mrf.mxu0
      %v308 = vadd.f32 %v230, %v307
      %309 = vmatmul.f32.gmra.mxu0 %v270
      %v310 = vpop.f32.mrf.mxu0
      %v311 = vadd.f32 %v235, %v310
      %312 = vmatmul.f32.gmra.mxu0 %v273
      %v313 = vpop.f32.mrf.mxu0
      %v314 = vadd.f32 %v240, %v313
      %315 = vmatmul.f32.gmra.mxu0 %v276
      %v316 = vpop.f32.mrf.mxu0
      %v317 = vadd.f32 %v245, %v316
      %318 = vmatmul.f32.gmra.mxu0 %v279
      %v319 = vpop.f32.mrf.mxu0
      %v320 = vadd.f32 %v250, %v319
      %321 = vmatmul.f32.gmra.mxu0 %v282
      %v322 = vpop.f32.mrf.mxu0
      %v323 = vadd.f32 %v255, %v322
      %324 = vmatmul.f32.gmra.mxu0 %v285
      %v325 = vpop.f32.mrf.mxu0
      %v326 = vadd.f32 %v260, %v325
      %327 = vdwg.mxu0
      %vm328 = vcmask 130048
      %329 = vst.msk [vmem:[%s201] sm:$0xff] %vm328, %v305
      %330 = vst.msk [vmem:[%s201 + $0x8] sm:$0xff] %vm328, %v308
      %331 = vst.msk [vmem:[%s201 + $0x10] sm:$0xff] %vm328, %v311
      %332 = vst.msk [vmem:[%s201 + $0x18] sm:$0xff] %vm328, %v314
      %333 = vst.msk [vmem:[%s201 + $0x20] sm:$0xff] %vm328, %v317
      %334 = vst.msk [vmem:[%s201 + $0x28] sm:$0xff] %vm328, %v320
      %335 = vst.msk [vmem:[%s201 + $0x30] sm:$0xff] %vm328, %v323
      %336 = vst.msk [vmem:[%s201 + $0x38] sm:$0xff] %vm328, %v326
      %p337 = scmp.lt.s32.totalorder %s18, 1
      %s338 = scalar_select %p337, %s18, 1
      %p339 = scmp.lt.s32.totalorder %s19, 0
      %s340 = scalar_select %p339, %s19, 0
      %s341 = smul.addr %s338, 8
      %s342 = sadd.s32 %s340, %s341
      %s343 = smul.addr %s342, 8
      %s344 = scalar_lea.vmem %s3, %s343
      // Predicated region
      $region33: #{structural_descriptor.17} parent=31 // pred_check
        %p345 = pneg %p116
      $region34: #{structural_descriptor.17} parent=31 // pred_check_branch
        %347 = sbr.rel (%p345) target = $region36
      $region35: #{structural_descriptor.17} parent=31 // pred_region
        _
      $region36: #{structural_descriptor.17} parent=31 // pred_fallthru
        _
    $region32: #{structural_descriptor.17} parent=5 // pred_fallthru
      _
    %p348 = scmp.le.s32.totalorder 2, %s9
    // Predicated region
    $region37: #{structural_descriptor.17} parent=5 // pred_check
      %p349 = pneg %p348
    $region38: #{structural_descriptor.17} parent=5 // pred_check_branch
      %351 = sbr.rel (%p349) target = $region40
    $region39: #{structural_descriptor.17} parent=5 // pred_region
      %s352 = ssub.s32 %s9, 2
      // Predicated region
      $region41: #{structural_descriptor.17} parent=39 // pred_check
        %p353 = pneg %p122
      $region42: #{structural_descriptor.17} parent=39 // pred_check_branch
        %355 = sbr.rel (%p353) target = $region44
      $region43: #{structural_descriptor.17} parent=39 // pred_region
        %p356 = scmp.lt.s32.totalorder %s20, 1
        %s357 = scalar_select %p356, %s20, 1
        %p358 = scmp.lt.s32.totalorder %s21, 0
        %s359 = scalar_select %p358, %s21, 0
        %s360 = smul.addr %s357, 8
        %s361 = sadd.s32 %s359, %s360
        %s362 = smul.addr %s361, 8
        %s363 = scalar_lea.vmem %s3, %s362
      $region44: #{structural_descriptor.17} parent=39 // pred_fallthru
        _
    $region40: #{structural_descriptor.17} parent=5 // pred_fallthru
      _
  $region6: #{structural_descriptor.17} parent=0 // loop_footer
    %s13 = sadd.s32 1, %s9
  $region7: #{structural_descriptor.17} parent=0 // loop_footer_branch
    %8 = sbr.rel target = $region3
  $region8: #{structural_descriptor.17} parent=0 // loop_exit
    _

// kernel: structural_descriptor.15
$region0: #{structural_descriptor.15}
  #allocation0 [shape = 'u32[]', space=smem, size = 0x4, offset = 0x4, fixed_abs, tag = 'smem constant byte address 0x4 - core index']
  #allocation1 [shape = 'u32[72,128]{1,0:T(1,128)}', space=vmem, size = 0x9000, scoped, tag = 'internal scratch']
  %s0 = inlined_call_operand.vmem [shape: f32[2,8,16], index: 0, kind: input, shape index: {}]
  %s1 = inlined_call_operand.vmem [shape: f32[32,8], index: 1, kind: input, shape index: {}]
  %s2 = inlined_call_operand.vmem [shape: f32[32,1], index: 2, kind: input, shape index: {}]
  %s3 = inlined_call_operand.vmem [shape: f32[2,32,16], index: 3, kind: output, shape index: {}]
  %s4 = sld [smem:[#allocation0]]
  $region45: #{structural_descriptor.15} parent=0
    _
  %s6 = ssub.s32 1, %s4
  %s7 = scalar_select 0, %s6, %s4
  loop: start=0, step=1, limit=4
  $region2: #{structural_descriptor.15} parent=0 // loop_pre_header
    _
  $region3: #{structural_descriptor.15} parent=0 // loop_header
    %s9 = sphi 0, %s13
    %p10 = scmp.ge.s32.totalorder %s9, 4
    %s16 = sphi 0, %s28
    %s17 = sphi 0, %s24
    %s18 = sphi 0, %s16
    %s19 = sphi 0, %s17
    %s20 = sphi 0, %s18
    %s21 = sphi 0, %s19
    %s33 = sphi 0, %s35
    %s36 = sphi 0, %s33
    %s37 = sphi 0, %s36
    %s53 = sphi 0, %s37
    %s57 = sphi 0, %s57
    %s59 = sphi 0, %s57
    %s60 = sphi 0, %s59
    %s74 = sphi 0, %s60
    %s78 = sphi 0, %s78
    %s80 = sphi 0, %s78
    %s81 = sphi 0, %s80
    %s95 = sphi 0, %s81
    %s103 = sphi 0, %s105
    %s106 = sphi 0, %s103
    %s107 = sphi 0, %s106
    %s123 = sphi 0, %s107
  $region4: #{structural_descriptor.15} parent=0 // loop_header_branch
    %12 = sbr.rel (%p10) target = $region8
  $region5: #{structural_descriptor.15} parent=0 // loop_body
    %s14 = ssub.s32 %s9, 1
    %s15 = ssub.s32 %s9, 2
    %s22 = sadd.s32 1, %s17
    %p23 = scmp.ge.s32.totalorder %s22, 1
    %s24 = scalar_select %p23, 0, %s22
    %s25 = sadd.s32 1, %s16
    %s26 = scalar_select %p23, %s25, %s16
    %p27 = scmp.ge.s32.totalorder %s26, 2
    %s28 = scalar_select %p27, 0, %s26
    %s29 = ssub.s32 %s16, %s28
    %s30 = ssub.s32 %s17, %s24
    %s31 = sor.u32 %s29, %s30
    %p32 = scmp.eq.s32.totalorder %s31, 0
    %s34 = sadd.s32 %s33, 1
    %s35 = scalar_select %p32, %s33, %s34
    %p38 = pneg %p32
    %p39 = scmp.eq.s32.totalorder %s9, 1
    %p40 = por %p38, %p39
    %p41 = scmp.ne.s32.totalorder %s33, %s36
    %p42 = scmp.eq.s32.totalorder %s9, 0
    %p43 = por %p41, %p42
    %p44 = scmp.ne.s32.totalorder %s33, %s36
    %p45 = scmp.eq.s32.totalorder %s14, 1
    %p46 = por %p44, %p45
    %p47 = scmp.ne.s32.totalorder %s36, %s37
    %p48 = scmp.eq.s32.totalorder %s14, 0
    %p49 = por %p47, %p48
    %p50 = scmp.ne.s32.totalorder %s36, %s37
    %p51 = scmp.eq.s32.totalorder %s15, 1
    %p52 = por %p50, %p51
    %p54 = scmp.ne.s32.totalorder %s37, %s53
    %p55 = scmp.eq.s32.totalorder %s15, 0
    %p56 = por %p54, %p55
    %s58 = sadd.s32 %s57, 1
    %p61 = scmp.eq.s32.totalorder %s9, 1
    %p62 = scmp.ne.s32.totalorder %s57, %s59
    %p63 = scmp.eq.s32.totalorder %s9, 0
    %p64 = por %p62, %p63
    %p65 = scmp.ne.s32.totalorder %s57, %s59
    %p66 = scmp.eq.s32.totalorder %s14, 1
    %p67 = por %p65, %p66
    %p68 = scmp.ne.s32.totalorder %s59, %s60
    %p69 = scmp.eq.s32.totalorder %s14, 0
    %p70 = por %p68, %p69
    %p71 = scmp.ne.s32.totalorder %s59, %s60
    %p72 = scmp.eq.s32.totalorder %s15, 1
    %p73 = por %p71, %p72
    %p75 = scmp.ne.s32.totalorder %s60, %s74
    %p76 = scmp.eq.s32.totalorder %s15, 0
    %p77 = por %p75, %p76
    %s79 = sadd.s32 %s78, 1
    %p82 = scmp.eq.s32.totalorder %s9, 1
    %p83 = scmp.ne.s32.totalorder %s78, %s80
    %p84 = scmp.eq.s32.totalorder %s9, 0
    %p85 = por %p83, %p84
    %p86 = scmp.ne.s32.totalorder %s78, %s80
    %p87 = scmp.eq.s32.totalorder %s14, 1
    %p88 = por %p86, %p87
    %p89 = scmp.ne.s32.totalorder %s80, %s81
    %p90 = scmp.eq.s32.totalorder %s14, 0
    %p91 = por %p89, %p90
    %p92 = scmp.ne.s32.totalorder %s80, %s81
    %p93 = scmp.eq.s32.totalorder %s15, 1
    %p94 = por %p92, %p93
    %p96 = scmp.ne.s32.totalorder %s81, %s95
    %p97 = scmp.eq.s32.totalorder %s15, 0
    %p98 = por %p96, %p97
    %s99 = ssub.s32 %s16, %s28
    %s100 = ssub.s32 %s17, %s24
    %s101 = sor.u32 %s99, %s100
    %p102 = scmp.eq.s32.totalorder %s101, 0
    %s104 = sadd.s32 %s103, 1
    %s105 = scalar_select %p102, %s103, %s104
    %p108 = pneg %p102
    %p109 = scmp.eq.s32.totalorder %s9, 1
    %p110 = por %p108, %p109
    %p111 = scmp.ne.s32.totalorder %s103, %s106
    %p112 = scmp.eq.s32.totalorder %s9, 0
    %p113 = por %p111, %p112
    %p114 = scmp.ne.s32.totalorder %s103, %s106
    %p115 = scmp.eq.s32.totalorder %s14, 1
    %p116 = por %p114, %p115
    %p117 = scmp.ne.s32.totalorder %s106, %s107
    %p118 = scmp.eq.s32.totalorder %s14, 0
    %p119 = por %p117, %p118
    %p120 = scmp.ne.s32.totalorder %s106, %s107
    %p121 = scmp.eq.s32.totalorder %s15, 1
    %p122 = por %p120, %p121
    %p124 = scmp.ne.s32.totalorder %s107, %s123
    %p125 = scmp.eq.s32.totalorder %s15, 0
    %p126 = por %p124, %p125
    %p127 = scmp.le.s32.totalorder 1, %s9
    %p128 = scmp.lt.s32.totalorder %s9, 3
    %p129 = pnand %p127, %p128
    %p130 = pneg %p129
    // Predicated region
    $region9: #{structural_descriptor.15} parent=5 // pred_check
      _
    $region10: #{structural_descriptor.15} parent=5 // pred_check_branch
      %132 = sbr.rel (%p129) target = $region12
    $region11: #{structural_descriptor.15} parent=5 // pred_region
      %s133 = ssub.s32 %s9, 1
      // Predicated region
      $region13: #{structural_descriptor.15} parent=11 // pred_check
        %p134 = pneg %p70
      $region14: #{structural_descriptor.15} parent=11 // pred_check_branch
        %136 = sbr.rel (%p134) target = $region16
      $region15: #{structural_descriptor.15} parent=11 // pred_region
        _
      $region16: #{structural_descriptor.15} parent=11 // pred_fallthru
        _
      // Predicated region
      $region17: #{structural_descriptor.15} parent=11 // pred_check
        %p137 = pneg %p91
      $region18: #{structural_descriptor.15} parent=11 // pred_check_branch
        %139 = sbr.rel (%p137) target = $region20
      $region19: #{structural_descriptor.15} parent=11 // pred_region
        _
      $region20: #{structural_descriptor.15} parent=11 // pred_fallthru
        _
    $region12: #{structural_descriptor.15} parent=5 // pred_fallthru
      _
    %p140 = scmp.lt.s32.totalorder %s9, 2
    // Predicated region
    $region21: #{structural_descriptor.15} parent=5 // pred_check
      %p141 = pneg %p140
    $region22: #{structural_descriptor.15} parent=5 // pred_check_branch
      %143 = sbr.rel (%p141) target = $region24
    $region23: #{structural_descriptor.15} parent=5 // pred_region
      // Predicated region
      $region25: #{structural_descriptor.15} parent=23 // pred_check
        %p144 = pneg %p43
      $region26: #{structural_descriptor.15} parent=23 // pred_check_branch
        %146 = sbr.rel (%p144) target = $region28
      $region27: #{structural_descriptor.15} parent=23 // pred_region
        %p147 = scmp.lt.s32.totalorder %s16, 1
        %s148 = scalar_select %p147, %s16, 1
        %p149 = scmp.lt.s32.totalorder %s17, 0
        %s150 = scalar_select %p149, %s17, 0
        %s151 = sadd.s32 %s150, %s148
        %s152 = smul.addr %s151, 8
        %s153 = scalar_lea.vmem %s0, %s152
      $region28: #{structural_descriptor.15} parent=23 // pred_fallthru
        _
    $region24: #{structural_descriptor.15} parent=5 // pred_fallthru
      _
    %p154 = scmp.le.s32.totalorder 1, %s9
    %p155 = scmp.lt.s32.totalorder %s9, 3
    %p156 = pnand %p154, %p155
    %p157 = pneg %p156
    // Predicated region
    $region29: #{structural_descriptor.15} parent=5 // pred_check
      _
    $region30: #{structural_descriptor.15} parent=5 // pred_check_branch
      %159 = sbr.rel (%p156) target = $region32
    $region31: #{structural_descriptor.15} parent=5 // pred_region
      %s160 = ssub.s32 %s9, 1
      %p161 = scmp.lt.s32.totalorder %s18, 1
      %s162 = scalar_select %p161, %s18, 1
      %p163 = scmp.lt.s32.totalorder %s19, 0
      %s164 = scalar_select %p163, %s19, 0
      %s165 = sadd.s32 %s164, %s162
      %s166 = smul.addr %s165, 8
      %s167 = scalar_lea.vmem %s0, %s166
      %p168 = pneg %p49
      %p169 = pneg %p46
      %p170 = pneg %p70
      %p171 = pneg %p67
      %p172 = pneg %p91
      %p173 = pneg %p88
      %p174 = pneg %p119
      %p175 = pneg %p116
      %p176 = scmp.lt.s32.totalorder %s18, 1
      %s177 = scalar_select %p176, %s18, 1
      %p178 = scmp.lt.s32.totalorder %s19, 0
      %s179 = scalar_select %p178, %s19, 0
      %s180 = smul.addr %s177, 4
      %s181 = sadd.s32 %s179, %s180
      %s182 = smul.addr %s181, 8
      %s183 = scalar_lea.vmem %s3, %s182
      %p184 = scmp.lt.s32.totalorder %s18, 1
      %s185 = scalar_select %p184, %s18, 1
      %p186 = scmp.lt.s32.totalorder %s19, 0
      %s187 = scalar_select %p186, %s19, 0
      %s188 = sadd.s32 %s187, %s185
      %s189 = smul.addr %s188, 8
      %s190 = scalar_lea.vmem %s0, %s189
      %p191 = scmp.lt.s32.totalorder %s18, 1
      %s192 = scalar_select %p191, %s18, 1
      %p193 = scmp.lt.s32.totalorder %s19, 0
      %s194 = scalar_select %p193, %s19, 0
      %s195 = smul.addr %s192, 4
      %s196 = sadd.s32 %s194, %s195
      %s197 = smul.addr %s196, 8
      %s198 = scalar_lea.vmem %s3, %s197
      %v199 = vld [vmem:[%s1] sm:$0xff]
      %v200 = vld [vmem:[%s1 + $0x8] sm:$0xff]
      %v201 = vld [vmem:[%s1 + $0x10] sm:$0xff]
      %v202 = vld [vmem:[%s1 + $0x18] sm:$0xff]
      %v203 = vld [vmem:[%s190] sm:$0xff]
      %v204 = vld [vmem:[%s2] sm:$0xff]
      %v205 = vld [vmem:[%s2 + $0x8] sm:$0xff]
      %v206 = vld [vmem:[%s2 + $0x10] sm:$0xff]
      %v207 = vld [vmem:[%s2 + $0x18] sm:$0xff]
      %209 = vset.pattern.permute.xlu0 0
      %210 = vperm.xlu0 %209, %v204
      %v211 = vpop.permute.xlu0 %210
      %214 = vset.pattern.permute.xlu0 0
      %215 = vperm.xlu0 %214, %v205
      %v216 = vpop.permute.xlu0 %215
      %219 = vset.pattern.permute.xlu0 0
      %220 = vperm.xlu0 %219, %v206
      %v221 = vpop.permute.xlu0 %220
      %224 = vset.pattern.permute.xlu0 0
      %225 = vperm.xlu0 %224, %v207
      %v226 = vpop.permute.xlu0 %225
      %vm228 = vcmask 64512
      %v230 = vsel %vm228, %v199, 0
      %v233 = vsel %vm228, %v200, 0
      %v236 = vsel %vm228, %v201, 0
      %v239 = vsel %vm228, %v202, 0
      %241 = vmatpush.msra.mxu0 0.0
      %242 = vmatpush.msra.mxu0 0.0
      %243 = vmatpush.msra.mxu0 0.0
      %244 = vmatpush.msra.mxu0 0.0
      %245 = vmatpush.msra.mxu0 0.0
      %246 = vmatpush.msra.mxu0 0.0
      %247 = vmatpush.msra.mxu0 0.0
      %248 = vmatpush.msra.mxu0 0.0
      %249 = vmatpush.msra.mxu0 0.0
      %250 = vmatpush.msra.mxu0 0.0
      %251 = vmatpush.msra.mxu0 0.0
      %252 = vmatpush.msra.mxu0 0.0
      %253 = vmatpush.msra.mxu0 0.0
      %254 = vmatpush.msra.mxu0 0.0
      %255 = vmatpush.msra.mxu0 0.0
      %256 = vmatpush.msra.mxu0 %v203
      %257 = vmatmul.f32.gmra.mxu0 %v230
      %v258 = vpop.f32.mrf.mxu0
      %v259 = vadd.f32 %v211, %v258
      %260 = vmatmul.f32.gmra.mxu0 %v233
      %v261 = vpop.f32.mrf.mxu0
      %v262 = vadd.f32 %v216, %v261
      %263 = vmatmul.f32.gmra.mxu0 %v236
      %v264 = vpop.f32.mrf.mxu0
      %v265 = vadd.f32 %v221, %v264
      %266 = vmatmul.f32.gmra.mxu0 %v239
      %v267 = vpop.f32.mrf.mxu0
      %v268 = vadd.f32 %v226, %v267
      %269 = vdwg.mxu0
      %vm270 = vcmask 130048
      %271 = vst.msk [vmem:[%s198] sm:$0xff] %vm270, %v259
      %272 = vst.msk [vmem:[%s198 + $0x8] sm:$0xff] %vm270, %v262
      %273 = vst.msk [vmem:[%s198 + $0x10] sm:$0xff] %vm270, %v265
      %274 = vst.msk [vmem:[%s198 + $0x18] sm:$0xff] %vm270, %v268
      %p275 = scmp.lt.s32.totalorder %s18, 1
      %s276 = scalar_select %p275, %s18, 1
      %p277 = scmp.lt.s32.totalorder %s19, 0
      %s278 = scalar_select %p277, %s19, 0
      %s279 = smul.addr %s276, 4
      %s280 = sadd.s32 %s278, %s279
      %s281 = smul.addr %s280, 8
      %s282 = scalar_lea.vmem %s3, %s281
      // Predicated region
      $region33: #{structural_descriptor.15} parent=31 // pred_check
        %p283 = pneg %p116
      $region34: #{structural_descriptor.15} parent=31 // pred_check_branch
        %285 = sbr.rel (%p283) target = $region36
      $region35: #{structural_descriptor.15} parent=31 // pred_region
        _
      $region36: #{structural_descriptor.15} parent=31 // pred_fallthru
        _
    $region32: #{structural_descriptor.15} parent=5 // pred_fallthru
      _
    %p286 = scmp.le.s32.totalorder 2, %s9
    // Predicated region
    $region37: #{structural_descriptor.15} parent=5 // pred_check
      %p287 = pneg %p286
    $region38: #{structural_descriptor.15} parent=5 // pred_check_branch
      %289 = sbr.rel (%p287) target = $region40
    $region39: #{structural_descriptor.15} parent=5 // pred_region
      %s290 = ssub.s32 %s9, 2
      // Predicated region
      $region41: #{structural_descriptor.15} parent=39 // pred_check
        %p291 = pneg %p122
      $region42: #{structural_descriptor.15} parent=39 // pred_check_branch
        %293 = sbr.rel (%p291) target = $region44
      $region43: #{structural_descriptor.15} parent=39 // pred_region
        %p294 = scmp.lt.s32.totalorder %s20, 1
        %s295 = scalar_select %p294, %s20, 1
        %p296 = scmp.lt.s32.totalorder %s21, 0
        %s297 = scalar_select %p296, %s21, 0
        %s298 = smul.addr %s295, 4
        %s299 = sadd.s32 %s297, %s298
        %s300 = smul.addr %s299, 8
        %s301 = scalar_lea.vmem %s3, %s300
      $region44: #{structural_descriptor.15} parent=39 // pred_fallthru
        _
    $region40: #{structural_descriptor.15} parent=5 // pred_fallthru
      _
  $region6: #{structural_descriptor.15} parent=0 // loop_footer
    %s13 = sadd.s32 1, %s9
  $region7: #{structural_descriptor.15} parent=0 // loop_footer_branch
    %8 = sbr.rel target = $region3
  $region8: #{structural_descriptor.15} parent=0 // loop_exit
    _

// kernel: structural_descriptor.18
$region0: #{structural_descriptor.18}
  #allocation0 [shape = 'u32[]', space=smem, size = 0x4, offset = 0x4, fixed_abs, tag = 'smem constant byte address 0x4 - core index']
  #allocation1 [shape = 'u32[72,128]{1,0:T(1,128)}', space=vmem, size = 0x9000, scoped, tag = 'internal scratch']
  %s0 = inlined_call_operand.vmem [shape: f32[2,64,16], index: 0, kind: input, shape index: {}]
  %s1 = inlined_call_operand.vmem [shape: f32[64,64], index: 1, kind: input, shape index: {}]
  %s2 = inlined_call_operand.vmem [shape: f32[64,1], index: 2, kind: input, shape index: {}]
  %s3 = inlined_call_operand.vmem [shape: f32[2,64,16], index: 3, kind: output, shape index: {}]
  %s4 = sld [smem:[#allocation0]]
  $region45: #{structural_descriptor.18} parent=0
    _
  %s6 = ssub.s32 1, %s4
  %s7 = scalar_select 0, %s6, %s4
  loop: start=0, step=1, limit=4
  $region2: #{structural_descriptor.18} parent=0 // loop_pre_header
    _
  $region3: #{structural_descriptor.18} parent=0 // loop_header
    %s9 = sphi 0, %s13
    %p10 = scmp.ge.s32.totalorder %s9, 4
    %s16 = sphi 0, %s28
    %s17 = sphi 0, %s24
    %s18 = sphi 0, %s16
    %s19 = sphi 0, %s17
    %s20 = sphi 0, %s18
    %s21 = sphi 0, %s19
    %s33 = sphi 0, %s35
    %s36 = sphi 0, %s33
    %s37 = sphi 0, %s36
    %s53 = sphi 0, %s37
    %s57 = sphi 0, %s57
    %s59 = sphi 0, %s57
    %s60 = sphi 0, %s59
    %s74 = sphi 0, %s60
    %s78 = sphi 0, %s78
    %s80 = sphi 0, %s78
    %s81 = sphi 0, %s80
    %s95 = sphi 0, %s81
    %s103 = sphi 0, %s105
    %s106 = sphi 0, %s103
    %s107 = sphi 0, %s106
    %s123 = sphi 0, %s107
  $region4: #{structural_descriptor.18} parent=0 // loop_header_branch
    %12 = sbr.rel (%p10) target = $region8
  $region5: #{structural_descriptor.18} parent=0 // loop_body
    %s14 = ssub.s32 %s9, 1
    %s15 = ssub.s32 %s9, 2
    %s22 = sadd.s32 1, %s17
    %p23 = scmp.ge.s32.totalorder %s22, 1
    %s24 = scalar_select %p23, 0, %s22
    %s25 = sadd.s32 1, %s16
    %s26 = scalar_select %p23, %s25, %s16
    %p27 = scmp.ge.s32.totalorder %s26, 2
    %s28 = scalar_select %p27, 0, %s26
    %s29 = ssub.s32 %s16, %s28
    %s30 = ssub.s32 %s17, %s24
    %s31 = sor.u32 %s29, %s30
    %p32 = scmp.eq.s32.totalorder %s31, 0
    %s34 = sadd.s32 %s33, 1
    %s35 = scalar_select %p32, %s33, %s34
    %p38 = pneg %p32
    %p39 = scmp.eq.s32.totalorder %s9, 1
    %p40 = por %p38, %p39
    %p41 = scmp.ne.s32.totalorder %s33, %s36
    %p42 = scmp.eq.s32.totalorder %s9, 0
    %p43 = por %p41, %p42
    %p44 = scmp.ne.s32.totalorder %s33, %s36
    %p45 = scmp.eq.s32.totalorder %s14, 1
    %p46 = por %p44, %p45
    %p47 = scmp.ne.s32.totalorder %s36, %s37
    %p48 = scmp.eq.s32.totalorder %s14, 0
    %p49 = por %p47, %p48
    %p50 = scmp.ne.s32.totalorder %s36, %s37
    %p51 = scmp.eq.s32.totalorder %s15, 1
    %p52 = por %p50, %p51
    %p54 = scmp.ne.s32.totalorder %s37, %s53
    %p55 = scmp.eq.s32.totalorder %s15, 0
    %p56 = por %p54, %p55
    %s58 = sadd.s32 %s57, 1
    %p61 = scmp.eq.s32.totalorder %s9, 1
    %p62 = scmp.ne.s32.totalorder %s57, %s59
    %p63 = scmp.eq.s32.totalorder %s9, 0
    %p64 = por %p62, %p63
    %p65 = scmp.ne.s32.totalorder %s57, %s59
    %p66 = scmp.eq.s32.totalorder %s14, 1
    %p67 = por %p65, %p66
    %p68 = scmp.ne.s32.totalorder %s59, %s60
    %p69 = scmp.eq.s32.totalorder %s14, 0
    %p70 = por %p68, %p69
    %p71 = scmp.ne.s32.totalorder %s59, %s60
    %p72 = scmp.eq.s32.totalorder %s15, 1
    %p73 = por %p71, %p72
    %p75 = scmp.ne.s32.totalorder %s60, %s74
    %p76 = scmp.eq.s32.totalorder %s15, 0
    %p77 = por %p75, %p76
    %s79 = sadd.s32 %s78, 1
    %p82 = scmp.eq.s32.totalorder %s9, 1
    %p83 = scmp.ne.s32.totalorder %s78, %s80
    %p84 = scmp.eq.s32.totalorder %s9, 0
    %p85 = por %p83, %p84
    %p86 = scmp.ne.s32.totalorder %s78, %s80
    %p87 = scmp.eq.s32.totalorder %s14, 1
    %p88 = por %p86, %p87
    %p89 = scmp.ne.s32.totalorder %s80, %s81
    %p90 = scmp.eq.s32.totalorder %s14, 0
    %p91 = por %p89, %p90
    %p92 = scmp.ne.s32.totalorder %s80, %s81
    %p93 = scmp.eq.s32.totalorder %s15, 1
    %p94 = por %p92, %p93
    %p96 = scmp.ne.s32.totalorder %s81, %s95
    %p97 = scmp.eq.s32.totalorder %s15, 0
    %p98 = por %p96, %p97
    %s99 = ssub.s32 %s16, %s28
    %s100 = ssub.s32 %s17, %s24
    %s101 = sor.u32 %s99, %s100
    %p102 = scmp.eq.s32.totalorder %s101, 0
    %s104 = sadd.s32 %s103, 1
    %s105 = scalar_select %p102, %s103, %s104
    %p108 = pneg %p102
    %p109 = scmp.eq.s32.totalorder %s9, 1
    %p110 = por %p108, %p109
    %p111 = scmp.ne.s32.totalorder %s103, %s106
    %p112 = scmp.eq.s32.totalorder %s9, 0
    %p113 = por %p111, %p112
    %p114 = scmp.ne.s32.totalorder %s103, %s106
    %p115 = scmp.eq.s32.totalorder %s14, 1
    %p116 = por %p114, %p115
    %p117 = scmp.ne.s32.totalorder %s106, %s107
    %p118 = scmp.eq.s32.totalorder %s14, 0
    %p119 = por %p117, %p118
    %p120 = scmp.ne.s32.totalorder %s106, %s107
    %p121 = scmp.eq.s32.totalorder %s15, 1
    %p122 = por %p120, %p121
    %p124 = scmp.ne.s32.totalorder %s107, %s123
    %p125 = scmp.eq.s32.totalorder %s15, 0
    %p126 = por %p124, %p125
    %p127 = scmp.le.s32.totalorder 1, %s9
    %p128 = scmp.lt.s32.totalorder %s9, 3
    %p129 = pnand %p127, %p128
    %p130 = pneg %p129
    // Predicated region
    $region9: #{structural_descriptor.18} parent=5 // pred_check
      _
    $region10: #{structural_descriptor.18} parent=5 // pred_check_branch
      %132 = sbr.rel (%p129) target = $region12
    $region11: #{structural_descriptor.18} parent=5 // pred_region
      %s133 = ssub.s32 %s9, 1
      // Predicated region
      $region13: #{structural_descriptor.18} parent=11 // pred_check
        %p134 = pneg %p70
      $region14: #{structural_descriptor.18} parent=11 // pred_check_branch
        %136 = sbr.rel (%p134) target = $region16
      $region15: #{structural_descriptor.18} parent=11 // pred_region
        _
      $region16: #{structural_descriptor.18} parent=11 // pred_fallthru
        _
      // Predicated region
      $region17: #{structural_descriptor.18} parent=11 // pred_check
        %p137 = pneg %p91
      $region18: #{structural_descriptor.18} parent=11 // pred_check_branch
        %139 = sbr.rel (%p137) target = $region20
      $region19: #{structural_descriptor.18} parent=11 // pred_region
        _
      $region20: #{structural_descriptor.18} parent=11 // pred_fallthru
        _
    $region12: #{structural_descriptor.18} parent=5 // pred_fallthru
      _
    %p140 = scmp.lt.s32.totalorder %s9, 2
    // Predicated region
    $region21: #{structural_descriptor.18} parent=5 // pred_check
      %p141 = pneg %p140
    $region22: #{structural_descriptor.18} parent=5 // pred_check_branch
      %143 = sbr.rel (%p141) target = $region24
    $region23: #{structural_descriptor.18} parent=5 // pred_region
      // Predicated region
      $region25: #{structural_descriptor.18} parent=23 // pred_check
        %p144 = pneg %p43
      $region26: #{structural_descriptor.18} parent=23 // pred_check_branch
        %146 = sbr.rel (%p144) target = $region28
      $region27: #{structural_descriptor.18} parent=23 // pred_region
        %p147 = scmp.lt.s32.totalorder %s16, 1
        %s148 = scalar_select %p147, %s16, 1
        %p149 = scmp.lt.s32.totalorder %s17, 0
        %s150 = scalar_select %p149, %s17, 0
        %s151 = smul.addr %s148, 8
        %s152 = sadd.s32 %s150, %s151
        %s153 = smul.addr %s152, 8
        %s154 = scalar_lea.vmem %s0, %s153
      $region28: #{structural_descriptor.18} parent=23 // pred_fallthru
        _
    $region24: #{structural_descriptor.18} parent=5 // pred_fallthru
      _
    %p155 = scmp.le.s32.totalorder 1, %s9
    %p156 = scmp.lt.s32.totalorder %s9, 3
    %p157 = pnand %p155, %p156
    %p158 = pneg %p157
    // Predicated region
    $region29: #{structural_descriptor.18} parent=5 // pred_check
      _
    $region30: #{structural_descriptor.18} parent=5 // pred_check_branch
      %160 = sbr.rel (%p157) target = $region32
    $region31: #{structural_descriptor.18} parent=5 // pred_region
      %s161 = ssub.s32 %s9, 1
      %p162 = scmp.lt.s32.totalorder %s18, 1
      %s163 = scalar_select %p162, %s18, 1
      %p164 = scmp.lt.s32.totalorder %s19, 0
      %s165 = scalar_select %p164, %s19, 0
      %s166 = smul.addr %s163, 8
      %s167 = sadd.s32 %s165, %s166
      %s168 = smul.addr %s167, 8
      %s169 = scalar_lea.vmem %s0, %s168
      %p170 = pneg %p49
      %p171 = pneg %p46
      %p172 = pneg %p70
      %p173 = pneg %p67
      %p174 = pneg %p91
      %p175 = pneg %p88
      %p176 = pneg %p119
      %p177 = pneg %p116
      %p178 = scmp.lt.s32.totalorder %s18, 1
      %s179 = scalar_select %p178, %s18, 1
      %p180 = scmp.lt.s32.totalorder %s19, 0
      %s181 = scalar_select %p180, %s19, 0
      %s182 = smul.addr %s179, 8
      %s183 = sadd.s32 %s181, %s182
      %s184 = smul.addr %s183, 8
      %s185 = scalar_lea.vmem %s3, %s184
      %p186 = scmp.lt.s32.totalorder %s18, 1
      %s187 = scalar_select %p186, %s18, 1
      %p188 = scmp.lt.s32.totalorder %s19, 0
      %s189 = scalar_select %p188, %s19, 0
      %s190 = smul.addr %s187, 8
      %s191 = sadd.s32 %s189, %s190
      %s192 = smul.addr %s191, 8
      %s193 = scalar_lea.vmem %s0, %s192
      %p194 = scmp.lt.s32.totalorder %s18, 1
      %s195 = scalar_select %p194, %s18, 1
      %p196 = scmp.lt.s32.totalorder %s19, 0
      %s197 = scalar_select %p196, %s19, 0
      %s198 = smul.addr %s195, 8
      %s199 = sadd.s32 %s197, %s198
      %s200 = smul.addr %s199, 8
      %s201 = scalar_lea.vmem %s3, %s200
      %v202 = vld [vmem:[%s1] sm:$0xff]
      %v203 = vld [vmem:[%s1 + $0x8] sm:$0xff]
      %v204 = vld [vmem:[%s1 + $0x10] sm:$0xff]
      %v205 = vld [vmem:[%s1 + $0x18] sm:$0xff]
      %v206 = vld [vmem:[%s1 + $0x20] sm:$0xff]
      %v207 = vld [vmem:[%s1 + $0x28] sm:$0xff]
      %v208 = vld [vmem:[%s1 + $0x30] sm:$0xff]
      %v209 = vld [vmem:[%s1 + $0x38] sm:$0xff]
      %v210 = vld [vmem:[%s193] sm:$0xff]
      %v211 = vld [vmem:[%s193 + $0x8] sm:$0xff]
      %v212 = vld [vmem:[%s193 + $0x10] sm:$0xff]
      %v213 = vld [vmem:[%s193 + $0x18] sm:$0xff]
      %v214 = vld [vmem:[%s193 + $0x20] sm:$0xff]
      %v215 = vld [vmem:[%s193 + $0x28] sm:$0xff]
      %v216 = vld [vmem:[%s193 + $0x30] sm:$0xff]
      %v217 = vld [vmem:[%s193 + $0x38] sm:$0xff]
      %v218 = vld [vmem:[%s2] sm:$0xff]
      %v219 = vld [vmem:[%s2 + $0x8] sm:$0xff]
      %v220 = vld [vmem:[%s2 + $0x10] sm:$0xff]
      %v221 = vld [vmem:[%s2 + $0x18] sm:$0xff]
      %v222 = vld [vmem:[%s2 + $0x20] sm:$0xff]
      %v223 = vld [vmem:[%s2 + $0x28] sm:$0xff]
      %v224 = vld [vmem:[%s2 + $0x30] sm:$0xff]
      %v225 = vld [vmem:[%s2 + $0x38] sm:$0xff]
      %227 = vset.pattern.permute.xlu0 0
      %228 = vperm.xlu0 %227, %v218
      %v229 = vpop.permute.xlu0 %228
      %232 = vset.pattern.permute.xlu0 0
      %233 = vperm.xlu0 %232, %v219
      %v234 = vpop.permute.xlu0 %233
      %237 = vset.pattern.permute.xlu0 0
      %238 = vperm.xlu0 %237, %v220
      %v239 = vpop.permute.xlu0 %238
      %242 = vset.pattern.permute.xlu0 0
      %243 = vperm.xlu0 %242, %v221
      %v244 = vpop.permute.xlu0 %243
      %247 = vset.pattern.permute.xlu0 0
      %248 = vperm.xlu0 %247, %v222
      %v249 = vpop.permute.xlu0 %248
      %252 = vset.pattern.permute.xlu0 0
      %253 = vperm.xlu0 %252, %v223
      %v254 = vpop.permute.xlu0 %253
      %257 = vset.pattern.permute.xlu0 0
      %258 = vperm.xlu0 %257, %v224
      %v259 = vpop.permute.xlu0 %258
      %262 = vset.pattern.permute.xlu0 0
      %263 = vperm.xlu0 %262, %v225
      %v264 = vpop.permute.xlu0 %263
      %vm266 = vcmask 523264
      %v268 = vsel %vm266, %v202, 0
      %v271 = vsel %vm266, %v203, 0
      %v274 = vsel %vm266, %v204, 0
      %v277 = vsel %vm266, %v205, 0
      %v280 = vsel %vm266, %v206, 0
      %v283 = vsel %vm266, %v207, 0
      %v286 = vsel %vm266, %v208, 0
      %v289 = vsel %vm266, %v209, 0
      %291 = vmatpush.msra.mxu0 0.0
      %292 = vmatpush.msra.mxu0 0.0
      %293 = vmatpush.msra.mxu0 0.0
      %294 = vmatpush.msra.mxu0 0.0
      %295 = vmatpush.msra.mxu0 0.0
      %296 = vmatpush.msra.mxu0 0.0
      %297 = vmatpush.msra.mxu0 0.0
      %298 = vmatpush.msra.mxu0 0.0
      %299 = vmatpush.msra.mxu0 %v217
      %300 = vmatpush.msra.mxu0 %v216
      %301 = vmatpush.msra.mxu0 %v215
      %302 = vmatpush.msra.mxu0 %v214
      %303 = vmatpush.msra.mxu0 %v213
      %304 = vmatpush.msra.mxu0 %v212
      %305 = vmatpush.msra.mxu0 %v211
      %306 = vmatpush.msra.mxu0 %v210
      %307 = vmatmul.f32.gmra.mxu0 %v268
      %v308 = vpop.f32.mrf.mxu0
      %v309 = vadd.f32 %v229, %v308
      %310 = vmatmul.f32.gmra.mxu0 %v271
      %v311 = vpop.f32.mrf.mxu0
      %v312 = vadd.f32 %v234, %v311
      %313 = vmatmul.f32.gmra.mxu0 %v274
      %v314 = vpop.f32.mrf.mxu0
      %v315 = vadd.f32 %v239, %v314
      %316 = vmatmul.f32.gmra.mxu0 %v277
      %v317 = vpop.f32.mrf.mxu0
      %v318 = vadd.f32 %v244, %v317
      %319 = vmatmul.f32.gmra.mxu0 %v280
      %v320 = vpop.f32.mrf.mxu0
      %v321 = vadd.f32 %v249, %v320
      %322 = vmatmul.f32.gmra.mxu0 %v283
      %v323 = vpop.f32.mrf.mxu0
      %v324 = vadd.f32 %v254, %v323
      %325 = vmatmul.f32.gmra.mxu0 %v286
      %v326 = vpop.f32.mrf.mxu0
      %v327 = vadd.f32 %v259, %v326
      %328 = vmatmul.f32.gmra.mxu0 %v289
      %v329 = vpop.f32.mrf.mxu0
      %v330 = vadd.f32 %v264, %v329
      %331 = vdwg.mxu0
      %vm332 = vcmask 130048
      %333 = vst.msk [vmem:[%s201] sm:$0xff] %vm332, %v309
      %334 = vst.msk [vmem:[%s201 + $0x8] sm:$0xff] %vm332, %v312
      %335 = vst.msk [vmem:[%s201 + $0x10] sm:$0xff] %vm332, %v315
      %336 = vst.msk [vmem:[%s201 + $0x18] sm:$0xff] %vm332, %v318
      %337 = vst.msk [vmem:[%s201 + $0x20] sm:$0xff] %vm332, %v321
      %338 = vst.msk [vmem:[%s201 + $0x28] sm:$0xff] %vm332, %v324
      %339 = vst.msk [vmem:[%s201 + $0x30] sm:$0xff] %vm332, %v327
      %340 = vst.msk [vmem:[%s201 + $0x38] sm:$0xff] %vm332, %v330
      %p341 = scmp.lt.s32.totalorder %s18, 1
      %s342 = scalar_select %p341, %s18, 1
      %p343 = scmp.lt.s32.totalorder %s19, 0
      %s344 = scalar_select %p343, %s19, 0
      %s345 = smul.addr %s342, 8
      %s346 = sadd.s32 %s344, %s345
      %s347 = smul.addr %s346, 8
      %s348 = scalar_lea.vmem %s3, %s347
      // Predicated region
      $region33: #{structural_descriptor.18} parent=31 // pred_check
        %p349 = pneg %p116
      $region34: #{structural_descriptor.18} parent=31 // pred_check_branch
        %351 = sbr.rel (%p349) target = $region36
      $region35: #{structural_descriptor.18} parent=31 // pred_region
        _
      $region36: #{structural_descriptor.18} parent=31 // pred_fallthru
        _
    $region32: #{structural_descriptor.18} parent=5 // pred_fallthru
      _
    %p352 = scmp.le.s32.totalorder 2, %s9
    // Predicated region
    $region37: #{structural_descriptor.18} parent=5 // pred_check
      %p353 = pneg %p352
    $region38: #{structural_descriptor.18} parent=5 // pred_check_branch
      %355 = sbr.rel (%p353) target = $region40
    $region39: #{structural_descriptor.18} parent=5 // pred_region
      %s356 = ssub.s32 %s9, 2
      // Predicated region
      $region41: #{structural_descriptor.18} parent=39 // pred_check
        %p357 = pneg %p122
      $region42: #{structural_descriptor.18} parent=39 // pred_check_branch
        %359 = sbr.rel (%p357) target = $region44
      $region43: #{structural_descriptor.18} parent=39 // pred_region
        %p360 = scmp.lt.s32.totalorder %s20, 1
        %s361 = scalar_select %p360, %s20, 1
        %p362 = scmp.lt.s32.totalorder %s21, 0
        %s363 = scalar_select %p362, %s21, 0
        %s364 = smul.addr %s361, 8
        %s365 = sadd.s32 %s363, %s364
        %s366 = smul.addr %s365, 8
        %s367 = scalar_lea.vmem %s3, %s366
      $region44: #{structural_descriptor.18} parent=39 // pred_fallthru
        _
    $region40: #{structural_descriptor.18} parent=5 // pred_fallthru
      _
  $region6: #{structural_descriptor.18} parent=0 // loop_footer
    %s13 = sadd.s32 1, %s9
  $region7: #{structural_descriptor.18} parent=0 // loop_footer_branch
    %8 = sbr.rel target = $region3
  $region8: #{structural_descriptor.18} parent=0 // loop_exit
    _

// kernel: structural_descriptor.20
$region0: #{structural_descriptor.20}
  #allocation0 [shape = 'u32[]', space=smem, size = 0x4, offset = 0x4, fixed_abs, tag = 'smem constant byte address 0x4 - core index']
  #allocation1 [shape = 'u32[72,128]{1,0:T(1,128)}', space=vmem, size = 0x9000, scoped, tag = 'internal scratch']
  %s0 = inlined_call_operand.vmem [shape: f32[2,136,16], index: 0, kind: input, shape index: {}]
  %s1 = inlined_call_operand.vmem [shape: f32[136,136], index: 1, kind: input, shape index: {}]
  %s2 = inlined_call_operand.vmem [shape: f32[136,1], index: 2, kind: input, shape index: {}]
  %s3 = inlined_call_operand.vmem [shape: f32[2,136,16], index: 3, kind: output, shape index: {}]
  %s4 = sld [smem:[#allocation0]]
  $region45: #{structural_descriptor.20} parent=0
    _
  %s6 = ssub.s32 1, %s4
  %s7 = scalar_select 0, %s6, %s4
  loop: start=0, step=1, limit=4
  $region2: #{structural_descriptor.20} parent=0 // loop_pre_header
    _
  $region3: #{structural_descriptor.20} parent=0 // loop_header
    %s9 = sphi 0, %s13
    %p10 = scmp.ge.s32.totalorder %s9, 4
    %s16 = sphi 0, %s28
    %s17 = sphi 0, %s24
    %s18 = sphi 0, %s16
    %s19 = sphi 0, %s17
    %s20 = sphi 0, %s18
    %s21 = sphi 0, %s19
    %s33 = sphi 0, %s35
    %s36 = sphi 0, %s33
    %s37 = sphi 0, %s36
    %s53 = sphi 0, %s37
    %s57 = sphi 0, %s57
    %s59 = sphi 0, %s57
    %s60 = sphi 0, %s59
    %s74 = sphi 0, %s60
    %s78 = sphi 0, %s78
    %s80 = sphi 0, %s78
    %s81 = sphi 0, %s80
    %s95 = sphi 0, %s81
    %s103 = sphi 0, %s105
    %s106 = sphi 0, %s103
    %s107 = sphi 0, %s106
    %s123 = sphi 0, %s107
  $region4: #{structural_descriptor.20} parent=0 // loop_header_branch
    %12 = sbr.rel (%p10) target = $region8
  $region5: #{structural_descriptor.20} parent=0 // loop_body
    %s14 = ssub.s32 %s9, 1
    %s15 = ssub.s32 %s9, 2
    %s22 = sadd.s32 1, %s17
    %p23 = scmp.ge.s32.totalorder %s22, 1
    %s24 = scalar_select %p23, 0, %s22
    %s25 = sadd.s32 1, %s16
    %s26 = scalar_select %p23, %s25, %s16
    %p27 = scmp.ge.s32.totalorder %s26, 2
    %s28 = scalar_select %p27, 0, %s26
    %s29 = ssub.s32 %s16, %s28
    %s30 = ssub.s32 %s17, %s24
    %s31 = sor.u32 %s29, %s30
    %p32 = scmp.eq.s32.totalorder %s31, 0
    %s34 = sadd.s32 %s33, 1
    %s35 = scalar_select %p32, %s33, %s34
    %p38 = pneg %p32
    %p39 = scmp.eq.s32.totalorder %s9, 1
    %p40 = por %p38, %p39
    %p41 = scmp.ne.s32.totalorder %s33, %s36
    %p42 = scmp.eq.s32.totalorder %s9, 0
    %p43 = por %p41, %p42
    %p44 = scmp.ne.s32.totalorder %s33, %s36
    %p45 = scmp.eq.s32.totalorder %s14, 1
    %p46 = por %p44, %p45
    %p47 = scmp.ne.s32.totalorder %s36, %s37
    %p48 = scmp.eq.s32.totalorder %s14, 0
    %p49 = por %p47, %p48
    %p50 = scmp.ne.s32.totalorder %s36, %s37
    %p51 = scmp.eq.s32.totalorder %s15, 1
    %p52 = por %p50, %p51
    %p54 = scmp.ne.s32.totalorder %s37, %s53
    %p55 = scmp.eq.s32.totalorder %s15, 0
    %p56 = por %p54, %p55
    %s58 = sadd.s32 %s57, 1
    %p61 = scmp.eq.s32.totalorder %s9, 1
    %p62 = scmp.ne.s32.totalorder %s57, %s59
    %p63 = scmp.eq.s32.totalorder %s9, 0
    %p64 = por %p62, %p63
    %p65 = scmp.ne.s32.totalorder %s57, %s59
    %p66 = scmp.eq.s32.totalorder %s14, 1
    %p67 = por %p65, %p66
    %p68 = scmp.ne.s32.totalorder %s59, %s60
    %p69 = scmp.eq.s32.totalorder %s14, 0
    %p70 = por %p68, %p69
    %p71 = scmp.ne.s32.totalorder %s59, %s60
    %p72 = scmp.eq.s32.totalorder %s15, 1
    %p73 = por %p71, %p72
    %p75 = scmp.ne.s32.totalorder %s60, %s74
    %p76 = scmp.eq.s32.totalorder %s15, 0
    %p77 = por %p75, %p76
    %s79 = sadd.s32 %s78, 1
    %p82 = scmp.eq.s32.totalorder %s9, 1
    %p83 = scmp.ne.s32.totalorder %s78, %s80
    %p84 = scmp.eq.s32.totalorder %s9, 0
    %p85 = por %p83, %p84
    %p86 = scmp.ne.s32.totalorder %s78, %s80
    %p87 = scmp.eq.s32.totalorder %s14, 1
    %p88 = por %p86, %p87
    %p89 = scmp.ne.s32.totalorder %s80, %s81
    %p90 = scmp.eq.s32.totalorder %s14, 0
    %p91 = por %p89, %p90
    %p92 = scmp.ne.s32.totalorder %s80, %s81
    %p93 = scmp.eq.s32.totalorder %s15, 1
    %p94 = por %p92, %p93
    %p96 = scmp.ne.s32.totalorder %s81, %s95
    %p97 = scmp.eq.s32.totalorder %s15, 0
    %p98 = por %p96, %p97
    %s99 = ssub.s32 %s16, %s28
    %s100 = ssub.s32 %s17, %s24
    %s101 = sor.u32 %s99, %s100
    %p102 = scmp.eq.s32.totalorder %s101, 0
    %s104 = sadd.s32 %s103, 1
    %s105 = scalar_select %p102, %s103, %s104
    %p108 = pneg %p102
    %p109 = scmp.eq.s32.totalorder %s9, 1
    %p110 = por %p108, %p109
    %p111 = scmp.ne.s32.totalorder %s103, %s106
    %p112 = scmp.eq.s32.totalorder %s9, 0
    %p113 = por %p111, %p112
    %p114 = scmp.ne.s32.totalorder %s103, %s106
    %p115 = scmp.eq.s32.totalorder %s14, 1
    %p116 = por %p114, %p115
    %p117 = scmp.ne.s32.totalorder %s106, %s107
    %p118 = scmp.eq.s32.totalorder %s14, 0
    %p119 = por %p117, %p118
    %p120 = scmp.ne.s32.totalorder %s106, %s107
    %p121 = scmp.eq.s32.totalorder %s15, 1
    %p122 = por %p120, %p121
    %p124 = scmp.ne.s32.totalorder %s107, %s123
    %p125 = scmp.eq.s32.totalorder %s15, 0
    %p126 = por %p124, %p125
    %p127 = scmp.le.s32.totalorder 1, %s9
    %p128 = scmp.lt.s32.totalorder %s9, 3
    %p129 = pnand %p127, %p128
    %p130 = pneg %p129
    // Predicated region
    $region9: #{structural_descriptor.20} parent=5 // pred_check
      _
    $region10: #{structural_descriptor.20} parent=5 // pred_check_branch
      %132 = sbr.rel (%p129) target = $region12
    $region11: #{structural_descriptor.20} parent=5 // pred_region
      %s133 = ssub.s32 %s9, 1
      // Predicated region
      $region13: #{structural_descriptor.20} parent=11 // pred_check
        %p134 = pneg %p70
      $region14: #{structural_descriptor.20} parent=11 // pred_check_branch
        %136 = sbr.rel (%p134) target = $region16
      $region15: #{structural_descriptor.20} parent=11 // pred_region
        _
      $region16: #{structural_descriptor.20} parent=11 // pred_fallthru
        _
      // Predicated region
      $region17: #{structural_descriptor.20} parent=11 // pred_check
        %p137 = pneg %p91
      $region18: #{structural_descriptor.20} parent=11 // pred_check_branch
        %139 = sbr.rel (%p137) target = $region20
      $region19: #{structural_descriptor.20} parent=11 // pred_region
        _
      $region20: #{structural_descriptor.20} parent=11 // pred_fallthru
        _
    $region12: #{structural_descriptor.20} parent=5 // pred_fallthru
      _
    %p140 = scmp.lt.s32.totalorder %s9, 2
    // Predicated region
    $region21: #{structural_descriptor.20} parent=5 // pred_check
      %p141 = pneg %p140
    $region22: #{structural_descriptor.20} parent=5 // pred_check_branch
      %143 = sbr.rel (%p141) target = $region24
    $region23: #{structural_descriptor.20} parent=5 // pred_region
      // Predicated region
      $region25: #{structural_descriptor.20} parent=23 // pred_check
        %p144 = pneg %p43
      $region26: #{structural_descriptor.20} parent=23 // pred_check_branch
        %146 = sbr.rel (%p144) target = $region28
      $region27: #{structural_descriptor.20} parent=23 // pred_region
        %p147 = scmp.lt.s32.totalorder %s16, 1
        %s148 = scalar_select %p147, %s16, 1
        %p149 = scmp.lt.s32.totalorder %s17, 0
        %s150 = scalar_select %p149, %s17, 0
        %s151 = smul.addr %s148, 17
        %s152 = sadd.s32 %s150, %s151
        %s153 = smul.addr %s152, 8
        %s154 = scalar_lea.vmem %s0, %s153
      $region28: #{structural_descriptor.20} parent=23 // pred_fallthru
        _
    $region24: #{structural_descriptor.20} parent=5 // pred_fallthru
      _
    %p155 = scmp.le.s32.totalorder 1, %s9
    %p156 = scmp.lt.s32.totalorder %s9, 3
    %p157 = pnand %p155, %p156
    %p158 = pneg %p157
    // Predicated region
    $region29: #{structural_descriptor.20} parent=5 // pred_check
      _
    $region30: #{structural_descriptor.20} parent=5 // pred_check_branch
      %160 = sbr.rel (%p157) target = $region32
    $region31: #{structural_descriptor.20} parent=5 // pred_region
      %s161 = ssub.s32 %s9, 1
      %p162 = scmp.lt.s32.totalorder %s18, 1
      %s163 = scalar_select %p162, %s18, 1
      %p164 = scmp.lt.s32.totalorder %s19, 0
      %s165 = scalar_select %p164, %s19, 0
      %s166 = smul.addr %s163, 17
      %s167 = sadd.s32 %s165, %s166
      %s168 = smul.addr %s167, 8
      %s169 = scalar_lea.vmem %s0, %s168
      %p170 = pneg %p49
      %p171 = pneg %p46
      %p172 = pneg %p70
      %p173 = pneg %p67
      %p174 = pneg %p91
      %p175 = pneg %p88
      %p176 = pneg %p119
      %p177 = pneg %p116
      %p178 = scmp.lt.s32.totalorder %s18, 1
      %s179 = scalar_select %p178, %s18, 1
      %p180 = scmp.lt.s32.totalorder %s19, 0
      %s181 = scalar_select %p180, %s19, 0
      %s182 = smul.addr %s179, 17
      %s183 = sadd.s32 %s181, %s182
      %s184 = smul.addr %s183, 8
      %s185 = scalar_lea.vmem %s3, %s184
      %p186 = scmp.lt.s32.totalorder %s18, 1
      %s187 = scalar_select %p186, %s18, 1
      %p188 = scmp.lt.s32.totalorder %s19, 0
      %s189 = scalar_select %p188, %s19, 0
      %s190 = smul.addr %s187, 17
      %s191 = sadd.s32 %s189, %s190
      %s192 = smul.addr %s191, 8
      %s193 = scalar_lea.vmem %s0, %s192
      %p194 = scmp.lt.s32.totalorder %s18, 1
      %s195 = scalar_select %p194, %s18, 1
      %p196 = scmp.lt.s32.totalorder %s19, 0
      %s197 = scalar_select %p196, %s19, 0
      %s198 = smul.addr %s195, 17
      %s199 = sadd.s32 %s197, %s198
      %s200 = smul.addr %s199, 8
      %s201 = scalar_lea.vmem %s3, %s200
      %v202 = vld [vmem:[%s1] sm:$0xff]
      %v203 = vld [vmem:[%s1 + $0x8] sm:$0xff]
      %v204 = vld [vmem:[%s1 + $0x10] sm:$0xff]
      %v205 = vld [vmem:[%s1 + $0x18] sm:$0xff]
      %v206 = vld [vmem:[%s1 + $0x20] sm:$0xff]
      %v207 = vld [vmem:[%s1 + $0x28] sm:$0xff]
      %v208 = vld [vmem:[%s1 + $0x30] sm:$0xff]
      %v209 = vld [vmem:[%s1 + $0x38] sm:$0xff]
      %v210 = vld [vmem:[%s1 + $0x40] sm:$0xff]
      %v211 = vld [vmem:[%s1 + $0x48] sm:$0xff]
      %v212 = vld [vmem:[%s1 + $0x50] sm:$0xff]
      %v213 = vld [vmem:[%s1 + $0x58] sm:$0xff]
      %v214 = vld [vmem:[%s1 + $0x60] sm:$0xff]
      %v215 = vld [vmem:[%s1 + $0x68] sm:$0xff]
      %v216 = vld [vmem:[%s1 + $0x70] sm:$0xff]
      %v217 = vld [vmem:[%s1 + $0x78] sm:$0xff]
      %v218 = vld [vmem:[%s1 + $0x80] sm:$0xff]
      %v219 = vld [vmem:[%s1 + $0x88] sm:$0xff]
      %v220 = vld [vmem:[%s1 + $0x90] sm:$0xff]
      %v221 = vld [vmem:[%s1 + $0x98] sm:$0xff]
      %v222 = vld [vmem:[%s1 + $0xa0] sm:$0xff]
      %v223 = vld [vmem:[%s1 + $0xa8] sm:$0xff]
      %v224 = vld [vmem:[%s1 + $0xb0] sm:$0xff]
      %v225 = vld [vmem:[%s1 + $0xb8] sm:$0xff]
      %v226 = vld [vmem:[%s1 + $0xc0] sm:$0xff]
      %v227 = vld [vmem:[%s1 + $0xc8] sm:$0xff]
      %v228 = vld [vmem:[%s1 + $0xd0] sm:$0xff]
      %v229 = vld [vmem:[%s1 + $0xd8] sm:$0xff]
      %v230 = vld [vmem:[%s1 + $0xe0] sm:$0xff]
      %v231 = vld [vmem:[%s1 + $0xe8] sm:$0xff]
      %v232 = vld [vmem:[%s1 + $0xf0] sm:$0xff]
      %v233 = vld [vmem:[%s1 + $0xf8] sm:$0xff]
      %v234 = vld [vmem:[%s1 + $0x100] sm:$0xff]
      %v235 = vld [vmem:[%s1 + $0x108] sm:$0xff]
      %v236 = vld [vmem:[%s193] sm:$0xff]
      %v237 = vld [vmem:[%s193 + $0x8] sm:$0xff]
      %v238 = vld [vmem:[%s193 + $0x10] sm:$0xff]
      %v239 = vld [vmem:[%s193 + $0x18] sm:$0xff]
      %v240 = vld [vmem:[%s193 + $0x20] sm:$0xff]
      %v241 = vld [vmem:[%s193 + $0x28] sm:$0xff]
      %v242 = vld [vmem:[%s193 + $0x30] sm:$0xff]
      %v243 = vld [vmem:[%s193 + $0x38] sm:$0xff]
      %v244 = vld [vmem:[%s193 + $0x40] sm:$0xff]
      %v245 = vld [vmem:[%s193 + $0x48] sm:$0xff]
      %v246 = vld [vmem:[%s193 + $0x50] sm:$0xff]
      %v247 = vld [vmem:[%s193 + $0x58] sm:$0xff]
      %v248 = vld [vmem:[%s193 + $0x60] sm:$0xff]
      %v249 = vld [vmem:[%s193 + $0x68] sm:$0xff]
      %v250 = vld [vmem:[%s193 + $0x70] sm:$0xff]
      %v251 = vld [vmem:[%s193 + $0x78] sm:$0xff]
      %v252 = vld [vmem:[%s193 + $0x80] sm:$0xff]
      %v253 = vld [vmem:[%s2] sm:$0xff]
      %v254 = vld [vmem:[%s2 + $0x8] sm:$0xff]
      %v255 = vld [vmem:[%s2 + $0x10] sm:$0xff]
      %v256 = vld [vmem:[%s2 + $0x18] sm:$0xff]
      %v257 = vld [vmem:[%s2 + $0x20] sm:$0xff]
      %v258 = vld [vmem:[%s2 + $0x28] sm:$0xff]
      %v259 = vld [vmem:[%s2 + $0x30] sm:$0xff]
      %v260 = vld [vmem:[%s2 + $0x38] sm:$0xff]
      %v261 = vld [vmem:[%s2 + $0x40] sm:$0xff]
      %v262 = vld [vmem:[%s2 + $0x48] sm:$0xff]
      %v263 = vld [vmem:[%s2 + $0x50] sm:$0xff]
      %v264 = vld [vmem:[%s2 + $0x58] sm:$0xff]
      %v265 = vld [vmem:[%s2 + $0x60] sm:$0xff]
      %v266 = vld [vmem:[%s2 + $0x68] sm:$0xff]
      %v267 = vld [vmem:[%s2 + $0x70] sm:$0xff]
      %v268 = vld [vmem:[%s2 + $0x78] sm:$0xff]
      %v269 = vld [vmem:[%s2 + $0x80] sm:$0xff]
      %271 = vset.pattern.permute.xlu0 0
      %272 = vperm.xlu0 %271, %v253
      %v273 = vpop.permute.xlu0 %272
      %276 = vset.pattern.permute.xlu0 0
      %277 = vperm.xlu0 %276, %v254
      %v278 = vpop.permute.xlu0 %277
      %281 = vset.pattern.permute.xlu0 0
      %282 = vperm.xlu0 %281, %v255
      %v283 = vpop.permute.xlu0 %282
      %286 = vset.pattern.permute.xlu0 0
      %287 = vperm.xlu0 %286, %v256
      %v288 = vpop.permute.xlu0 %287
      %291 = vset.pattern.permute.xlu0 0
      %292 = vperm.xlu0 %291, %v257
      %v293 = vpop.permute.xlu0 %292
      %296 = vset.pattern.permute.xlu0 0
      %297 = vperm.xlu0 %296, %v258
      %v298 = vpop.permute.xlu0 %297
      %301 = vset.pattern.permute.xlu0 0
      %302 = vperm.xlu0 %301, %v259
      %v303 = vpop.permute.xlu0 %302
      %306 = vset.pattern.permute.xlu0 0
      %307 = vperm.xlu0 %306, %v260
      %v308 = vpop.permute.xlu0 %307
      %311 = vset.pattern.permute.xlu0 0
      %312 = vperm.xlu0 %311, %v261
      %v313 = vpop.permute.xlu0 %312
      %316 = vset.pattern.permute.xlu0 0
      %317 = vperm.xlu0 %316, %v262
      %v318 = vpop.permute.xlu0 %317
      %321 = vset.pattern.permute.xlu0 0
      %322 = vperm.xlu0 %321, %v263
      %v323 = vpop.permute.xlu0 %322
      %326 = vset.pattern.permute.xlu0 0
      %327 = vperm.xlu0 %326, %v264
      %v328 = vpop.permute.xlu0 %327
      %331 = vset.pattern.permute.xlu0 0
      %332 = vperm.xlu0 %331, %v265
      %v333 = vpop.permute.xlu0 %332
      %336 = vset.pattern.permute.xlu0 0
      %337 = vperm.xlu0 %336, %v266
      %v338 = vpop.permute.xlu0 %337
      %341 = vset.pattern.permute.xlu0 0
      %342 = vperm.xlu0 %341, %v267
      %v343 = vpop.permute.xlu0 %342
      %346 = vset.pattern.permute.xlu0 0
      %347 = vperm.xlu0 %346, %v268
      %v348 = vpop.permute.xlu0 %347
      %351 = vset.pattern.permute.xlu0 0
      %352 = vperm.xlu0 %351, %v269
      %v353 = vpop.permute.xlu0 %352
      %vm355 = vcmask 64512
      %v357 = vsel %vm355, %v203, 0
      %v360 = vsel %vm355, %v205, 0
      %v363 = vsel %vm355, %v207, 0
      %v366 = vsel %vm355, %v209, 0
      %v369 = vsel %vm355, %v211, 0
      %v372 = vsel %vm355, %v213, 0
      %v375 = vsel %vm355, %v215, 0
      %v378 = vsel %vm355, %v217, 0
      %v381 = vsel %vm355, %v219, 0
      %v384 = vsel %vm355, %v221, 0
      %v387 = vsel %vm355, %v223, 0
      %v390 = vsel %vm355, %v225, 0
      %v393 = vsel %vm355, %v227, 0
      %v396 = vsel %vm355, %v229, 0
      %v399 = vsel %vm355, %v231, 0
      %v402 = vsel %vm355, %v233, 0
      %v405 = vsel %vm355, %v235, 0
      %407 = vmatpush.msra.mxu0 %v251
      %408 = vmatpush.msra.mxu0 %v250
      %409 = vmatpush.msra.mxu0 %v249
      %410 = vmatpush.msra.mxu0 %v248
      %411 = vmatpush.msra.mxu0 %v247
      %412 = vmatpush.msra.mxu0 %v246
      %413 = vmatpush.msra.mxu0 %v245
      %414 = vmatpush.msra.mxu0 %v244
      %415 = vmatpush.msra.mxu0 %v243
      %416 = vmatpush.msra.mxu0 %v242
      %417 = vmatpush.msra.mxu0 %v241
      %418 = vmatpush.msra.mxu0 %v240
      %419 = vmatpush.msra.mxu0 %v239
      %420 = vmatpush.msra.mxu0 %v238
      %421 = vmatpush.msra.mxu0 %v237
      %422 = vmatpush.msra.mxu0 %v236
      %423 = vmatmul.f32.gmra.mxu0 %v202
      %v424 = vpop.f32.mrf.mxu0
      %v425 = vadd.f32 %v273, %v424
      %426 = vmatmul.f32.gmra.mxu0 %v204
      %v427 = vpop.f32.mrf.mxu0
      %v428 = vadd.f32 %v278, %v427
      %429 = vmatmul.f32.gmra.mxu0 %v206
      %v430 = vpop.f32.mrf.mxu0
      %v431 = vadd.f32 %v283, %v430
      %432 = vmatmul.f32.gmra.mxu0 %v208
      %v433 = vpop.f32.mrf.mxu0
      %v434 = vadd.f32 %v288, %v433
      %435 = vmatmul.f32.gmra.mxu0 %v210
      %v436 = vpop.f32.mrf.mxu0
      %v437 = vadd.f32 %v293, %v436
      %438 = vmatmul.f32.gmra.mxu0 %v212
      %v439 = vpop.f32.mrf.mxu0
      %v440 = vadd.f32 %v298, %v439
      %441 = vmatmul.f32.gmra.mxu0 %v214
      %v442 = vpop.f32.mrf.mxu0
      %v443 = vadd.f32 %v303, %v442
      %444 = vmatmul.f32.gmra.mxu0 %v216
      %v445 = vpop.f32.mrf.mxu0
      %v446 = vadd.f32 %v308, %v445
      %447 = vmatmul.f32.gmra.mxu0 %v218
      %v448 = vpop.f32.mrf.mxu0
      %v449 = vadd.f32 %v313, %v448
      %450 = vmatmul.f32.gmra.mxu0 %v220
      %v451 = vpop.f32.mrf.mxu0
      %v452 = vadd.f32 %v318, %v451
      %453 = vmatmul.f32.gmra.mxu0 %v222
      %v454 = vpop.f32.mrf.mxu0
      %v455 = vadd.f32 %v323, %v454
      %456 = vmatmul.f32.gmra.mxu0 %v224
      %v457 = vpop.f32.mrf.mxu0
      %v458 = vadd.f32 %v328, %v457
      %459 = vmatmul.f32.gmra.mxu0 %v226
      %v460 = vpop.f32.mrf.mxu0
      %v461 = vadd.f32 %v333, %v460
      %462 = vmatmul.f32.gmra.mxu0 %v228
      %v463 = vpop.f32.mrf.mxu0
      %v464 = vadd.f32 %v338, %v463
      %465 = vmatmul.f32.gmra.mxu0 %v230
      %v466 = vpop.f32.mrf.mxu0
      %v467 = vadd.f32 %v343, %v466
      %468 = vmatmul.f32.gmra.mxu0 %v232
      %v469 = vpop.f32.mrf.mxu0
      %v470 = vadd.f32 %v348, %v469
      %471 = vmatmul.f32.gmra.mxu0 %v234
      %v472 = vpop.f32.mrf.mxu0
      %v473 = vadd.f32 %v353, %v472
      %474 = vdwg.mxu0
      %475 = vmatpush.msra.mxu0 0.0
      %476 = vmatpush.msra.mxu0 0.0
      %477 = vmatpush.msra.mxu0 0.0
      %478 = vmatpush.msra.mxu0 0.0
      %479 = vmatpush.msra.mxu0 0.0
      %480 = vmatpush.msra.mxu0 0.0
      %481 = vmatpush.msra.mxu0 0.0
      %482 = vmatpush.msra.mxu0 0.0
      %483 = vmatpush.msra.mxu0 0.0
      %484 = vmatpush.msra.mxu0 0.0
      %485 = vmatpush.msra.mxu0 0.0
      %486 = vmatpush.msra.mxu0 0.0
      %487 = vmatpush.msra.mxu0 0.0
      %488 = vmatpush.msra.mxu0 0.0
      %489 = vmatpush.msra.mxu0 0.0
      %490 = vmatpush.msra.mxu0 %v252
      %491 = vmatmul.f32.gmra.mxu0 %v357
      %v492 = vpop.f32.mrf.mxu0
      %v493 = vadd.f32 %v425, %v492
      %494 = vmatmul.f32.gmra.mxu0 %v360
      %v495 = vpop.f32.mrf.mxu0
      %v496 = vadd.f32 %v428, %v495
      %497 = vmatmul.f32.gmra.mxu0 %v363
      %v498 = vpop.f32.mrf.mxu0
      %v499 = vadd.f32 %v431, %v498
      %500 = vmatmul.f32.gmra.mxu0 %v366
      %v501 = vpop.f32.mrf.mxu0
      %v502 = vadd.f32 %v434, %v501
      %503 = vmatmul.f32.gmra.mxu0 %v369
      %v504 = vpop.f32.mrf.mxu0
      %v505 = vadd.f32 %v437, %v504
      %506 = vmatmul.f32.gmra.mxu0 %v372
      %v507 = vpop.f32.mrf.mxu0
      %v508 = vadd.f32 %v440, %v507
      %509 = vmatmul.f32.gmra.mxu0 %v375
      %v510 = vpop.f32.mrf.mxu0
      %v511 = vadd.f32 %v443, %v510
      %512 = vmatmul.f32.gmra.mxu0 %v378
      %v513 = vpop.f32.mrf.mxu0
      %v514 = vadd.f32 %v446, %v513
      %515 = vmatmul.f32.gmra.mxu0 %v381
      %v516 = vpop.f32.mrf.mxu0
      %v517 = vadd.f32 %v449, %v516
      %518 = vmatmul.f32.gmra.mxu0 %v384
      %v519 = vpop.f32.mrf.mxu0
      %v520 = vadd.f32 %v452, %v519
      %521 = vmatmul.f32.gmra.mxu0 %v387
      %v522 = vpop.f32.mrf.mxu0
      %v523 = vadd.f32 %v455, %v522
      %524 = vmatmul.f32.gmra.mxu0 %v390
      %v525 = vpop.f32.mrf.mxu0
      %v526 = vadd.f32 %v458, %v525
      %527 = vmatmul.f32.gmra.mxu0 %v393
      %v528 = vpop.f32.mrf.mxu0
      %v529 = vadd.f32 %v461, %v528
      %530 = vmatmul.f32.gmra.mxu0 %v396
      %v531 = vpop.f32.mrf.mxu0
      %v532 = vadd.f32 %v464, %v531
      %533 = vmatmul.f32.gmra.mxu0 %v399
      %v534 = vpop.f32.mrf.mxu0
      %v535 = vadd.f32 %v467, %v534
      %536 = vmatmul.f32.gmra.mxu0 %v402
      %v537 = vpop.f32.mrf.mxu0
      %v538 = vadd.f32 %v470, %v537
      %539 = vmatmul.f32.gmra.mxu0 %v405
      %v540 = vpop.f32.mrf.mxu0
      %v541 = vadd.f32 %v473, %v540
      %542 = vdwg.mxu0
      %vm543 = vcmask 130048
      %544 = vst.msk [vmem:[%s201] sm:$0xff] %vm543, %v493
      %545 = vst.msk [vmem:[%s201 + $0x8] sm:$0xff] %vm543, %v496
      %546 = vst.msk [vmem:[%s201 + $0x10] sm:$0xff] %vm543, %v499
      %547 = vst.msk [vmem:[%s201 + $0x18] sm:$0xff] %vm543, %v502
      %548 = vst.msk [vmem:[%s201 + $0x20] sm:$0xff] %vm543, %v505
      %549 = vst.msk [vmem:[%s201 + $0x28] sm:$0xff] %vm543, %v508
      %550 = vst.msk [vmem:[%s201 + $0x30] sm:$0xff] %vm543, %v511
      %551 = vst.msk [vmem:[%s201 + $0x38] sm:$0xff] %vm543, %v514
      %552 = vst.msk [vmem:[%s201 + $0x40] sm:$0xff] %vm543, %v517
      %553 = vst.msk [vmem:[%s201 + $0x48] sm:$0xff] %vm543, %v520
      %554 = vst.msk [vmem:[%s201 + $0x50] sm:$0xff] %vm543, %v523
      %555 = vst.msk [vmem:[%s201 + $0x58] sm:$0xff] %vm543, %v526
      %556 = vst.msk [vmem:[%s201 + $0x60] sm:$0xff] %vm543, %v529
      %557 = vst.msk [vmem:[%s201 + $0x68] sm:$0xff] %vm543, %v532
      %558 = vst.msk [vmem:[%s201 + $0x70] sm:$0xff] %vm543, %v535
      %559 = vst.msk [vmem:[%s201 + $0x78] sm:$0xff] %vm543, %v538
      %560 = vst.msk [vmem:[%s201 + $0x80] sm:$0xff] %vm543, %v541
      %p561 = scmp.lt.s32.totalorder %s18, 1
      %s562 = scalar_select %p561, %s18, 1
      %p563 = scmp.lt.s32.totalorder %s19, 0
      %s564 = scalar_select %p563, %s19, 0
      %s565 = smul.addr %s562, 17
      %s566 = sadd.s32 %s564, %s565
      %s567 = smul.addr %s566, 8
      %s568 = scalar_lea.vmem %s3, %s567
      // Predicated region
      $region33: #{structural_descriptor.20} parent=31 // pred_check
        %p569 = pneg %p116
      $region34: #{structural_descriptor.20} parent=31 // pred_check_branch
        %571 = sbr.rel (%p569) target = $region36
      $region35: #{structural_descriptor.20} parent=31 // pred_region
        _
      $region36: #{structural_descriptor.20} parent=31 // pred_fallthru
        _
    $region32: #{structural_descriptor.20} parent=5 // pred_fallthru
      _
    %p572 = scmp.le.s32.totalorder 2, %s9
    // Predicated region
    $region37: #{structural_descriptor.20} parent=5 // pred_check
      %p573 = pneg %p572
    $region38: #{structural_descriptor.20} parent=5 // pred_check_branch
      %575 = sbr.rel (%p573) target = $region40
    $region39: #{structural_descriptor.20} parent=5 // pred_region
      %s576 = ssub.s32 %s9, 2
      // Predicated region
      $region41: #{structural_descriptor.20} parent=39 // pred_check
        %p577 = pneg %p122
      $region42: #{structural_descriptor.20} parent=39 // pred_check_branch
        %579 = sbr.rel (%p577) target = $region44
      $region43: #{structural_descriptor.20} parent=39 // pred_region
        %p580 = scmp.lt.s32.totalorder %s20, 1
        %s581 = scalar_select %p580, %s20, 1
        %p582 = scmp.lt.s32.totalorder %s21, 0
        %s583 = scalar_select %p582, %s21, 0
        %s584 = smul.addr %s581, 17
        %s585 = sadd.s32 %s583, %s584
        %s586 = smul.addr %s585, 8
        %s587 = scalar_lea.vmem %s3, %s586
      $region44: #{structural_descriptor.20} parent=39 // pred_fallthru
        _
    $region40: #{structural_descriptor.20} parent=5 // pred_fallthru
      _
  $region6: #{structural_descriptor.20} parent=0 // loop_footer
    %s13 = sadd.s32 1, %s9
  $region7: #{structural_descriptor.20} parent=0 // loop_footer_branch
    %8 = sbr.rel target = $region3
  $region8: #{structural_descriptor.20} parent=0 // loop_exit
    _

// kernel: structural_descriptor.19
$region0: #{structural_descriptor.19}
  #allocation0 [shape = 'u32[]', space=smem, size = 0x4, offset = 0x4, fixed_abs, tag = 'smem constant byte address 0x4 - core index']
  #allocation1 [shape = 'u32[72,128]{1,0:T(1,128)}', space=vmem, size = 0x9000, scoped, tag = 'internal scratch']
  %s0 = inlined_call_operand.vmem [shape: f32[2,4,3,16], index: 0, kind: input, shape index: {}]
  %s1 = inlined_call_operand.vmem [shape: f32[256,4], index: 1, kind: input, shape index: {}]
  %s2 = inlined_call_operand.vmem [shape: f32[2,64,16], index: 2, kind: output, shape index: {}]
  %s3 = sld [smem:[#allocation0]]
  $region41: #{structural_descriptor.19} parent=0
    _
  %s5 = ssub.s32 1, %s3
  %s6 = scalar_select 0, %s5, %s3
  loop: start=0, step=1, limit=4
  $region2: #{structural_descriptor.19} parent=0 // loop_pre_header
    _
  $region3: #{structural_descriptor.19} parent=0 // loop_header
    %s8 = sphi 0, %s12
    %p9 = scmp.ge.s32.totalorder %s8, 4
    %s15 = sphi 0, %s27
    %s16 = sphi 0, %s23
    %s17 = sphi 0, %s15
    %s18 = sphi 0, %s16
    %s19 = sphi 0, %s17
    %s20 = sphi 0, %s18
    %s32 = sphi 0, %s34
    %s35 = sphi 0, %s32
    %s36 = sphi 0, %s35
    %s52 = sphi 0, %s36
    %s56 = sphi 0, %s56
    %s58 = sphi 0, %s56
    %s59 = sphi 0, %s58
    %s73 = sphi 0, %s59
    %s81 = sphi 0, %s83
    %s84 = sphi 0, %s81
    %s85 = sphi 0, %s84
    %s101 = sphi 0, %s85
  $region4: #{structural_descriptor.19} parent=0 // loop_header_branch
    %11 = sbr.rel (%p9) target = $region8
  $region5: #{structural_descriptor.19} parent=0 // loop_body
    %s13 = ssub.s32 %s8, 1
    %s14 = ssub.s32 %s8, 2
    %s21 = sadd.s32 1, %s16
    %p22 = scmp.ge.s32.totalorder %s21, 1
    %s23 = scalar_select %p22, 0, %s21
    %s24 = sadd.s32 1, %s15
    %s25 = scalar_select %p22, %s24, %s15
    %p26 = scmp.ge.s32.totalorder %s25, 2
    %s27 = scalar_select %p26, 0, %s25
    %s28 = ssub.s32 %s15, %s27
    %s29 = ssub.s32 %s16, %s23
    %s30 = sor.u32 %s28, %s29
    %p31 = scmp.eq.s32.totalorder %s30, 0
    %s33 = sadd.s32 %s32, 1
    %s34 = scalar_select %p31, %s32, %s33
    %p37 = pneg %p31
    %p38 = scmp.eq.s32.totalorder %s8, 1
    %p39 = por %p37, %p38
    %p40 = scmp.ne.s32.totalorder %s32, %s35
    %p41 = scmp.eq.s32.totalorder %s8, 0
    %p42 = por %p40, %p41
    %p43 = scmp.ne.s32.totalorder %s32, %s35
    %p44 = scmp.eq.s32.totalorder %s13, 1
    %p45 = por %p43, %p44
    %p46 = scmp.ne.s32.totalorder %s35, %s36
    %p47 = scmp.eq.s32.totalorder %s13, 0
    %p48 = por %p46, %p47
    %p49 = scmp.ne.s32.totalorder %s35, %s36
    %p50 = scmp.eq.s32.totalorder %s14, 1
    %p51 = por %p49, %p50
    %p53 = scmp.ne.s32.totalorder %s36, %s52
    %p54 = scmp.eq.s32.totalorder %s14, 0
    %p55 = por %p53, %p54
    %s57 = sadd.s32 %s56, 1
    %p60 = scmp.eq.s32.totalorder %s8, 1
    %p61 = scmp.ne.s32.totalorder %s56, %s58
    %p62 = scmp.eq.s32.totalorder %s8, 0
    %p63 = por %p61, %p62
    %p64 = scmp.ne.s32.totalorder %s56, %s58
    %p65 = scmp.eq.s32.totalorder %s13, 1
    %p66 = por %p64, %p65
    %p67 = scmp.ne.s32.totalorder %s58, %s59
    %p68 = scmp.eq.s32.totalorder %s13, 0
    %p69 = por %p67, %p68
    %p70 = scmp.ne.s32.totalorder %s58, %s59
    %p71 = scmp.eq.s32.totalorder %s14, 1
    %p72 = por %p70, %p71
    %p74 = scmp.ne.s32.totalorder %s59, %s73
    %p75 = scmp.eq.s32.totalorder %s14, 0
    %p76 = por %p74, %p75
    %s77 = ssub.s32 %s15, %s27
    %s78 = ssub.s32 %s16, %s23
    %s79 = sor.u32 %s77, %s78
    %p80 = scmp.eq.s32.totalorder %s79, 0
    %s82 = sadd.s32 %s81, 1
    %s83 = scalar_select %p80, %s81, %s82
    %p86 = pneg %p80
    %p87 = scmp.eq.s32.totalorder %s8, 1
    %p88 = por %p86, %p87
    %p89 = scmp.ne.s32.totalorder %s81, %s84
    %p90 = scmp.eq.s32.totalorder %s8, 0
    %p91 = por %p89, %p90
    %p92 = scmp.ne.s32.totalorder %s81, %s84
    %p93 = scmp.eq.s32.totalorder %s13, 1
    %p94 = por %p92, %p93
    %p95 = scmp.ne.s32.totalorder %s84, %s85
    %p96 = scmp.eq.s32.totalorder %s13, 0
    %p97 = por %p95, %p96
    %p98 = scmp.ne.s32.totalorder %s84, %s85
    %p99 = scmp.eq.s32.totalorder %s14, 1
    %p100 = por %p98, %p99
    %p102 = scmp.ne.s32.totalorder %s85, %s101
    %p103 = scmp.eq.s32.totalorder %s14, 0
    %p104 = por %p102, %p103
    %p105 = scmp.le.s32.totalorder 1, %s8
    %p106 = scmp.lt.s32.totalorder %s8, 3
    %p107 = pnand %p105, %p106
    %p108 = pneg %p107
    // Predicated region
    $region9: #{structural_descriptor.19} parent=5 // pred_check
      _
    $region10: #{structural_descriptor.19} parent=5 // pred_check_branch
      %110 = sbr.rel (%p107) target = $region12
    $region11: #{structural_descriptor.19} parent=5 // pred_region
      %s111 = ssub.s32 %s8, 1
      // Predicated region
      $region13: #{structural_descriptor.19} parent=11 // pred_check
        %p112 = pneg %p69
      $region14: #{structural_descriptor.19} parent=11 // pred_check_branch
        %114 = sbr.rel (%p112) target = $region16
      $region15: #{structural_descriptor.19} parent=11 // pred_region
        _
      $region16: #{structural_descriptor.19} parent=11 // pred_fallthru
        _
    $region12: #{structural_descriptor.19} parent=5 // pred_fallthru
      _
    %p115 = scmp.lt.s32.totalorder %s8, 2
    // Predicated region
    $region17: #{structural_descriptor.19} parent=5 // pred_check
      %p116 = pneg %p115
    $region18: #{structural_descriptor.19} parent=5 // pred_check_branch
      %118 = sbr.rel (%p116) target = $region20
    $region19: #{structural_descriptor.19} parent=5 // pred_region
      // Predicated region
      $region21: #{structural_descriptor.19} parent=19 // pred_check
        %p119 = pneg %p42
      $region22: #{structural_descriptor.19} parent=19 // pred_check_branch
        %121 = sbr.rel (%p119) target = $region24
      $region23: #{structural_descriptor.19} parent=19 // pred_region
        %p122 = scmp.lt.s32.totalorder %s15, 1
        %s123 = scalar_select %p122, %s15, 1
        %p124 = scmp.lt.s32.totalorder %s16, 0
        %s125 = scalar_select %p124, %s16, 0
        %s126 = smul.addr %s123, 4
        %s127 = sadd.s32 %s125, %s126
        %s128 = smul.addr %s127, 4
        %s129 = scalar_lea.vmem %s0, %s128
      $region24: #{structural_descriptor.19} parent=19 // pred_fallthru
        _
    $region20: #{structural_descriptor.19} parent=5 // pred_fallthru
      _
    %p130 = scmp.le.s32.totalorder 1, %s8
    %p131 = scmp.lt.s32.totalorder %s8, 3
    %p132 = pnand %p130, %p131
    %p133 = pneg %p132
    // Predicated region
    $region25: #{structural_descriptor.19} parent=5 // pred_check
      _
    $region26: #{structural_descriptor.19} parent=5 // pred_check_branch
      %135 = sbr.rel (%p132) target = $region28
    $region27: #{structural_descriptor.19} parent=5 // pred_region
      %s136 = ssub.s32 %s8, 1
      %p137 = scmp.lt.s32.totalorder %s17, 1
      %s138 = scalar_select %p137, %s17, 1
      %p139 = scmp.lt.s32.totalorder %s18, 0
      %s140 = scalar_select %p139, %s18, 0
      %s141 = smul.addr %s138, 4
      %s142 = sadd.s32 %s140, %s141
      %s143 = smul.addr %s142, 4
      %s144 = scalar_lea.vmem %s0, %s143
      %p145 = pneg %p48
      %p146 = pneg %p45
      %p147 = pneg %p69
      %p148 = pneg %p66
      %p149 = pneg %p97
      %p150 = pneg %p94
      %p151 = scmp.lt.s32.totalorder %s17, 1
      %s152 = scalar_select %p151, %s17, 1
      %p153 = scmp.lt.s32.totalorder %s18, 0
      %s154 = scalar_select %p153, %s18, 0
      %s155 = smul.addr %s152, 8
      %s156 = sadd.s32 %s154, %s155
      %s157 = smul.addr %s156, 8
      %s158 = scalar_lea.vmem %s2, %s157
      %p159 = scmp.lt.s32.totalorder %s17, 1
      %s160 = scalar_select %p159, %s17, 1
      %p161 = scmp.lt.s32.totalorder %s18, 0
      %s162 = scalar_select %p161, %s18, 0
      %s163 = smul.addr %s160, 4
      %s164 = sadd.s32 %s162, %s163
      %s165 = smul.addr %s164, 4
      %s166 = scalar_lea.vmem %s0, %s165
      %p167 = scmp.lt.s32.totalorder %s17, 1
      %s168 = scalar_select %p167, %s17, 1
      %p169 = scmp.lt.s32.totalorder %s18, 0
      %s170 = scalar_select %p169, %s18, 0
      %s171 = smul.addr %s168, 8
      %s172 = sadd.s32 %s170, %s171
      %s173 = smul.addr %s172, 8
      %s174 = scalar_lea.vmem %s2, %s173
      %v175 = vld [vmem:[%s1] sm:$0xff]
      %v176 = vld [vmem:[%s1 + $0x8] sm:$0xff]
      %v177 = vld [vmem:[%s1 + $0x10] sm:$0xff]
      %v178 = vld [vmem:[%s1 + $0x18] sm:$0xff]
      %v179 = vld [vmem:[%s1 + $0x20] sm:$0xff]
      %v180 = vld [vmem:[%s1 + $0x28] sm:$0xff]
      %v181 = vld [vmem:[%s1 + $0x30] sm:$0xff]
      %v182 = vld [vmem:[%s1 + $0x38] sm:$0xff]
      %v183 = vld [vmem:[%s1 + $0x40] sm:$0xff]
      %v184 = vld [vmem:[%s1 + $0x48] sm:$0xff]
      %v185 = vld [vmem:[%s1 + $0x50] sm:$0xff]
      %v186 = vld [vmem:[%s1 + $0x58] sm:$0xff]
      %v187 = vld [vmem:[%s1 + $0x60] sm:$0xff]
      %v188 = vld [vmem:[%s1 + $0x68] sm:$0xff]
      %v189 = vld [vmem:[%s1 + $0x70] sm:$0xff]
      %v190 = vld [vmem:[%s1 + $0x78] sm:$0xff]
      %v191 = vld [vmem:[%s1 + $0x80] sm:$0xff]
      %v192 = vld [vmem:[%s1 + $0x88] sm:$0xff]
      %v193 = vld [vmem:[%s1 + $0x90] sm:$0xff]
      %v194 = vld [vmem:[%s1 + $0x98] sm:$0xff]
      %v195 = vld [vmem:[%s1 + $0xa0] sm:$0xff]
      %v196 = vld [vmem:[%s1 + $0xa8] sm:$0xff]
      %v197 = vld [vmem:[%s1 + $0xb0] sm:$0xff]
      %v198 = vld [vmem:[%s1 + $0xb8] sm:$0xff]
      %v199 = vld [vmem:[%s1 + $0xc0] sm:$0xff]
      %v200 = vld [vmem:[%s1 + $0xc8] sm:$0xff]
      %v201 = vld [vmem:[%s1 + $0xd0] sm:$0xff]
      %v202 = vld [vmem:[%s1 + $0xd8] sm:$0xff]
      %v203 = vld [vmem:[%s1 + $0xe0] sm:$0xff]
      %v204 = vld [vmem:[%s1 + $0xe8] sm:$0xff]
      %v205 = vld [vmem:[%s1 + $0xf0] sm:$0xff]
      %v206 = vld [vmem:[%s1 + $0xf8] sm:$0xff]
      %v207 = vld [vmem:[%s166] sm:$0x7]
      %v208 = vmul.f32 %v207, %v207
      %v210 = vrot.slane %v208, 1
      %v212 = vadd.f32 %v208, %v210
      %v213 = vrot.slane %v208, 2
      %v215 = vadd.f32 %v212, %v213
      %v216 = vmul.f32 %v215, -12.5
      %218 = vset.pattern.permute.xlu0 0
      %219 = vperm.xlu0 %218, %v175
      %v220 = vpop.permute.xlu0 %219
      %223 = vset.pattern.permute.xlu0 0
      %224 = vperm.xlu0 %223, %v176
      %v225 = vpop.permute.xlu0 %224
      %228 = vset.pattern.permute.xlu0 0
      %229 = vperm.xlu0 %228, %v177
      %v230 = vpop.permute.xlu0 %229
      %233 = vset.pattern.permute.xlu0 0
      %234 = vperm.xlu0 %233, %v178
      %v235 = vpop.permute.xlu0 %234
      %238 = vset.pattern.permute.xlu0 0
      %239 = vperm.xlu0 %238, %v179
      %v240 = vpop.permute.xlu0 %239
      %243 = vset.pattern.permute.xlu0 0
      %244 = vperm.xlu0 %243, %v180
      %v245 = vpop.permute.xlu0 %244
      %248 = vset.pattern.permute.xlu0 0
      %249 = vperm.xlu0 %248, %v181
      %v250 = vpop.permute.xlu0 %249
      %253 = vset.pattern.permute.xlu0 0
      %254 = vperm.xlu0 %253, %v182
      %v255 = vpop.permute.xlu0 %254
      %258 = vset.pattern.permute.xlu0 0
      %259 = vperm.xlu0 %258, %v183
      %v260 = vpop.permute.xlu0 %259
      %263 = vset.pattern.permute.xlu0 0
      %264 = vperm.xlu0 %263, %v184
      %v265 = vpop.permute.xlu0 %264
      %268 = vset.pattern.permute.xlu0 0
      %269 = vperm.xlu0 %268, %v185
      %v270 = vpop.permute.xlu0 %269
      %273 = vset.pattern.permute.xlu0 0
      %274 = vperm.xlu0 %273, %v186
      %v275 = vpop.permute.xlu0 %274
      %278 = vset.pattern.permute.xlu0 0
      %279 = vperm.xlu0 %278, %v187
      %v280 = vpop.permute.xlu0 %279
      %283 = vset.pattern.permute.xlu0 0
      %284 = vperm.xlu0 %283, %v188
      %v285 = vpop.permute.xlu0 %284
      %288 = vset.pattern.permute.xlu0 0
      %289 = vperm.xlu0 %288, %v189
      %v290 = vpop.permute.xlu0 %289
      %293 = vset.pattern.permute.xlu0 0
      %294 = vperm.xlu0 %293, %v190
      %v295 = vpop.permute.xlu0 %294
      %298 = vset.pattern.permute.xlu0 0
      %299 = vperm.xlu0 %298, %v191
      %v300 = vpop.permute.xlu0 %299
      %303 = vset.pattern.permute.xlu0 0
      %304 = vperm.xlu0 %303, %v192
      %v305 = vpop.permute.xlu0 %304
      %308 = vset.pattern.permute.xlu0 0
      %309 = vperm.xlu0 %308, %v193
      %v310 = vpop.permute.xlu0 %309
      %313 = vset.pattern.permute.xlu0 0
      %314 = vperm.xlu0 %313, %v194
      %v315 = vpop.permute.xlu0 %314
      %318 = vset.pattern.permute.xlu0 0
      %319 = vperm.xlu0 %318, %v195
      %v320 = vpop.permute.xlu0 %319
      %323 = vset.pattern.permute.xlu0 0
      %324 = vperm.xlu0 %323, %v196
      %v325 = vpop.permute.xlu0 %324
      %328 = vset.pattern.permute.xlu0 0
      %329 = vperm.xlu0 %328, %v197
      %v330 = vpop.permute.xlu0 %329
      %333 = vset.pattern.permute.xlu0 0
      %334 = vperm.xlu0 %333, %v198
      %v335 = vpop.permute.xlu0 %334
      %338 = vset.pattern.permute.xlu0 0
      %339 = vperm.xlu0 %338, %v199
      %v340 = vpop.permute.xlu0 %339
      %343 = vset.pattern.permute.xlu0 0
      %344 = vperm.xlu0 %343, %v200
      %v345 = vpop.permute.xlu0 %344
      %348 = vset.pattern.permute.xlu0 0
      %349 = vperm.xlu0 %348, %v201
      %v350 = vpop.permute.xlu0 %349
      %353 = vset.pattern.permute.xlu0 0
      %354 = vperm.xlu0 %353, %v202
      %v355 = vpop.permute.xlu0 %354
      %358 = vset.pattern.permute.xlu0 0
      %359 = vperm.xlu0 %358, %v203
      %v360 = vpop.permute.xlu0 %359
      %363 = vset.pattern.permute.xlu0 0
      %364 = vperm.xlu0 %363, %v204
      %v365 = vpop.permute.xlu0 %364
      %368 = vset.pattern.permute.xlu0 0
      %369 = vperm.xlu0 %368, %v205
      %v370 = vpop.permute.xlu0 %369
      %373 = vset.pattern.permute.xlu0 0
      %374 = vperm.xlu0 %373, %v206
      %v375 = vpop.permute.xlu0 %374
      %v377 = vperm.slane %v207, 0
      %v378 = vmul.f32 %v220, %v377
      %v379 = vmul.f32 %v225, %v377
      %v380 = vmul.f32 %v230, %v377
      %v381 = vmul.f32 %v235, %v377
      %v382 = vmul.f32 %v240, %v377
      %v383 = vmul.f32 %v245, %v377
      %v384 = vmul.f32 %v250, %v377
      %v385 = vmul.f32 %v255, %v377
      %v386 = vmul.f32 %v260, %v377
      %v387 = vmul.f32 %v265, %v377
      %v388 = vmul.f32 %v270, %v377
      %v389 = vmul.f32 %v275, %v377
      %v390 = vmul.f32 %v280, %v377
      %v391 = vmul.f32 %v285, %v377
      %v392 = vmul.f32 %v290, %v377
      %v393 = vmul.f32 %v295, %v377
      %v394 = vmul.f32 %v300, %v377
      %v395 = vmul.f32 %v305, %v377
      %v396 = vmul.f32 %v310, %v377
      %v397 = vmul.f32 %v315, %v377
      %v398 = vmul.f32 %v320, %v377
      %v399 = vmul.f32 %v325, %v377
      %v400 = vmul.f32 %v330, %v377
      %v401 = vmul.f32 %v335, %v377
      %v402 = vmul.f32 %v340, %v377
      %v403 = vmul.f32 %v345, %v377
      %v404 = vmul.f32 %v350, %v377
      %v405 = vmul.f32 %v355, %v377
      %v406 = vmul.f32 %v360, %v377
      %v407 = vmul.f32 %v365, %v377
      %v408 = vmul.f32 %v370, %v377
      %v409 = vmul.f32 %v375, %v377
      %410 = vset.pattern.permute.xlu0 1
      %411 = vperm.xlu0 %410, %v175
      %v412 = vpop.permute.xlu0 %411
      %414 = vset.pattern.permute.xlu0 1
      %415 = vperm.xlu0 %414, %v176
      %v416 = vpop.permute.xlu0 %415
      %418 = vset.pattern.permute.xlu0 1
      %419 = vperm.xlu0 %418, %v177
      %v420 = vpop.permute.xlu0 %419
      %422 = vset.pattern.permute.xlu0 1
      %423 = vperm.xlu0 %422, %v178
      %v424 = vpop.permute.xlu0 %423
      %426 = vset.pattern.permute.xlu0 1
      %427 = vperm.xlu0 %426, %v179
      %v428 = vpop.permute.xlu0 %427
      %430 = vset.pattern.permute.xlu0 1
      %431 = vperm.xlu0 %430, %v180
      %v432 = vpop.permute.xlu0 %431
      %434 = vset.pattern.permute.xlu0 1
      %435 = vperm.xlu0 %434, %v181
      %v436 = vpop.permute.xlu0 %435
      %438 = vset.pattern.permute.xlu0 1
      %439 = vperm.xlu0 %438, %v182
      %v440 = vpop.permute.xlu0 %439
      %442 = vset.pattern.permute.xlu0 1
      %443 = vperm.xlu0 %442, %v183
      %v444 = vpop.permute.xlu0 %443
      %446 = vset.pattern.permute.xlu0 1
      %447 = vperm.xlu0 %446, %v184
      %v448 = vpop.permute.xlu0 %447
      %450 = vset.pattern.permute.xlu0 1
      %451 = vperm.xlu0 %450, %v185
      %v452 = vpop.permute.xlu0 %451
      %454 = vset.pattern.permute.xlu0 1
      %455 = vperm.xlu0 %454, %v186
      %v456 = vpop.permute.xlu0 %455
      %458 = vset.pattern.permute.xlu0 1
      %459 = vperm.xlu0 %458, %v187
      %v460 = vpop.permute.xlu0 %459
      %462 = vset.pattern.permute.xlu0 1
      %463 = vperm.xlu0 %462, %v188
      %v464 = vpop.permute.xlu0 %463
      %466 = vset.pattern.permute.xlu0 1
      %467 = vperm.xlu0 %466, %v189
      %v468 = vpop.permute.xlu0 %467
      %470 = vset.pattern.permute.xlu0 1
      %471 = vperm.xlu0 %470, %v190
      %v472 = vpop.permute.xlu0 %471
      %474 = vset.pattern.permute.xlu0 1
      %475 = vperm.xlu0 %474, %v191
      %v476 = vpop.permute.xlu0 %475
      %478 = vset.pattern.permute.xlu0 1
      %479 = vperm.xlu0 %478, %v192
      %v480 = vpop.permute.xlu0 %479
      %482 = vset.pattern.permute.xlu0 1
      %483 = vperm.xlu0 %482, %v193
      %v484 = vpop.permute.xlu0 %483
      %486 = vset.pattern.permute.xlu0 1
      %487 = vperm.xlu0 %486, %v194
      %v488 = vpop.permute.xlu0 %487
      %490 = vset.pattern.permute.xlu0 1
      %491 = vperm.xlu0 %490, %v195
      %v492 = vpop.permute.xlu0 %491
      %494 = vset.pattern.permute.xlu0 1
      %495 = vperm.xlu0 %494, %v196
      %v496 = vpop.permute.xlu0 %495
      %498 = vset.pattern.permute.xlu0 1
      %499 = vperm.xlu0 %498, %v197
      %v500 = vpop.permute.xlu0 %499
      %502 = vset.pattern.permute.xlu0 1
      %503 = vperm.xlu0 %502, %v198
      %v504 = vpop.permute.xlu0 %503
      %506 = vset.pattern.permute.xlu0 1
      %507 = vperm.xlu0 %506, %v199
      %v508 = vpop.permute.xlu0 %507
      %510 = vset.pattern.permute.xlu0 1
      %511 = vperm.xlu0 %510, %v200
      %v512 = vpop.permute.xlu0 %511
      %514 = vset.pattern.permute.xlu0 1
      %515 = vperm.xlu0 %514, %v201
      %v516 = vpop.permute.xlu0 %515
      %518 = vset.pattern.permute.xlu0 1
      %519 = vperm.xlu0 %518, %v202
      %v520 = vpop.permute.xlu0 %519
      %522 = vset.pattern.permute.xlu0 1
      %523 = vperm.xlu0 %522, %v203
      %v524 = vpop.permute.xlu0 %523
      %526 = vset.pattern.permute.xlu0 1
      %527 = vperm.xlu0 %526, %v204
      %v528 = vpop.permute.xlu0 %527
      %530 = vset.pattern.permute.xlu0 1
      %531 = vperm.xlu0 %530, %v205
      %v532 = vpop.permute.xlu0 %531
      %534 = vset.pattern.permute.xlu0 1
      %535 = vperm.xlu0 %534, %v206
      %v536 = vpop.permute.xlu0 %535
      %v538 = vperm.slane %v207, 1
      %v539 = vmul.f32 %v412, %v538
      %v540 = vmul.f32 %v416, %v538
      %v541 = vmul.f32 %v420, %v538
      %v542 = vmul.f32 %v424, %v538
      %v543 = vmul.f32 %v428, %v538
      %v544 = vmul.f32 %v432, %v538
      %v545 = vmul.f32 %v436, %v538
      %v546 = vmul.f32 %v440, %v538
      %v547 = vmul.f32 %v444, %v538
      %v548 = vmul.f32 %v448, %v538
      %v549 = vmul.f32 %v452, %v538
      %v550 = vmul.f32 %v456, %v538
      %v551 = vmul.f32 %v460, %v538
      %v552 = vmul.f32 %v464, %v538
      %v553 = vmul.f32 %v468, %v538
      %v554 = vmul.f32 %v472, %v538
      %v555 = vmul.f32 %v476, %v538
      %v556 = vmul.f32 %v480, %v538
      %v557 = vmul.f32 %v484, %v538
      %v558 = vmul.f32 %v488, %v538
      %v559 = vmul.f32 %v492, %v538
      %v560 = vmul.f32 %v496, %v538
      %v561 = vmul.f32 %v500, %v538
      %v562 = vmul.f32 %v504, %v538
      %v563 = vmul.f32 %v508, %v538
      %v564 = vmul.f32 %v512, %v538
      %v565 = vmul.f32 %v516, %v538
      %v566 = vmul.f32 %v520, %v538
      %v567 = vmul.f32 %v524, %v538
      %v568 = vmul.f32 %v528, %v538
      %v569 = vmul.f32 %v532, %v538
      %v570 = vmul.f32 %v536, %v538
      %v571 = vadd.f32 %v378, %v539
      %v572 = vadd.f32 %v379, %v540
      %v573 = vadd.f32 %v380, %v541
      %v574 = vadd.f32 %v381, %v542
      %v575 = vadd.f32 %v382, %v543
      %v576 = vadd.f32 %v383, %v544
      %v577 = vadd.f32 %v384, %v545
      %v578 = vadd.f32 %v385, %v546
      %v579 = vadd.f32 %v386, %v547
      %v580 = vadd.f32 %v387, %v548
      %v581 = vadd.f32 %v388, %v549
      %v582 = vadd.f32 %v389, %v550
      %v583 = vadd.f32 %v390, %v551
      %v584 = vadd.f32 %v391, %v552
      %v585 = vadd.f32 %v392, %v553
      %v586 = vadd.f32 %v393, %v554
      %v587 = vadd.f32 %v394, %v555
      %v588 = vadd.f32 %v395, %v556
      %v589 = vadd.f32 %v396, %v557
      %v590 = vadd.f32 %v397, %v558
      %v591 = vadd.f32 %v398, %v559
      %v592 = vadd.f32 %v399, %v560
      %v593 = vadd.f32 %v400, %v561
      %v594 = vadd.f32 %v401, %v562
      %v595 = vadd.f32 %v402, %v563
      %v596 = vadd.f32 %v403, %v564
      %v597 = vadd.f32 %v404, %v565
      %v598 = vadd.f32 %v405, %v566
      %v599 = vadd.f32 %v406, %v567
      %v600 = vadd.f32 %v407, %v568
      %v601 = vadd.f32 %v408, %v569
      %v602 = vadd.f32 %v409, %v570
      %603 = vset.pattern.permute.xlu0 2
      %604 = vperm.xlu0 %603, %v175
      %v605 = vpop.permute.xlu0 %604
      %607 = vset.pattern.permute.xlu0 2
      %608 = vperm.xlu0 %607, %v176
      %v609 = vpop.permute.xlu0 %608
      %611 = vset.pattern.permute.xlu0 2
      %612 = vperm.xlu0 %611, %v177
      %v613 = vpop.permute.xlu0 %612
      %615 = vset.pattern.permute.xlu0 2
      %616 = vperm.xlu0 %615, %v178
      %v617 = vpop.permute.xlu0 %616
      %619 = vset.pattern.permute.xlu0 2
      %620 = vperm.xlu0 %619, %v179
      %v621 = vpop.permute.xlu0 %620
      %623 = vset.pattern.permute.xlu0 2
      %624 = vperm.xlu0 %623, %v180
      %v625 = vpop.permute.xlu0 %624
      %627 = vset.pattern.permute.xlu0 2
      %628 = vperm.xlu0 %627, %v181
      %v629 = vpop.permute.xlu0 %628
      %631 = vset.pattern.permute.xlu0 2
      %632 = vperm.xlu0 %631, %v182
      %v633 = vpop.permute.xlu0 %632
      %635 = vset.pattern.permute.xlu0 2
      %636 = vperm.xlu0 %635, %v183
      %v637 = vpop.permute.xlu0 %636
      %639 = vset.pattern.permute.xlu0 2
      %640 = vperm.xlu0 %639, %v184
      %v641 = vpop.permute.xlu0 %640
      %643 = vset.pattern.permute.xlu0 2
      %644 = vperm.xlu0 %643, %v185
      %v645 = vpop.permute.xlu0 %644
      %647 = vset.pattern.permute.xlu0 2
      %648 = vperm.xlu0 %647, %v186
      %v649 = vpop.permute.xlu0 %648
      %651 = vset.pattern.permute.xlu0 2
      %652 = vperm.xlu0 %651, %v187
      %v653 = vpop.permute.xlu0 %652
      %655 = vset.pattern.permute.xlu0 2
      %656 = vperm.xlu0 %655, %v188
      %v657 = vpop.permute.xlu0 %656
      %659 = vset.pattern.permute.xlu0 2
      %660 = vperm.xlu0 %659, %v189
      %v661 = vpop.permute.xlu0 %660
      %663 = vset.pattern.permute.xlu0 2
      %664 = vperm.xlu0 %663, %v190
      %v665 = vpop.permute.xlu0 %664
      %667 = vset.pattern.permute.xlu0 2
      %668 = vperm.xlu0 %667, %v191
      %v669 = vpop.permute.xlu0 %668
      %671 = vset.pattern.permute.xlu0 2
      %672 = vperm.xlu0 %671, %v192
      %v673 = vpop.permute.xlu0 %672
      %675 = vset.pattern.permute.xlu0 2
      %676 = vperm.xlu0 %675, %v193
      %v677 = vpop.permute.xlu0 %676
      %679 = vset.pattern.permute.xlu0 2
      %680 = vperm.xlu0 %679, %v194
      %v681 = vpop.permute.xlu0 %680
      %683 = vset.pattern.permute.xlu0 2
      %684 = vperm.xlu0 %683, %v195
      %v685 = vpop.permute.xlu0 %684
      %687 = vset.pattern.permute.xlu0 2
      %688 = vperm.xlu0 %687, %v196
      %v689 = vpop.permute.xlu0 %688
      %691 = vset.pattern.permute.xlu0 2
      %692 = vperm.xlu0 %691, %v197
      %v693 = vpop.permute.xlu0 %692
      %695 = vset.pattern.permute.xlu0 2
      %696 = vperm.xlu0 %695, %v198
      %v697 = vpop.permute.xlu0 %696
      %699 = vset.pattern.permute.xlu0 2
      %700 = vperm.xlu0 %699, %v199
      %v701 = vpop.permute.xlu0 %700
      %703 = vset.pattern.permute.xlu0 2
      %704 = vperm.xlu0 %703, %v200
      %v705 = vpop.permute.xlu0 %704
      %707 = vset.pattern.permute.xlu0 2
      %708 = vperm.xlu0 %707, %v201
      %v709 = vpop.permute.xlu0 %708
      %711 = vset.pattern.permute.xlu0 2
      %712 = vperm.xlu0 %711, %v202
      %v713 = vpop.permute.xlu0 %712
      %715 = vset.pattern.permute.xlu0 2
      %716 = vperm.xlu0 %715, %v203
      %v717 = vpop.permute.xlu0 %716
      %719 = vset.pattern.permute.xlu0 2
      %720 = vperm.xlu0 %719, %v204
      %v721 = vpop.permute.xlu0 %720
      %723 = vset.pattern.permute.xlu0 2
      %724 = vperm.xlu0 %723, %v205
      %v725 = vpop.permute.xlu0 %724
      %727 = vset.pattern.permute.xlu0 2
      %728 = vperm.xlu0 %727, %v206
      %v729 = vpop.permute.xlu0 %728
      %v731 = vperm.slane %v207, 2
      %v732 = vmul.f32 %v605, %v731
      %v733 = vmul.f32 %v609, %v731
      %v734 = vmul.f32 %v613, %v731
      %v735 = vmul.f32 %v617, %v731
      %v736 = vmul.f32 %v621, %v731
      %v737 = vmul.f32 %v625, %v731
      %v738 = vmul.f32 %v629, %v731
      %v739 = vmul.f32 %v633, %v731
      %v740 = vmul.f32 %v637, %v731
      %v741 = vmul.f32 %v641, %v731
      %v742 = vmul.f32 %v645, %v731
      %v743 = vmul.f32 %v649, %v731
      %v744 = vmul.f32 %v653, %v731
      %v745 = vmul.f32 %v657, %v731
      %v746 = vmul.f32 %v661, %v731
      %v747 = vmul.f32 %v665, %v731
      %v748 = vmul.f32 %v669, %v731
      %v749 = vmul.f32 %v673, %v731
      %v750 = vmul.f32 %v677, %v731
      %v751 = vmul.f32 %v681, %v731
      %v752 = vmul.f32 %v685, %v731
      %v753 = vmul.f32 %v689, %v731
      %v754 = vmul.f32 %v693, %v731
      %v755 = vmul.f32 %v697, %v731
      %v756 = vmul.f32 %v701, %v731
      %v757 = vmul.f32 %v705, %v731
      %v758 = vmul.f32 %v709, %v731
      %v759 = vmul.f32 %v713, %v731
      %v760 = vmul.f32 %v717, %v731
      %v761 = vmul.f32 %v721, %v731
      %v762 = vmul.f32 %v725, %v731
      %v763 = vmul.f32 %v729, %v731
      %v764 = vadd.f32 %v571, %v732
      %v765 = vadd.f32 %v572, %v733
      %v766 = vadd.f32 %v573, %v734
      %v767 = vadd.f32 %v574, %v735
      %v768 = vadd.f32 %v575, %v736
      %v769 = vadd.f32 %v576, %v737
      %v770 = vadd.f32 %v577, %v738
      %v771 = vadd.f32 %v578, %v739
      %v772 = vadd.f32 %v579, %v740
      %v773 = vadd.f32 %v580, %v741
      %v774 = vadd.f32 %v581, %v742
      %v775 = vadd.f32 %v582, %v743
      %v776 = vadd.f32 %v583, %v744
      %v777 = vadd.f32 %v584, %v745
      %v778 = vadd.f32 %v585, %v746
      %v779 = vadd.f32 %v586, %v747
      %v780 = vadd.f32 %v587, %v748
      %v781 = vadd.f32 %v588, %v749
      %v782 = vadd.f32 %v589, %v750
      %v783 = vadd.f32 %v590, %v751
      %v784 = vadd.f32 %v591, %v752
      %v785 = vadd.f32 %v592, %v753
      %v786 = vadd.f32 %v593, %v754
      %v787 = vadd.f32 %v594, %v755
      %v788 = vadd.f32 %v595, %v756
      %v789 = vadd.f32 %v596, %v757
      %v790 = vadd.f32 %v597, %v758
      %v791 = vadd.f32 %v598, %v759
      %v792 = vadd.f32 %v599, %v760
      %v793 = vadd.f32 %v600, %v761
      %v794 = vadd.f32 %v601, %v762
      %v795 = vadd.f32 %v602, %v763
      %796 = vset.pattern.permute.xlu0 3
      %797 = vperm.xlu0 %796, %v175
      %v798 = vpop.permute.xlu0 %797
      %800 = vset.pattern.permute.xlu0 3
      %801 = vperm.xlu0 %800, %v176
      %v802 = vpop.permute.xlu0 %801
      %804 = vset.pattern.permute.xlu0 3
      %805 = vperm.xlu0 %804, %v177
      %v806 = vpop.permute.xlu0 %805
      %808 = vset.pattern.permute.xlu0 3
      %809 = vperm.xlu0 %808, %v178
      %v810 = vpop.permute.xlu0 %809
      %812 = vset.pattern.permute.xlu0 3
      %813 = vperm.xlu0 %812, %v179
      %v814 = vpop.permute.xlu0 %813
      %816 = vset.pattern.permute.xlu0 3
      %817 = vperm.xlu0 %816, %v180
      %v818 = vpop.permute.xlu0 %817
      %820 = vset.pattern.permute.xlu0 3
      %821 = vperm.xlu0 %820, %v181
      %v822 = vpop.permute.xlu0 %821
      %824 = vset.pattern.permute.xlu0 3
      %825 = vperm.xlu0 %824, %v182
      %v826 = vpop.permute.xlu0 %825
      %828 = vset.pattern.permute.xlu0 3
      %829 = vperm.xlu0 %828, %v183
      %v830 = vpop.permute.xlu0 %829
      %832 = vset.pattern.permute.xlu0 3
      %833 = vperm.xlu0 %832, %v184
      %v834 = vpop.permute.xlu0 %833
      %836 = vset.pattern.permute.xlu0 3
      %837 = vperm.xlu0 %836, %v185
      %v838 = vpop.permute.xlu0 %837
      %840 = vset.pattern.permute.xlu0 3
      %841 = vperm.xlu0 %840, %v186
      %v842 = vpop.permute.xlu0 %841
      %844 = vset.pattern.permute.xlu0 3
      %845 = vperm.xlu0 %844, %v187
      %v846 = vpop.permute.xlu0 %845
      %848 = vset.pattern.permute.xlu0 3
      %849 = vperm.xlu0 %848, %v188
      %v850 = vpop.permute.xlu0 %849
      %852 = vset.pattern.permute.xlu0 3
      %853 = vperm.xlu0 %852, %v189
      %v854 = vpop.permute.xlu0 %853
      %856 = vset.pattern.permute.xlu0 3
      %857 = vperm.xlu0 %856, %v190
      %v858 = vpop.permute.xlu0 %857
      %860 = vset.pattern.permute.xlu0 3
      %861 = vperm.xlu0 %860, %v191
      %v862 = vpop.permute.xlu0 %861
      %864 = vset.pattern.permute.xlu0 3
      %865 = vperm.xlu0 %864, %v192
      %v866 = vpop.permute.xlu0 %865
      %868 = vset.pattern.permute.xlu0 3
      %869 = vperm.xlu0 %868, %v193
      %v870 = vpop.permute.xlu0 %869
      %872 = vset.pattern.permute.xlu0 3
      %873 = vperm.xlu0 %872, %v194
      %v874 = vpop.permute.xlu0 %873
      %876 = vset.pattern.permute.xlu0 3
      %877 = vperm.xlu0 %876, %v195
      %v878 = vpop.permute.xlu0 %877
      %880 = vset.pattern.permute.xlu0 3
      %881 = vperm.xlu0 %880, %v196
      %v882 = vpop.permute.xlu0 %881
      %884 = vset.pattern.permute.xlu0 3
      %885 = vperm.xlu0 %884, %v197
      %v886 = vpop.permute.xlu0 %885
      %888 = vset.pattern.permute.xlu0 3
      %889 = vperm.xlu0 %888, %v198
      %v890 = vpop.permute.xlu0 %889
      %892 = vset.pattern.permute.xlu0 3
      %893 = vperm.xlu0 %892, %v199
      %v894 = vpop.permute.xlu0 %893
      %896 = vset.pattern.permute.xlu0 3
      %897 = vperm.xlu0 %896, %v200
      %v898 = vpop.permute.xlu0 %897
      %900 = vset.pattern.permute.xlu0 3
      %901 = vperm.xlu0 %900, %v201
      %v902 = vpop.permute.xlu0 %901
      %904 = vset.pattern.permute.xlu0 3
      %905 = vperm.xlu0 %904, %v202
      %v906 = vpop.permute.xlu0 %905
      %908 = vset.pattern.permute.xlu0 3
      %909 = vperm.xlu0 %908, %v203
      %v910 = vpop.permute.xlu0 %909
      %912 = vset.pattern.permute.xlu0 3
      %913 = vperm.xlu0 %912, %v204
      %v914 = vpop.permute.xlu0 %913
      %916 = vset.pattern.permute.xlu0 3
      %917 = vperm.xlu0 %916, %v205
      %v918 = vpop.permute.xlu0 %917
      %920 = vset.pattern.permute.xlu0 3
      %921 = vperm.xlu0 %920, %v206
      %v922 = vpop.permute.xlu0 %921
      %v924 = vadd.f32 %v764, %v798
      %v925 = vadd.f32 %v765, %v802
      %v926 = vadd.f32 %v766, %v806
      %v927 = vadd.f32 %v767, %v810
      %v928 = vadd.f32 %v768, %v814
      %v929 = vadd.f32 %v769, %v818
      %v930 = vadd.f32 %v770, %v822
      %v931 = vadd.f32 %v771, %v826
      %v932 = vadd.f32 %v772, %v830
      %v933 = vadd.f32 %v773, %v834
      %v934 = vadd.f32 %v774, %v838
      %v935 = vadd.f32 %v775, %v842
      %v936 = vadd.f32 %v776, %v846
      %v937 = vadd.f32 %v777, %v850
      %v938 = vadd.f32 %v778, %v854
      %v939 = vadd.f32 %v779, %v858
      %v940 = vadd.f32 %v780, %v862
      %v941 = vadd.f32 %v781, %v866
      %v942 = vadd.f32 %v782, %v870
      %v943 = vadd.f32 %v783, %v874
      %v944 = vadd.f32 %v784, %v878
      %v945 = vadd.f32 %v785, %v882
      %v946 = vadd.f32 %v786, %v886
      %v947 = vadd.f32 %v787, %v890
      %v948 = vadd.f32 %v788, %v894
      %v949 = vadd.f32 %v789, %v898
      %v950 = vadd.f32 %v790, %v902
      %v951 = vadd.f32 %v791, %v906
      %v952 = vadd.f32 %v792, %v910
      %v953 = vadd.f32 %v793, %v914
      %v954 = vadd.f32 %v794, %v918
      %v955 = vadd.f32 %v795, %v922
      %v956 = vperm.slane %v216, 0
      %v957 = vadd.f32 %v924, %v956
      %v958 = vadd.f32 %v925, %v956
      %v959 = vadd.f32 %v926, %v956
      %v960 = vadd.f32 %v927, %v956
      %v961 = vadd.f32 %v928, %v956
      %v962 = vadd.f32 %v929, %v956
      %v963 = vadd.f32 %v930, %v956
      %v964 = vadd.f32 %v931, %v956
      %v965 = vadd.f32 %v932, %v956
      %v966 = vadd.f32 %v933, %v956
      %v967 = vadd.f32 %v934, %v956
      %v968 = vadd.f32 %v935, %v956
      %v969 = vadd.f32 %v936, %v956
      %v970 = vadd.f32 %v937, %v956
      %v971 = vadd.f32 %v938, %v956
      %v972 = vadd.f32 %v939, %v956
      %v973 = vadd.f32 %v940, %v956
      %v974 = vadd.f32 %v941, %v956
      %v975 = vadd.f32 %v942, %v956
      %v976 = vadd.f32 %v943, %v956
      %v977 = vadd.f32 %v944, %v956
      %v978 = vadd.f32 %v945, %v956
      %v979 = vadd.f32 %v946, %v956
      %v980 = vadd.f32 %v947, %v956
      %v981 = vadd.f32 %v948, %v956
      %v982 = vadd.f32 %v949, %v956
      %v983 = vadd.f32 %v950, %v956
      %v984 = vadd.f32 %v951, %v956
      %v985 = vadd.f32 %v952, %v956
      %v986 = vadd.f32 %v953, %v956
      %v987 = vadd.f32 %v954, %v956
      %v988 = vadd.f32 %v955, %v956
      %v989 = vmul.f32 %v957, 1.442695
      %v990 = vpow.pop %v989
      %v991 = vmul.f32 %v958, 1.442695
      %v992 = vpow.pop %v991
      %v993 = vmul.f32 %v959, 1.442695
      %v994 = vpow.pop %v993
      %v995 = vmul.f32 %v960, 1.442695
      %v996 = vpow.pop %v995
      %v997 = vmul.f32 %v961, 1.442695
      %v998 = vpow.pop %v997
      %v999 = vmul.f32 %v962, 1.442695
      %v1000 = vpow.pop %v999
      %v1001 = vmul.f32 %v963, 1.442695
      %v1002 = vpow.pop %v1001
      %v1003 = vmul.f32 %v964, 1.442695
      %v1004 = vpow.pop %v1003
      %v1005 = vmul.f32 %v965, 1.442695
      %v1006 = vpow.pop %v1005
      %v1007 = vmul.f32 %v966, 1.442695
      %v1008 = vpow.pop %v1007
      %v1009 = vmul.f32 %v967, 1.442695
      %v1010 = vpow.pop %v1009
      %v1011 = vmul.f32 %v968, 1.442695
      %v1012 = vpow.pop %v1011
      %v1013 = vmul.f32 %v969, 1.442695
      %v1014 = vpow.pop %v1013
      %v1015 = vmul.f32 %v970, 1.442695
      %v1016 = vpow.pop %v1015
      %v1017 = vmul.f32 %v971, 1.442695
      %v1018 = vpow.pop %v1017
      %v1019 = vmul.f32 %v972, 1.442695
      %v1020 = vpow.pop %v1019
      %v1021 = vmul.f32 %v973, 1.442695
      %v1022 = vpow.pop %v1021
      %v1023 = vmul.f32 %v974, 1.442695
      %v1024 = vpow.pop %v1023
      %v1025 = vmul.f32 %v975, 1.442695
      %v1026 = vpow.pop %v1025
      %v1027 = vmul.f32 %v976, 1.442695
      %v1028 = vpow.pop %v1027
      %v1029 = vmul.f32 %v977, 1.442695
      %v1030 = vpow.pop %v1029
      %v1031 = vmul.f32 %v978, 1.442695
      %v1032 = vpow.pop %v1031
      %v1033 = vmul.f32 %v979, 1.442695
      %v1034 = vpow.pop %v1033
      %v1035 = vmul.f32 %v980, 1.442695
      %v1036 = vpow.pop %v1035
      %v1037 = vmul.f32 %v981, 1.442695
      %v1038 = vpow.pop %v1037
      %v1039 = vmul.f32 %v982, 1.442695
      %v1040 = vpow.pop %v1039
      %v1041 = vmul.f32 %v983, 1.442695
      %v1042 = vpow.pop %v1041
      %v1043 = vmul.f32 %v984, 1.442695
      %v1044 = vpow.pop %v1043
      %v1045 = vmul.f32 %v985, 1.442695
      %v1046 = vpow.pop %v1045
      %v1047 = vmul.f32 %v986, 1.442695
      %v1048 = vpow.pop %v1047
      %v1049 = vmul.f32 %v987, 1.442695
      %v1050 = vpow.pop %v1049
      %v1051 = vmul.f32 %v988, 1.442695
      %v1052 = vpow.pop %v1051
      %v1053 = vadd.f32 %v990, %v1006
      %v1054 = vadd.f32 %v992, %v1008
      %v1055 = vadd.f32 %v994, %v1010
      %v1056 = vadd.f32 %v996, %v1012
      %v1057 = vadd.f32 %v998, %v1014
      %v1058 = vadd.f32 %v1000, %v1016
      %v1059 = vadd.f32 %v1002, %v1018
      %v1060 = vadd.f32 %v1004, %v1020
      %v1061 = vadd.f32 %v1053, %v1022
      %v1062 = vadd.f32 %v1054, %v1024
      %v1063 = vadd.f32 %v1055, %v1026
      %v1064 = vadd.f32 %v1056, %v1028
      %v1065 = vadd.f32 %v1057, %v1030
      %v1066 = vadd.f32 %v1058, %v1032
      %v1067 = vadd.f32 %v1059, %v1034
      %v1068 = vadd.f32 %v1060, %v1036
      %v1069 = vadd.f32 %v1061, %v1038
      %v1070 = vadd.f32 %v1062, %v1040
      %v1071 = vadd.f32 %v1063, %v1042
      %v1072 = vadd.f32 %v1064, %v1044
      %v1073 = vadd.f32 %v1065, %v1046
      %v1074 = vadd.f32 %v1066, %v1048
      %v1075 = vadd.f32 %v1067, %v1050
      %v1076 = vadd.f32 %v1068, %v1052
      %v1077 = vadd.f32 %v1069, 0.0
      %v1078 = vadd.f32 %v1070, 0.0
      %v1079 = vadd.f32 %v1071, 0.0
      %v1080 = vadd.f32 %v1072, 0.0
      %v1081 = vadd.f32 %v1073, 0.0
      %v1082 = vadd.f32 %v1074, 0.0
      %v1083 = vadd.f32 %v1075, 0.0
      %v1084 = vadd.f32 %v1076, 0.0
      %s1085 = scalar_lea.vmem %s166, 4
      %v1086 = vld [vmem:[%s1085] sm:$0x7]
      %v1087 = vmul.f32 %v1086, %v1086
      %v1089 = vrot.slane %v1087, 1
      %v1091 = vadd.f32 %v1087, %v1089
      %v1092 = vrot.slane %v1087, 2
      %v1094 = vadd.f32 %v1091, %v1092
      %v1095 = vmul.f32 %v1094, -12.5
      %v1096 = vperm.slane %v1086, 0
      %v1097 = vmul.f32 %v220, %v1096
      %v1098 = vmul.f32 %v225, %v1096
      %v1099 = vmul.f32 %v230, %v1096
      %v1100 = vmul.f32 %v235, %v1096
      %v1101 = vmul.f32 %v240, %v1096
      %v1102 = vmul.f32 %v245, %v1096
      %v1103 = vmul.f32 %v250, %v1096
      %v1104 = vmul.f32 %v255, %v1096
      %v1105 = vmul.f32 %v260, %v1096
      %v1106 = vmul.f32 %v265, %v1096
      %v1107 = vmul.f32 %v270, %v1096
      %v1108 = vmul.f32 %v275, %v1096
      %v1109 = vmul.f32 %v280, %v1096
      %v1110 = vmul.f32 %v285, %v1096
      %v1111 = vmul.f32 %v290, %v1096
      %v1112 = vmul.f32 %v295, %v1096
      %v1113 = vmul.f32 %v300, %v1096
      %v1114 = vmul.f32 %v305, %v1096
      %v1115 = vmul.f32 %v310, %v1096
      %v1116 = vmul.f32 %v315, %v1096
      %v1117 = vmul.f32 %v320, %v1096
      %v1118 = vmul.f32 %v325, %v1096
      %v1119 = vmul.f32 %v330, %v1096
      %v1120 = vmul.f32 %v335, %v1096
      %v1121 = vmul.f32 %v340, %v1096
      %v1122 = vmul.f32 %v345, %v1096
      %v1123 = vmul.f32 %v350, %v1096
      %v1124 = vmul.f32 %v355, %v1096
      %v1125 = vmul.f32 %v360, %v1096
      %v1126 = vmul.f32 %v365, %v1096
      %v1127 = vmul.f32 %v370, %v1096
      %v1128 = vmul.f32 %v375, %v1096
      %v1129 = vperm.slane %v1086, 1
      %v1130 = vmul.f32 %v412, %v1129
      %v1131 = vmul.f32 %v416, %v1129
      %v1132 = vmul.f32 %v420, %v1129
      %v1133 = vmul.f32 %v424, %v1129
      %v1134 = vmul.f32 %v428, %v1129
      %v1135 = vmul.f32 %v432, %v1129
      %v1136 = vmul.f32 %v436, %v1129
      %v1137 = vmul.f32 %v440, %v1129
      %v1138 = vmul.f32 %v444, %v1129
      %v1139 = vmul.f32 %v448, %v1129
      %v1140 = vmul.f32 %v452, %v1129
      %v1141 = vmul.f32 %v456, %v1129
      %v1142 = vmul.f32 %v460, %v1129
      %v1143 = vmul.f32 %v464, %v1129
      %v1144 = vmul.f32 %v468, %v1129
      %v1145 = vmul.f32 %v472, %v1129
      %v1146 = vmul.f32 %v476, %v1129
      %v1147 = vmul.f32 %v480, %v1129
      %v1148 = vmul.f32 %v484, %v1129
      %v1149 = vmul.f32 %v488, %v1129
      %v1150 = vmul.f32 %v492, %v1129
      %v1151 = vmul.f32 %v496, %v1129
      %v1152 = vmul.f32 %v500, %v1129
      %v1153 = vmul.f32 %v504, %v1129
      %v1154 = vmul.f32 %v508, %v1129
      %v1155 = vmul.f32 %v512, %v1129
      %v1156 = vmul.f32 %v516, %v1129
      %v1157 = vmul.f32 %v520, %v1129
      %v1158 = vmul.f32 %v524, %v1129
      %v1159 = vmul.f32 %v528, %v1129
      %v1160 = vmul.f32 %v532, %v1129
      %v1161 = vmul.f32 %v536, %v1129
      %v1162 = vadd.f32 %v1097, %v1130
      %v1163 = vadd.f32 %v1098, %v1131
      %v1164 = vadd.f32 %v1099, %v1132
      %v1165 = vadd.f32 %v1100, %v1133
      %v1166 = vadd.f32 %v1101, %v1134
      %v1167 = vadd.f32 %v1102, %v1135
      %v1168 = vadd.f32 %v1103, %v1136
      %v1169 = vadd.f32 %v1104, %v1137
      %v1170 = vadd.f32 %v1105, %v1138
      %v1171 = vadd.f32 %v1106, %v1139
      %v1172 = vadd.f32 %v1107, %v1140
      %v1173 = vadd.f32 %v1108, %v1141
      %v1174 = vadd.f32 %v1109, %v1142
      %v1175 = vadd.f32 %v1110, %v1143
      %v1176 = vadd.f32 %v1111, %v1144
      %v1177 = vadd.f32 %v1112, %v1145
      %v1178 = vadd.f32 %v1113, %v1146
      %v1179 = vadd.f32 %v1114, %v1147
      %v1180 = vadd.f32 %v1115, %v1148
      %v1181 = vadd.f32 %v1116, %v1149
      %v1182 = vadd.f32 %v1117, %v1150
      %v1183 = vadd.f32 %v1118, %v1151
      %v1184 = vadd.f32 %v1119, %v1152
      %v1185 = vadd.f32 %v1120, %v1153
      %v1186 = vadd.f32 %v1121, %v1154
      %v1187 = vadd.f32 %v1122, %v1155
      %v1188 = vadd.f32 %v1123, %v1156
      %v1189 = vadd.f32 %v1124, %v1157
      %v1190 = vadd.f32 %v1125, %v1158
      %v1191 = vadd.f32 %v1126, %v1159
      %v1192 = vadd.f32 %v1127, %v1160
      %v1193 = vadd.f32 %v1128, %v1161
      %v1194 = vperm.slane %v1086, 2
      %v1195 = vmul.f32 %v605, %v1194
      %v1196 = vmul.f32 %v609, %v1194
      %v1197 = vmul.f32 %v613, %v1194
      %v1198 = vmul.f32 %v617, %v1194
      %v1199 = vmul.f32 %v621, %v1194
      %v1200 = vmul.f32 %v625, %v1194
      %v1201 = vmul.f32 %v629, %v1194
      %v1202 = vmul.f32 %v633, %v1194
      %v1203 = vmul.f32 %v637, %v1194
      %v1204 = vmul.f32 %v641, %v1194
      %v1205 = vmul.f32 %v645, %v1194
      %v1206 = vmul.f32 %v649, %v1194
      %v1207 = vmul.f32 %v653, %v1194
      %v1208 = vmul.f32 %v657, %v1194
      %v1209 = vmul.f32 %v661, %v1194
      %v1210 = vmul.f32 %v665, %v1194
      %v1211 = vmul.f32 %v669, %v1194
      %v1212 = vmul.f32 %v673, %v1194
      %v1213 = vmul.f32 %v677, %v1194
      %v1214 = vmul.f32 %v681, %v1194
      %v1215 = vmul.f32 %v685, %v1194
      %v1216 = vmul.f32 %v689, %v1194
      %v1217 = vmul.f32 %v693, %v1194
      %v1218 = vmul.f32 %v697, %v1194
      %v1219 = vmul.f32 %v701, %v1194
      %v1220 = vmul.f32 %v705, %v1194
      %v1221 = vmul.f32 %v709, %v1194
      %v1222 = vmul.f32 %v713, %v1194
      %v1223 = vmul.f32 %v717, %v1194
      %v1224 = vmul.f32 %v721, %v1194
      %v1225 = vmul.f32 %v725, %v1194
      %v1226 = vmul.f32 %v729, %v1194
      %v1227 = vadd.f32 %v1162, %v1195
      %v1228 = vadd.f32 %v1163, %v1196
      %v1229 = vadd.f32 %v1164, %v1197
      %v1230 = vadd.f32 %v1165, %v1198
      %v1231 = vadd.f32 %v1166, %v1199
      %v1232 = vadd.f32 %v1167, %v1200
      %v1233 = vadd.f32 %v1168, %v1201
      %v1234 = vadd.f32 %v1169, %v1202
      %v1235 = vadd.f32 %v1170, %v1203
      %v1236 = vadd.f32 %v1171, %v1204
      %v1237 = vadd.f32 %v1172, %v1205
      %v1238 = vadd.f32 %v1173, %v1206
      %v1239 = vadd.f32 %v1174, %v1207
      %v1240 = vadd.f32 %v1175, %v1208
      %v1241 = vadd.f32 %v1176, %v1209
      %v1242 = vadd.f32 %v1177, %v1210
      %v1243 = vadd.f32 %v1178, %v1211
      %v1244 = vadd.f32 %v1179, %v1212
      %v1245 = vadd.f32 %v1180, %v1213
      %v1246 = vadd.f32 %v1181, %v1214
      %v1247 = vadd.f32 %v1182, %v1215
      %v1248 = vadd.f32 %v1183, %v1216
      %v1249 = vadd.f32 %v1184, %v1217
      %v1250 = vadd.f32 %v1185, %v1218
      %v1251 = vadd.f32 %v1186, %v1219
      %v1252 = vadd.f32 %v1187, %v1220
      %v1253 = vadd.f32 %v1188, %v1221
      %v1254 = vadd.f32 %v1189, %v1222
      %v1255 = vadd.f32 %v1190, %v1223
      %v1256 = vadd.f32 %v1191, %v1224
      %v1257 = vadd.f32 %v1192, %v1225
      %v1258 = vadd.f32 %v1193, %v1226
      %v1259 = vadd.f32 %v1227, %v798
      %v1260 = vadd.f32 %v1228, %v802
      %v1261 = vadd.f32 %v1229, %v806
      %v1262 = vadd.f32 %v1230, %v810
      %v1263 = vadd.f32 %v1231, %v814
      %v1264 = vadd.f32 %v1232, %v818
      %v1265 = vadd.f32 %v1233, %v822
      %v1266 = vadd.f32 %v1234, %v826
      %v1267 = vadd.f32 %v1235, %v830
      %v1268 = vadd.f32 %v1236, %v834
      %v1269 = vadd.f32 %v1237, %v838
      %v1270 = vadd.f32 %v1238, %v842
      %v1271 = vadd.f32 %v1239, %v846
      %v1272 = vadd.f32 %v1240, %v850
      %v1273 = vadd.f32 %v1241, %v854
      %v1274 = vadd.f32 %v1242, %v858
      %v1275 = vadd.f32 %v1243, %v862
      %v1276 = vadd.f32 %v1244, %v866
      %v1277 = vadd.f32 %v1245, %v870
      %v1278 = vadd.f32 %v1246, %v874
      %v1279 = vadd.f32 %v1247, %v878
      %v1280 = vadd.f32 %v1248, %v882
      %v1281 = vadd.f32 %v1249, %v886
      %v1282 = vadd.f32 %v1250, %v890
      %v1283 = vadd.f32 %v1251, %v894
      %v1284 = vadd.f32 %v1252, %v898
      %v1285 = vadd.f32 %v1253, %v902
      %v1286 = vadd.f32 %v1254, %v906
      %v1287 = vadd.f32 %v1255, %v910
      %v1288 = vadd.f32 %v1256, %v914
      %v1289 = vadd.f32 %v1257, %v918
      %v1290 = vadd.f32 %v1258, %v922
      %v1291 = vperm.slane %v1095, 0
      %v1292 = vadd.f32 %v1259, %v1291
      %v1293 = vadd.f32 %v1260, %v1291
      %v1294 = vadd.f32 %v1261, %v1291
      %v1295 = vadd.f32 %v1262, %v1291
      %v1296 = vadd.f32 %v1263, %v1291
      %v1297 = vadd.f32 %v1264, %v1291
      %v1298 = vadd.f32 %v1265, %v1291
      %v1299 = vadd.f32 %v1266, %v1291
      %v1300 = vadd.f32 %v1267, %v1291
      %v1301 = vadd.f32 %v1268, %v1291
      %v1302 = vadd.f32 %v1269, %v1291
      %v1303 = vadd.f32 %v1270, %v1291
      %v1304 = vadd.f32 %v1271, %v1291
      %v1305 = vadd.f32 %v1272, %v1291
      %v1306 = vadd.f32 %v1273, %v1291
      %v1307 = vadd.f32 %v1274, %v1291
      %v1308 = vadd.f32 %v1275, %v1291
      %v1309 = vadd.f32 %v1276, %v1291
      %v1310 = vadd.f32 %v1277, %v1291
      %v1311 = vadd.f32 %v1278, %v1291
      %v1312 = vadd.f32 %v1279, %v1291
      %v1313 = vadd.f32 %v1280, %v1291
      %v1314 = vadd.f32 %v1281, %v1291
      %v1315 = vadd.f32 %v1282, %v1291
      %v1316 = vadd.f32 %v1283, %v1291
      %v1317 = vadd.f32 %v1284, %v1291
      %v1318 = vadd.f32 %v1285, %v1291
      %v1319 = vadd.f32 %v1286, %v1291
      %v1320 = vadd.f32 %v1287, %v1291
      %v1321 = vadd.f32 %v1288, %v1291
      %v1322 = vadd.f32 %v1289, %v1291
      %v1323 = vadd.f32 %v1290, %v1291
      %v1324 = vmul.f32 %v1292, 1.442695
      %v1325 = vpow.pop %v1324
      %v1326 = vmul.f32 %v1293, 1.442695
      %v1327 = vpow.pop %v1326
      %v1328 = vmul.f32 %v1294, 1.442695
      %v1329 = vpow.pop %v1328
      %v1330 = vmul.f32 %v1295, 1.442695
      %v1331 = vpow.pop %v1330
      %v1332 = vmul.f32 %v1296, 1.442695
      %v1333 = vpow.pop %v1332
      %v1334 = vmul.f32 %v1297, 1.442695
      %v1335 = vpow.pop %v1334
      %v1336 = vmul.f32 %v1298, 1.442695
      %v1337 = vpow.pop %v1336
      %v1338 = vmul.f32 %v1299, 1.442695
      %v1339 = vpow.pop %v1338
      %v1340 = vmul.f32 %v1300, 1.442695
      %v1341 = vpow.pop %v1340
      %v1342 = vmul.f32 %v1301, 1.442695
      %v1343 = vpow.pop %v1342
      %v1344 = vmul.f32 %v1302, 1.442695
      %v1345 = vpow.pop %v1344
      %v1346 = vmul.f32 %v1303, 1.442695
      %v1347 = vpow.pop %v1346
      %v1348 = vmul.f32 %v1304, 1.442695
      %v1349 = vpow.pop %v1348
      %v1350 = vmul.f32 %v1305, 1.442695
      %v1351 = vpow.pop %v1350
      %v1352 = vmul.f32 %v1306, 1.442695
      %v1353 = vpow.pop %v1352
      %v1354 = vmul.f32 %v1307, 1.442695
      %v1355 = vpow.pop %v1354
      %v1356 = vmul.f32 %v1308, 1.442695
      %v1357 = vpow.pop %v1356
      %v1358 = vmul.f32 %v1309, 1.442695
      %v1359 = vpow.pop %v1358
      %v1360 = vmul.f32 %v1310, 1.442695
      %v1361 = vpow.pop %v1360
      %v1362 = vmul.f32 %v1311, 1.442695
      %v1363 = vpow.pop %v1362
      %v1364 = vmul.f32 %v1312, 1.442695
      %v1365 = vpow.pop %v1364
      %v1366 = vmul.f32 %v1313, 1.442695
      %v1367 = vpow.pop %v1366
      %v1368 = vmul.f32 %v1314, 1.442695
      %v1369 = vpow.pop %v1368
      %v1370 = vmul.f32 %v1315, 1.442695
      %v1371 = vpow.pop %v1370
      %v1372 = vmul.f32 %v1316, 1.442695
      %v1373 = vpow.pop %v1372
      %v1374 = vmul.f32 %v1317, 1.442695
      %v1375 = vpow.pop %v1374
      %v1376 = vmul.f32 %v1318, 1.442695
      %v1377 = vpow.pop %v1376
      %v1378 = vmul.f32 %v1319, 1.442695
      %v1379 = vpow.pop %v1378
      %v1380 = vmul.f32 %v1320, 1.442695
      %v1381 = vpow.pop %v1380
      %v1382 = vmul.f32 %v1321, 1.442695
      %v1383 = vpow.pop %v1382
      %v1384 = vmul.f32 %v1322, 1.442695
      %v1385 = vpow.pop %v1384
      %v1386 = vmul.f32 %v1323, 1.442695
      %v1387 = vpow.pop %v1386
      %v1388 = vadd.f32 %v1325, %v1341
      %v1389 = vadd.f32 %v1327, %v1343
      %v1390 = vadd.f32 %v1329, %v1345
      %v1391 = vadd.f32 %v1331, %v1347
      %v1392 = vadd.f32 %v1333, %v1349
      %v1393 = vadd.f32 %v1335, %v1351
      %v1394 = vadd.f32 %v1337, %v1353
      %v1395 = vadd.f32 %v1339, %v1355
      %v1396 = vadd.f32 %v1388, %v1357
      %v1397 = vadd.f32 %v1389, %v1359
      %v1398 = vadd.f32 %v1390, %v1361
      %v1399 = vadd.f32 %v1391, %v1363
      %v1400 = vadd.f32 %v1392, %v1365
      %v1401 = vadd.f32 %v1393, %v1367
      %v1402 = vadd.f32 %v1394, %v1369
      %v1403 = vadd.f32 %v1395, %v1371
      %v1404 = vadd.f32 %v1396, %v1373
      %v1405 = vadd.f32 %v1397, %v1375
      %v1406 = vadd.f32 %v1398, %v1377
      %v1407 = vadd.f32 %v1399, %v1379
      %v1408 = vadd.f32 %v1400, %v1381
      %v1409 = vadd.f32 %v1401, %v1383
      %v1410 = vadd.f32 %v1402, %v1385
      %v1411 = vadd.f32 %v1403, %v1387
      %v1412 = vadd.f32 %v1077, %v1404
      %v1413 = vadd.f32 %v1078, %v1405
      %v1414 = vadd.f32 %v1079, %v1406
      %v1415 = vadd.f32 %v1080, %v1407
      %v1416 = vadd.f32 %v1081, %v1408
      %v1417 = vadd.f32 %v1082, %v1409
      %v1418 = vadd.f32 %v1083, %v1410
      %v1419 = vadd.f32 %v1084, %v1411
      %s1420 = scalar_lea.vmem %s166, 8
      %v1421 = vld [vmem:[%s1420] sm:$0x7]
      %v1422 = vmul.f32 %v1421, %v1421
      %v1424 = vrot.slane %v1422, 1
      %v1426 = vadd.f32 %v1422, %v1424
      %v1427 = vrot.slane %v1422, 2
      %v1429 = vadd.f32 %v1426, %v1427
      %v1430 = vmul.f32 %v1429, -12.5
      %v1431 = vperm.slane %v1421, 0
      %v1432 = vmul.f32 %v220, %v1431
      %v1433 = vmul.f32 %v225, %v1431
      %v1434 = vmul.f32 %v230, %v1431
      %v1435 = vmul.f32 %v235, %v1431
      %v1436 = vmul.f32 %v240, %v1431
      %v1437 = vmul.f32 %v245, %v1431
      %v1438 = vmul.f32 %v250, %v1431
      %v1439 = vmul.f32 %v255, %v1431
      %v1440 = vmul.f32 %v260, %v1431
      %v1441 = vmul.f32 %v265, %v1431
      %v1442 = vmul.f32 %v270, %v1431
      %v1443 = vmul.f32 %v275, %v1431
      %v1444 = vmul.f32 %v280, %v1431
      %v1445 = vmul.f32 %v285, %v1431
      %v1446 = vmul.f32 %v290, %v1431
      %v1447 = vmul.f32 %v295, %v1431
      %v1448 = vmul.f32 %v300, %v1431
      %v1449 = vmul.f32 %v305, %v1431
      %v1450 = vmul.f32 %v310, %v1431
      %v1451 = vmul.f32 %v315, %v1431
      %v1452 = vmul.f32 %v320, %v1431
      %v1453 = vmul.f32 %v325, %v1431
      %v1454 = vmul.f32 %v330, %v1431
      %v1455 = vmul.f32 %v335, %v1431
      %v1456 = vmul.f32 %v340, %v1431
      %v1457 = vmul.f32 %v345, %v1431
      %v1458 = vmul.f32 %v350, %v1431
      %v1459 = vmul.f32 %v355, %v1431
      %v1460 = vmul.f32 %v360, %v1431
      %v1461 = vmul.f32 %v365, %v1431
      %v1462 = vmul.f32 %v370, %v1431
      %v1463 = vmul.f32 %v375, %v1431
      %v1464 = vperm.slane %v1421, 1
      %v1465 = vmul.f32 %v412, %v1464
      %v1466 = vmul.f32 %v416, %v1464
      %v1467 = vmul.f32 %v420, %v1464
      %v1468 = vmul.f32 %v424, %v1464
      %v1469 = vmul.f32 %v428, %v1464
      %v1470 = vmul.f32 %v432, %v1464
      %v1471 = vmul.f32 %v436, %v1464
      %v1472 = vmul.f32 %v440, %v1464
      %v1473 = vmul.f32 %v444, %v1464
      %v1474 = vmul.f32 %v448, %v1464
      %v1475 = vmul.f32 %v452, %v1464
      %v1476 = vmul.f32 %v456, %v1464
      %v1477 = vmul.f32 %v460, %v1464
      %v1478 = vmul.f32 %v464, %v1464
      %v1479 = vmul.f32 %v468, %v1464
      %v1480 = vmul.f32 %v472, %v1464
      %v1481 = vmul.f32 %v476, %v1464
      %v1482 = vmul.f32 %v480, %v1464
      %v1483 = vmul.f32 %v484, %v1464
      %v1484 = vmul.f32 %v488, %v1464
      %v1485 = vmul.f32 %v492, %v1464
      %v1486 = vmul.f32 %v496, %v1464
      %v1487 = vmul.f32 %v500, %v1464
      %v1488 = vmul.f32 %v504, %v1464
      %v1489 = vmul.f32 %v508, %v1464
      %v1490 = vmul.f32 %v512, %v1464
      %v1491 = vmul.f32 %v516, %v1464
      %v1492 = vmul.f32 %v520, %v1464
      %v1493 = vmul.f32 %v524, %v1464
      %v1494 = vmul.f32 %v528, %v1464
      %v1495 = vmul.f32 %v532, %v1464
      %v1496 = vmul.f32 %v536, %v1464
      %v1497 = vadd.f32 %v1432, %v1465
      %v1498 = vadd.f32 %v1433, %v1466
      %v1499 = vadd.f32 %v1434, %v1467
      %v1500 = vadd.f32 %v1435, %v1468
      %v1501 = vadd.f32 %v1436, %v1469
      %v1502 = vadd.f32 %v1437, %v1470
      %v1503 = vadd.f32 %v1438, %v1471
      %v1504 = vadd.f32 %v1439, %v1472
      %v1505 = vadd.f32 %v1440, %v1473
      %v1506 = vadd.f32 %v1441, %v1474
      %v1507 = vadd.f32 %v1442, %v1475
      %v1508 = vadd.f32 %v1443, %v1476
      %v1509 = vadd.f32 %v1444, %v1477
      %v1510 = vadd.f32 %v1445, %v1478
      %v1511 = vadd.f32 %v1446, %v1479
      %v1512 = vadd.f32 %v1447, %v1480
      %v1513 = vadd.f32 %v1448, %v1481
      %v1514 = vadd.f32 %v1449, %v1482
      %v1515 = vadd.f32 %v1450, %v1483
      %v1516 = vadd.f32 %v1451, %v1484
      %v1517 = vadd.f32 %v1452, %v1485
      %v1518 = vadd.f32 %v1453, %v1486
      %v1519 = vadd.f32 %v1454, %v1487
      %v1520 = vadd.f32 %v1455, %v1488
      %v1521 = vadd.f32 %v1456, %v1489
      %v1522 = vadd.f32 %v1457, %v1490
      %v1523 = vadd.f32 %v1458, %v1491
      %v1524 = vadd.f32 %v1459, %v1492
      %v1525 = vadd.f32 %v1460, %v1493
      %v1526 = vadd.f32 %v1461, %v1494
      %v1527 = vadd.f32 %v1462, %v1495
      %v1528 = vadd.f32 %v1463, %v1496
      %v1529 = vperm.slane %v1421, 2
      %v1530 = vmul.f32 %v605, %v1529
      %v1531 = vmul.f32 %v609, %v1529
      %v1532 = vmul.f32 %v613, %v1529
      %v1533 = vmul.f32 %v617, %v1529
      %v1534 = vmul.f32 %v621, %v1529
      %v1535 = vmul.f32 %v625, %v1529
      %v1536 = vmul.f32 %v629, %v1529
      %v1537 = vmul.f32 %v633, %v1529
      %v1538 = vmul.f32 %v637, %v1529
      %v1539 = vmul.f32 %v641, %v1529
      %v1540 = vmul.f32 %v645, %v1529
      %v1541 = vmul.f32 %v649, %v1529
      %v1542 = vmul.f32 %v653, %v1529
      %v1543 = vmul.f32 %v657, %v1529
      %v1544 = vmul.f32 %v661, %v1529
      %v1545 = vmul.f32 %v665, %v1529
      %v1546 = vmul.f32 %v669, %v1529
      %v1547 = vmul.f32 %v673, %v1529
      %v1548 = vmul.f32 %v677, %v1529
      %v1549 = vmul.f32 %v681, %v1529
      %v1550 = vmul.f32 %v685, %v1529
      %v1551 = vmul.f32 %v689, %v1529
      %v1552 = vmul.f32 %v693, %v1529
      %v1553 = vmul.f32 %v697, %v1529
      %v1554 = vmul.f32 %v701, %v1529
      %v1555 = vmul.f32 %v705, %v1529
      %v1556 = vmul.f32 %v709, %v1529
      %v1557 = vmul.f32 %v713, %v1529
      %v1558 = vmul.f32 %v717, %v1529
      %v1559 = vmul.f32 %v721, %v1529
      %v1560 = vmul.f32 %v725, %v1529
      %v1561 = vmul.f32 %v729, %v1529
      %v1562 = vadd.f32 %v1497, %v1530
      %v1563 = vadd.f32 %v1498, %v1531
      %v1564 = vadd.f32 %v1499, %v1532
      %v1565 = vadd.f32 %v1500, %v1533
      %v1566 = vadd.f32 %v1501, %v1534
      %v1567 = vadd.f32 %v1502, %v1535
      %v1568 = vadd.f32 %v1503, %v1536
      %v1569 = vadd.f32 %v1504, %v1537
      %v1570 = vadd.f32 %v1505, %v1538
      %v1571 = vadd.f32 %v1506, %v1539
      %v1572 = vadd.f32 %v1507, %v1540
      %v1573 = vadd.f32 %v1508, %v1541
      %v1574 = vadd.f32 %v1509, %v1542
      %v1575 = vadd.f32 %v1510, %v1543
      %v1576 = vadd.f32 %v1511, %v1544
      %v1577 = vadd.f32 %v1512, %v1545
      %v1578 = vadd.f32 %v1513, %v1546
      %v1579 = vadd.f32 %v1514, %v1547
      %v1580 = vadd.f32 %v1515, %v1548
      %v1581 = vadd.f32 %v1516, %v1549
      %v1582 = vadd.f32 %v1517, %v1550
      %v1583 = vadd.f32 %v1518, %v1551
      %v1584 = vadd.f32 %v1519, %v1552
      %v1585 = vadd.f32 %v1520, %v1553
      %v1586 = vadd.f32 %v1521, %v1554
      %v1587 = vadd.f32 %v1522, %v1555
      %v1588 = vadd.f32 %v1523, %v1556
      %v1589 = vadd.f32 %v1524, %v1557
      %v1590 = vadd.f32 %v1525, %v1558
      %v1591 = vadd.f32 %v1526, %v1559
      %v1592 = vadd.f32 %v1527, %v1560
      %v1593 = vadd.f32 %v1528, %v1561
      %v1594 = vadd.f32 %v1562, %v798
      %v1595 = vadd.f32 %v1563, %v802
      %v1596 = vadd.f32 %v1564, %v806
      %v1597 = vadd.f32 %v1565, %v810
      %v1598 = vadd.f32 %v1566, %v814
      %v1599 = vadd.f32 %v1567, %v818
      %v1600 = vadd.f32 %v1568, %v822
      %v1601 = vadd.f32 %v1569, %v826
      %v1602 = vadd.f32 %v1570, %v830
      %v1603 = vadd.f32 %v1571, %v834
      %v1604 = vadd.f32 %v1572, %v838
      %v1605 = vadd.f32 %v1573, %v842
      %v1606 = vadd.f32 %v1574, %v846
      %v1607 = vadd.f32 %v1575, %v850
      %v1608 = vadd.f32 %v1576, %v854
      %v1609 = vadd.f32 %v1577, %v858
      %v1610 = vadd.f32 %v1578, %v862
      %v1611 = vadd.f32 %v1579, %v866
      %v1612 = vadd.f32 %v1580, %v870
      %v1613 = vadd.f32 %v1581, %v874
      %v1614 = vadd.f32 %v1582, %v878
      %v1615 = vadd.f32 %v1583, %v882
      %v1616 = vadd.f32 %v1584, %v886
      %v1617 = vadd.f32 %v1585, %v890
      %v1618 = vadd.f32 %v1586, %v894
      %v1619 = vadd.f32 %v1587, %v898
      %v1620 = vadd.f32 %v1588, %v902
      %v1621 = vadd.f32 %v1589, %v906
      %v1622 = vadd.f32 %v1590, %v910
      %v1623 = vadd.f32 %v1591, %v914
      %v1624 = vadd.f32 %v1592, %v918
      %v1625 = vadd.f32 %v1593, %v922
      %v1626 = vperm.slane %v1430, 0
      %v1627 = vadd.f32 %v1594, %v1626
      %v1628 = vadd.f32 %v1595, %v1626
      %v1629 = vadd.f32 %v1596, %v1626
      %v1630 = vadd.f32 %v1597, %v1626
      %v1631 = vadd.f32 %v1598, %v1626
      %v1632 = vadd.f32 %v1599, %v1626
      %v1633 = vadd.f32 %v1600, %v1626
      %v1634 = vadd.f32 %v1601, %v1626
      %v1635 = vadd.f32 %v1602, %v1626
      %v1636 = vadd.f32 %v1603, %v1626
      %v1637 = vadd.f32 %v1604, %v1626
      %v1638 = vadd.f32 %v1605, %v1626
      %v1639 = vadd.f32 %v1606, %v1626
      %v1640 = vadd.f32 %v1607, %v1626
      %v1641 = vadd.f32 %v1608, %v1626
      %v1642 = vadd.f32 %v1609, %v1626
      %v1643 = vadd.f32 %v1610, %v1626
      %v1644 = vadd.f32 %v1611, %v1626
      %v1645 = vadd.f32 %v1612, %v1626
      %v1646 = vadd.f32 %v1613, %v1626
      %v1647 = vadd.f32 %v1614, %v1626
      %v1648 = vadd.f32 %v1615, %v1626
      %v1649 = vadd.f32 %v1616, %v1626
      %v1650 = vadd.f32 %v1617, %v1626
      %v1651 = vadd.f32 %v1618, %v1626
      %v1652 = vadd.f32 %v1619, %v1626
      %v1653 = vadd.f32 %v1620, %v1626
      %v1654 = vadd.f32 %v1621, %v1626
      %v1655 = vadd.f32 %v1622, %v1626
      %v1656 = vadd.f32 %v1623, %v1626
      %v1657 = vadd.f32 %v1624, %v1626
      %v1658 = vadd.f32 %v1625, %v1626
      %v1659 = vmul.f32 %v1627, 1.442695
      %v1660 = vpow.pop %v1659
      %v1661 = vmul.f32 %v1628, 1.442695
      %v1662 = vpow.pop %v1661
      %v1663 = vmul.f32 %v1629, 1.442695
      %v1664 = vpow.pop %v1663
      %v1665 = vmul.f32 %v1630, 1.442695
      %v1666 = vpow.pop %v1665
      %v1667 = vmul.f32 %v1631, 1.442695
      %v1668 = vpow.pop %v1667
      %v1669 = vmul.f32 %v1632, 1.442695
      %v1670 = vpow.pop %v1669
      %v1671 = vmul.f32 %v1633, 1.442695
      %v1672 = vpow.pop %v1671
      %v1673 = vmul.f32 %v1634, 1.442695
      %v1674 = vpow.pop %v1673
      %v1675 = vmul.f32 %v1635, 1.442695
      %v1676 = vpow.pop %v1675
      %v1677 = vmul.f32 %v1636, 1.442695
      %v1678 = vpow.pop %v1677
      %v1679 = vmul.f32 %v1637, 1.442695
      %v1680 = vpow.pop %v1679
      %v1681 = vmul.f32 %v1638, 1.442695
      %v1682 = vpow.pop %v1681
      %v1683 = vmul.f32 %v1639, 1.442695
      %v1684 = vpow.pop %v1683
      %v1685 = vmul.f32 %v1640, 1.442695
      %v1686 = vpow.pop %v1685
      %v1687 = vmul.f32 %v1641, 1.442695
      %v1688 = vpow.pop %v1687
      %v1689 = vmul.f32 %v1642, 1.442695
      %v1690 = vpow.pop %v1689
      %v1691 = vmul.f32 %v1643, 1.442695
      %v1692 = vpow.pop %v1691
      %v1693 = vmul.f32 %v1644, 1.442695
      %v1694 = vpow.pop %v1693
      %v1695 = vmul.f32 %v1645, 1.442695
      %v1696 = vpow.pop %v1695
      %v1697 = vmul.f32 %v1646, 1.442695
      %v1698 = vpow.pop %v1697
      %v1699 = vmul.f32 %v1647, 1.442695
      %v1700 = vpow.pop %v1699
      %v1701 = vmul.f32 %v1648, 1.442695
      %v1702 = vpow.pop %v1701
      %v1703 = vmul.f32 %v1649, 1.442695
      %v1704 = vpow.pop %v1703
      %v1705 = vmul.f32 %v1650, 1.442695
      %v1706 = vpow.pop %v1705
      %v1707 = vmul.f32 %v1651, 1.442695
      %v1708 = vpow.pop %v1707
      %v1709 = vmul.f32 %v1652, 1.442695
      %v1710 = vpow.pop %v1709
      %v1711 = vmul.f32 %v1653, 1.442695
      %v1712 = vpow.pop %v1711
      %v1713 = vmul.f32 %v1654, 1.442695
      %v1714 = vpow.pop %v1713
      %v1715 = vmul.f32 %v1655, 1.442695
      %v1716 = vpow.pop %v1715
      %v1717 = vmul.f32 %v1656, 1.442695
      %v1718 = vpow.pop %v1717
      %v1719 = vmul.f32 %v1657, 1.442695
      %v1720 = vpow.pop %v1719
      %v1721 = vmul.f32 %v1658, 1.442695
      %v1722 = vpow.pop %v1721
      %v1723 = vadd.f32 %v1660, %v1676
      %v1724 = vadd.f32 %v1662, %v1678
      %v1725 = vadd.f32 %v1664, %v1680
      %v1726 = vadd.f32 %v1666, %v1682
      %v1727 = vadd.f32 %v1668, %v1684
      %v1728 = vadd.f32 %v1670, %v1686
      %v1729 = vadd.f32 %v1672, %v1688
      %v1730 = vadd.f32 %v1674, %v1690
      %v1731 = vadd.f32 %v1723, %v1692
      %v1732 = vadd.f32 %v1724, %v1694
      %v1733 = vadd.f32 %v1725, %v1696
      %v1734 = vadd.f32 %v1726, %v1698
      %v1735 = vadd.f32 %v1727, %v1700
      %v1736 = vadd.f32 %v1728, %v1702
      %v1737 = vadd.f32 %v1729, %v1704
      %v1738 = vadd.f32 %v1730, %v1706
      %v1739 = vadd.f32 %v1731, %v1708
      %v1740 = vadd.f32 %v1732, %v1710
      %v1741 = vadd.f32 %v1733, %v1712
      %v1742 = vadd.f32 %v1734, %v1714
      %v1743 = vadd.f32 %v1735, %v1716
      %v1744 = vadd.f32 %v1736, %v1718
      %v1745 = vadd.f32 %v1737, %v1720
      %v1746 = vadd.f32 %v1738, %v1722
      %v1747 = vadd.f32 %v1412, %v1739
      %v1748 = vadd.f32 %v1413, %v1740
      %v1749 = vadd.f32 %v1414, %v1741
      %v1750 = vadd.f32 %v1415, %v1742
      %v1751 = vadd.f32 %v1416, %v1743
      %v1752 = vadd.f32 %v1417, %v1744
      %v1753 = vadd.f32 %v1418, %v1745
      %v1754 = vadd.f32 %v1419, %v1746
      %s1755 = scalar_lea.vmem %s166, 12
      %v1756 = vld [vmem:[%s1755] sm:$0x7]
      %v1757 = vmul.f32 %v1756, %v1756
      %v1759 = vrot.slane %v1757, 1
      %v1761 = vadd.f32 %v1757, %v1759
      %v1762 = vrot.slane %v1757, 2
      %v1764 = vadd.f32 %v1761, %v1762
      %v1765 = vmul.f32 %v1764, -12.5
      %v1766 = vperm.slane %v1756, 0
      %v1767 = vmul.f32 %v220, %v1766
      %v1768 = vmul.f32 %v225, %v1766
      %v1769 = vmul.f32 %v230, %v1766
      %v1770 = vmul.f32 %v235, %v1766
      %v1771 = vmul.f32 %v240, %v1766
      %v1772 = vmul.f32 %v245, %v1766
      %v1773 = vmul.f32 %v250, %v1766
      %v1774 = vmul.f32 %v255, %v1766
      %v1775 = vmul.f32 %v260, %v1766
      %v1776 = vmul.f32 %v265, %v1766
      %v1777 = vmul.f32 %v270, %v1766
      %v1778 = vmul.f32 %v275, %v1766
      %v1779 = vmul.f32 %v280, %v1766
      %v1780 = vmul.f32 %v285, %v1766
      %v1781 = vmul.f32 %v290, %v1766
      %v1782 = vmul.f32 %v295, %v1766
      %v1783 = vmul.f32 %v300, %v1766
      %v1784 = vmul.f32 %v305, %v1766
      %v1785 = vmul.f32 %v310, %v1766
      %v1786 = vmul.f32 %v315, %v1766
      %v1787 = vmul.f32 %v320, %v1766
      %v1788 = vmul.f32 %v325, %v1766
      %v1789 = vmul.f32 %v330, %v1766
      %v1790 = vmul.f32 %v335, %v1766
      %v1791 = vmul.f32 %v340, %v1766
      %v1792 = vmul.f32 %v345, %v1766
      %v1793 = vmul.f32 %v350, %v1766
      %v1794 = vmul.f32 %v355, %v1766
      %v1795 = vmul.f32 %v360, %v1766
      %v1796 = vmul.f32 %v365, %v1766
      %v1797 = vmul.f32 %v370, %v1766
      %v1798 = vmul.f32 %v375, %v1766
      %v1799 = vperm.slane %v1756, 1
      %v1800 = vmul.f32 %v412, %v1799
      %v1801 = vmul.f32 %v416, %v1799
      %v1802 = vmul.f32 %v420, %v1799
      %v1803 = vmul.f32 %v424, %v1799
      %v1804 = vmul.f32 %v428, %v1799
      %v1805 = vmul.f32 %v432, %v1799
      %v1806 = vmul.f32 %v436, %v1799
      %v1807 = vmul.f32 %v440, %v1799
      %v1808 = vmul.f32 %v444, %v1799
      %v1809 = vmul.f32 %v448, %v1799
      %v1810 = vmul.f32 %v452, %v1799
      %v1811 = vmul.f32 %v456, %v1799
      %v1812 = vmul.f32 %v460, %v1799
      %v1813 = vmul.f32 %v464, %v1799
      %v1814 = vmul.f32 %v468, %v1799
      %v1815 = vmul.f32 %v472, %v1799
      %v1816 = vmul.f32 %v476, %v1799
      %v1817 = vmul.f32 %v480, %v1799
      %v1818 = vmul.f32 %v484, %v1799
      %v1819 = vmul.f32 %v488, %v1799
      %v1820 = vmul.f32 %v492, %v1799
      %v1821 = vmul.f32 %v496, %v1799
      %v1822 = vmul.f32 %v500, %v1799
      %v1823 = vmul.f32 %v504, %v1799
      %v1824 = vmul.f32 %v508, %v1799
      %v1825 = vmul.f32 %v512, %v1799
      %v1826 = vmul.f32 %v516, %v1799
      %v1827 = vmul.f32 %v520, %v1799
      %v1828 = vmul.f32 %v524, %v1799
      %v1829 = vmul.f32 %v528, %v1799
      %v1830 = vmul.f32 %v532, %v1799
      %v1831 = vmul.f32 %v536, %v1799
      %v1832 = vadd.f32 %v1767, %v1800
      %v1833 = vadd.f32 %v1768, %v1801
      %v1834 = vadd.f32 %v1769, %v1802
      %v1835 = vadd.f32 %v1770, %v1803
      %v1836 = vadd.f32 %v1771, %v1804
      %v1837 = vadd.f32 %v1772, %v1805
      %v1838 = vadd.f32 %v1773, %v1806
      %v1839 = vadd.f32 %v1774, %v1807
      %v1840 = vadd.f32 %v1775, %v1808
      %v1841 = vadd.f32 %v1776, %v1809
      %v1842 = vadd.f32 %v1777, %v1810
      %v1843 = vadd.f32 %v1778, %v1811
      %v1844 = vadd.f32 %v1779, %v1812
      %v1845 = vadd.f32 %v1780, %v1813
      %v1846 = vadd.f32 %v1781, %v1814
      %v1847 = vadd.f32 %v1782, %v1815
      %v1848 = vadd.f32 %v1783, %v1816
      %v1849 = vadd.f32 %v1784, %v1817
      %v1850 = vadd.f32 %v1785, %v1818
      %v1851 = vadd.f32 %v1786, %v1819
      %v1852 = vadd.f32 %v1787, %v1820
      %v1853 = vadd.f32 %v1788, %v1821
      %v1854 = vadd.f32 %v1789, %v1822
      %v1855 = vadd.f32 %v1790, %v1823
      %v1856 = vadd.f32 %v1791, %v1824
      %v1857 = vadd.f32 %v1792, %v1825
      %v1858 = vadd.f32 %v1793, %v1826
      %v1859 = vadd.f32 %v1794, %v1827
      %v1860 = vadd.f32 %v1795, %v1828
      %v1861 = vadd.f32 %v1796, %v1829
      %v1862 = vadd.f32 %v1797, %v1830
      %v1863 = vadd.f32 %v1798, %v1831
      %v1864 = vperm.slane %v1756, 2
      %v1865 = vmul.f32 %v605, %v1864
      %v1866 = vmul.f32 %v609, %v1864
      %v1867 = vmul.f32 %v613, %v1864
      %v1868 = vmul.f32 %v617, %v1864
      %v1869 = vmul.f32 %v621, %v1864
      %v1870 = vmul.f32 %v625, %v1864
      %v1871 = vmul.f32 %v629, %v1864
      %v1872 = vmul.f32 %v633, %v1864
      %v1873 = vmul.f32 %v637, %v1864
      %v1874 = vmul.f32 %v641, %v1864
      %v1875 = vmul.f32 %v645, %v1864
      %v1876 = vmul.f32 %v649, %v1864
      %v1877 = vmul.f32 %v653, %v1864
      %v1878 = vmul.f32 %v657, %v1864
      %v1879 = vmul.f32 %v661, %v1864
      %v1880 = vmul.f32 %v665, %v1864
      %v1881 = vmul.f32 %v669, %v1864
      %v1882 = vmul.f32 %v673, %v1864
      %v1883 = vmul.f32 %v677, %v1864
      %v1884 = vmul.f32 %v681, %v1864
      %v1885 = vmul.f32 %v685, %v1864
      %v1886 = vmul.f32 %v689, %v1864
      %v1887 = vmul.f32 %v693, %v1864
      %v1888 = vmul.f32 %v697, %v1864
      %v1889 = vmul.f32 %v701, %v1864
      %v1890 = vmul.f32 %v705, %v1864
      %v1891 = vmul.f32 %v709, %v1864
      %v1892 = vmul.f32 %v713, %v1864
      %v1893 = vmul.f32 %v717, %v1864
      %v1894 = vmul.f32 %v721, %v1864
      %v1895 = vmul.f32 %v725, %v1864
      %v1896 = vmul.f32 %v729, %v1864
      %v1897 = vadd.f32 %v1832, %v1865
      %v1898 = vadd.f32 %v1833, %v1866
      %v1899 = vadd.f32 %v1834, %v1867
      %v1900 = vadd.f32 %v1835, %v1868
      %v1901 = vadd.f32 %v1836, %v1869
      %v1902 = vadd.f32 %v1837, %v1870
      %v1903 = vadd.f32 %v1838, %v1871
      %v1904 = vadd.f32 %v1839, %v1872
      %v1905 = vadd.f32 %v1840, %v1873
      %v1906 = vadd.f32 %v1841, %v1874
      %v1907 = vadd.f32 %v1842, %v1875
      %v1908 = vadd.f32 %v1843, %v1876
      %v1909 = vadd.f32 %v1844, %v1877
      %v1910 = vadd.f32 %v1845, %v1878
      %v1911 = vadd.f32 %v1846, %v1879
      %v1912 = vadd.f32 %v1847, %v1880
      %v1913 = vadd.f32 %v1848, %v1881
      %v1914 = vadd.f32 %v1849, %v1882
      %v1915 = vadd.f32 %v1850, %v1883
      %v1916 = vadd.f32 %v1851, %v1884
      %v1917 = vadd.f32 %v1852, %v1885
      %v1918 = vadd.f32 %v1853, %v1886
      %v1919 = vadd.f32 %v1854, %v1887
      %v1920 = vadd.f32 %v1855, %v1888
      %v1921 = vadd.f32 %v1856, %v1889
      %v1922 = vadd.f32 %v1857, %v1890
      %v1923 = vadd.f32 %v1858, %v1891
      %v1924 = vadd.f32 %v1859, %v1892
      %v1925 = vadd.f32 %v1860, %v1893
      %v1926 = vadd.f32 %v1861, %v1894
      %v1927 = vadd.f32 %v1862, %v1895
      %v1928 = vadd.f32 %v1863, %v1896
      %v1929 = vadd.f32 %v1897, %v798
      %v1930 = vadd.f32 %v1898, %v802
      %v1931 = vadd.f32 %v1899, %v806
      %v1932 = vadd.f32 %v1900, %v810
      %v1933 = vadd.f32 %v1901, %v814
      %v1934 = vadd.f32 %v1902, %v818
      %v1935 = vadd.f32 %v1903, %v822
      %v1936 = vadd.f32 %v1904, %v826
      %v1937 = vadd.f32 %v1905, %v830
      %v1938 = vadd.f32 %v1906, %v834
      %v1939 = vadd.f32 %v1907, %v838
      %v1940 = vadd.f32 %v1908, %v842
      %v1941 = vadd.f32 %v1909, %v846
      %v1942 = vadd.f32 %v1910, %v850
      %v1943 = vadd.f32 %v1911, %v854
      %v1944 = vadd.f32 %v1912, %v858
      %v1945 = vadd.f32 %v1913, %v862
      %v1946 = vadd.f32 %v1914, %v866
      %v1947 = vadd.f32 %v1915, %v870
      %v1948 = vadd.f32 %v1916, %v874
      %v1949 = vadd.f32 %v1917, %v878
      %v1950 = vadd.f32 %v1918, %v882
      %v1951 = vadd.f32 %v1919, %v886
      %v1952 = vadd.f32 %v1920, %v890
      %v1953 = vadd.f32 %v1921, %v894
      %v1954 = vadd.f32 %v1922, %v898
      %v1955 = vadd.f32 %v1923, %v902
      %v1956 = vadd.f32 %v1924, %v906
      %v1957 = vadd.f32 %v1925, %v910
      %v1958 = vadd.f32 %v1926, %v914
      %v1959 = vadd.f32 %v1927, %v918
      %v1960 = vadd.f32 %v1928, %v922
      %v1961 = vperm.slane %v1765, 0
      %v1962 = vadd.f32 %v1929, %v1961
      %v1963 = vadd.f32 %v1930, %v1961
      %v1964 = vadd.f32 %v1931, %v1961
      %v1965 = vadd.f32 %v1932, %v1961
      %v1966 = vadd.f32 %v1933, %v1961
      %v1967 = vadd.f32 %v1934, %v1961
      %v1968 = vadd.f32 %v1935, %v1961
      %v1969 = vadd.f32 %v1936, %v1961
      %v1970 = vadd.f32 %v1937, %v1961
      %v1971 = vadd.f32 %v1938, %v1961
      %v1972 = vadd.f32 %v1939, %v1961
      %v1973 = vadd.f32 %v1940, %v1961
      %v1974 = vadd.f32 %v1941, %v1961
      %v1975 = vadd.f32 %v1942, %v1961
      %v1976 = vadd.f32 %v1943, %v1961
      %v1977 = vadd.f32 %v1944, %v1961
      %v1978 = vadd.f32 %v1945, %v1961
      %v1979 = vadd.f32 %v1946, %v1961
      %v1980 = vadd.f32 %v1947, %v1961
      %v1981 = vadd.f32 %v1948, %v1961
      %v1982 = vadd.f32 %v1949, %v1961
      %v1983 = vadd.f32 %v1950, %v1961
      %v1984 = vadd.f32 %v1951, %v1961
      %v1985 = vadd.f32 %v1952, %v1961
      %v1986 = vadd.f32 %v1953, %v1961
      %v1987 = vadd.f32 %v1954, %v1961
      %v1988 = vadd.f32 %v1955, %v1961
      %v1989 = vadd.f32 %v1956, %v1961
      %v1990 = vadd.f32 %v1957, %v1961
      %v1991 = vadd.f32 %v1958, %v1961
      %v1992 = vadd.f32 %v1959, %v1961
      %v1993 = vadd.f32 %v1960, %v1961
      %v1994 = vmul.f32 %v1962, 1.442695
      %v1995 = vpow.pop %v1994
      %v1996 = vmul.f32 %v1963, 1.442695
      %v1997 = vpow.pop %v1996
      %v1998 = vmul.f32 %v1964, 1.442695
      %v1999 = vpow.pop %v1998
      %v2000 = vmul.f32 %v1965, 1.442695
      %v2001 = vpow.pop %v2000
      %v2002 = vmul.f32 %v1966, 1.442695
      %v2003 = vpow.pop %v2002
      %v2004 = vmul.f32 %v1967, 1.442695
      %v2005 = vpow.pop %v2004
      %v2006 = vmul.f32 %v1968, 1.442695
      %v2007 = vpow.pop %v2006
      %v2008 = vmul.f32 %v1969, 1.442695
      %v2009 = vpow.pop %v2008
      %v2010 = vmul.f32 %v1970, 1.442695
      %v2011 = vpow.pop %v2010
      %v2012 = vmul.f32 %v1971, 1.442695
      %v2013 = vpow.pop %v2012
      %v2014 = vmul.f32 %v1972, 1.442695
      %v2015 = vpow.pop %v2014
      %v2016 = vmul.f32 %v1973, 1.442695
      %v2017 = vpow.pop %v2016
      %v2018 = vmul.f32 %v1974, 1.442695
      %v2019 = vpow.pop %v2018
      %v2020 = vmul.f32 %v1975, 1.442695
      %v2021 = vpow.pop %v2020
      %v2022 = vmul.f32 %v1976, 1.442695
      %v2023 = vpow.pop %v2022
      %v2024 = vmul.f32 %v1977, 1.442695
      %v2025 = vpow.pop %v2024
      %v2026 = vmul.f32 %v1978, 1.442695
      %v2027 = vpow.pop %v2026
      %v2028 = vmul.f32 %v1979, 1.442695
      %v2029 = vpow.pop %v2028
      %v2030 = vmul.f32 %v1980, 1.442695
      %v2031 = vpow.pop %v2030
      %v2032 = vmul.f32 %v1981, 1.442695
      %v2033 = vpow.pop %v2032
      %v2034 = vmul.f32 %v1982, 1.442695
      %v2035 = vpow.pop %v2034
      %v2036 = vmul.f32 %v1983, 1.442695
      %v2037 = vpow.pop %v2036
      %v2038 = vmul.f32 %v1984, 1.442695
      %v2039 = vpow.pop %v2038
      %v2040 = vmul.f32 %v1985, 1.442695
      %v2041 = vpow.pop %v2040
      %v2042 = vmul.f32 %v1986, 1.442695
      %v2043 = vpow.pop %v2042
      %v2044 = vmul.f32 %v1987, 1.442695
      %v2045 = vpow.pop %v2044
      %v2046 = vmul.f32 %v1988, 1.442695
      %v2047 = vpow.pop %v2046
      %v2048 = vmul.f32 %v1989, 1.442695
      %v2049 = vpow.pop %v2048
      %v2050 = vmul.f32 %v1990, 1.442695
      %v2051 = vpow.pop %v2050
      %v2052 = vmul.f32 %v1991, 1.442695
      %v2053 = vpow.pop %v2052
      %v2054 = vmul.f32 %v1992, 1.442695
      %v2055 = vpow.pop %v2054
      %v2056 = vmul.f32 %v1993, 1.442695
      %v2057 = vpow.pop %v2056
      %v2058 = vadd.f32 %v1995, %v2011
      %v2059 = vadd.f32 %v1997, %v2013
      %v2060 = vadd.f32 %v1999, %v2015
      %v2061 = vadd.f32 %v2001, %v2017
      %v2062 = vadd.f32 %v2003, %v2019
      %v2063 = vadd.f32 %v2005, %v2021
      %v2064 = vadd.f32 %v2007, %v2023
      %v2065 = vadd.f32 %v2009, %v2025
      %v2066 = vadd.f32 %v2058, %v2027
      %v2067 = vadd.f32 %v2059, %v2029
      %v2068 = vadd.f32 %v2060, %v2031
      %v2069 = vadd.f32 %v2061, %v2033
      %v2070 = vadd.f32 %v2062, %v2035
      %v2071 = vadd.f32 %v2063, %v2037
      %v2072 = vadd.f32 %v2064, %v2039
      %v2073 = vadd.f32 %v2065, %v2041
      %v2074 = vadd.f32 %v2066, %v2043
      %v2075 = vadd.f32 %v2067, %v2045
      %v2076 = vadd.f32 %v2068, %v2047
      %v2077 = vadd.f32 %v2069, %v2049
      %v2078 = vadd.f32 %v2070, %v2051
      %v2079 = vadd.f32 %v2071, %v2053
      %v2080 = vadd.f32 %v2072, %v2055
      %v2081 = vadd.f32 %v2073, %v2057
      %v2082 = vadd.f32 %v1747, %v2074
      %v2083 = vadd.f32 %v1748, %v2075
      %v2084 = vadd.f32 %v1749, %v2076
      %v2085 = vadd.f32 %v1750, %v2077
      %v2086 = vadd.f32 %v1751, %v2078
      %v2087 = vadd.f32 %v1752, %v2079
      %v2088 = vadd.f32 %v1753, %v2080
      %v2089 = vadd.f32 %v1754, %v2081
      %v2090 = vmul.f32 %v2082, 0.0625
      %v2091 = vmul.f32 %v2083, 0.0625
      %v2092 = vmul.f32 %v2084, 0.0625
      %v2093 = vmul.f32 %v2085, 0.0625
      %v2094 = vmul.f32 %v2086, 0.0625
      %v2095 = vmul.f32 %v2087, 0.0625
      %v2096 = vmul.f32 %v2088, 0.0625
      %v2097 = vmul.f32 %v2089, 0.0625
      %vm2098 = vcmask 130048
      %2099 = vst.msk [vmem:[%s174] sm:$0xff] %vm2098, %v2090
      %2100 = vst.msk [vmem:[%s174 + $0x8] sm:$0xff] %vm2098, %v2091
      %2101 = vst.msk [vmem:[%s174 + $0x10] sm:$0xff] %vm2098, %v2092
      %2102 = vst.msk [vmem:[%s174 + $0x18] sm:$0xff] %vm2098, %v2093
      %2103 = vst.msk [vmem:[%s174 + $0x20] sm:$0xff] %vm2098, %v2094
      %2104 = vst.msk [vmem:[%s174 + $0x28] sm:$0xff] %vm2098, %v2095
      %2105 = vst.msk [vmem:[%s174 + $0x30] sm:$0xff] %vm2098, %v2096
      %2106 = vst.msk [vmem:[%s174 + $0x38] sm:$0xff] %vm2098, %v2097
      %p2107 = scmp.lt.s32.totalorder %s17, 1
      %s2108 = scalar_select %p2107, %s17, 1
      %p2109 = scmp.lt.s32.totalorder %s18, 0
      %s2110 = scalar_select %p2109, %s18, 0
      %s2111 = smul.addr %s2108, 8
      %s2112 = sadd.s32 %s2110, %s2111
      %s2113 = smul.addr %s2112, 8
      %s2114 = scalar_lea.vmem %s2, %s2113
      // Predicated region
      $region29: #{structural_descriptor.19} parent=27 // pred_check
        %p2115 = pneg %p94
      $region30: #{structural_descriptor.19} parent=27 // pred_check_branch
        %2117 = sbr.rel (%p2115) target = $region32
      $region31: #{structural_descriptor.19} parent=27 // pred_region
        _
      $region32: #{structural_descriptor.19} parent=27 // pred_fallthru
        _
    $region28: #{structural_descriptor.19} parent=5 // pred_fallthru
      _
    %p2118 = scmp.le.s32.totalorder 2, %s8
    // Predicated region
    $region33: #{structural_descriptor.19} parent=5 // pred_check
      %p2119 = pneg %p2118
    $region34: #{structural_descriptor.19} parent=5 // pred_check_branch
      %2121 = sbr.rel (%p2119) target = $region36
    $region35: #{structural_descriptor.19} parent=5 // pred_region
      %s2122 = ssub.s32 %s8, 2
      // Predicated region
      $region37: #{structural_descriptor.19} parent=35 // pred_check
        %p2123 = pneg %p100
      $region38: #{structural_descriptor.19} parent=35 // pred_check_branch
        %2125 = sbr.rel (%p2123) target = $region40
      $region39: #{structural_descriptor.19} parent=35 // pred_region
        %p2126 = scmp.lt.s32.totalorder %s19, 1
        %s2127 = scalar_select %p2126, %s19, 1
        %p2128 = scmp.lt.s32.totalorder %s20, 0
        %s2129 = scalar_select %p2128, %s20, 0
        %s2130 = smul.addr %s2127, 8
        %s2131 = sadd.s32 %s2129, %s2130
        %s2132 = smul.addr %s2131, 8
        %s2133 = scalar_lea.vmem %s2, %s2132
      $region40: #{structural_descriptor.19} parent=35 // pred_fallthru
        _
    $region36: #{structural_descriptor.19} parent=5 // pred_fallthru
      _
  $region6: #{structural_descriptor.19} parent=0 // loop_footer
    %s12 = sadd.s32 1, %s8
  $region7: #{structural_descriptor.19} parent=0 // loop_footer_branch
    %7 = sbr.rel target = $region3
  $region8: #{structural_descriptor.19} parent=0 // loop_exit
    _

</llo_original>
